<compile_context>
chip_gen: v7x
topology: tpu7x:2x2x1
jax: 0.10.0
libtpu: 0.0.40
codegen_flags: <defaults>
</compile_context>

<pallas_src>
import functools

import jax
import jax.numpy as jnp
from jax.experimental import pallas as pl
from jax.experimental.pallas import tpu as pltpu


NEG_SLOPE = 0.3
BN_EPS = 1e-5


# ------------------------------ small helpers ------------------------------ #

def _vmem_cap_bytes():
    """Physical VMEM of the local chip (fallback: 64 MiB, the v7x per-core size)."""
    try:
        return int(pltpu.get_tpu_info().vmem_capacity_bytes)
    except Exception:
        return 64 * 1024 * 1024


def _compiler_params(footprint_bytes):
    vmem_limit = int(min(max(2 * footprint_bytes, 8 << 20),
                         _vmem_cap_bytes() * 45 // 100))
    return pltpu.CompilerParams(dimension_semantics=("parallel",),
                                vmem_limit_bytes=vmem_limit)


# --------------------- fast path kernels (stride == 1) --------------------- #

def _accumulate_conv(x_ref, w_ref, offs, ho_wp):
    """Implicit im2col: sum over the 9 taps of shifted (Cout,Cin)x(Cin,Ho*Wp) matmuls."""
    acc = None
    for idx, off in enumerate(offs):
        part = jnp.dot(w_ref[idx], x_ref[0, :, off:off + ho_wp],
                       preferred_element_type=jnp.float32)
        acc = part if acc is None else acc + part
    return acc                                   # (Cout, Ho*Wp) float32


def _conv_stats_kernel(x_ref, w_ref, b_ref, mask_ref, stats_ref, *, offs, ho_wp):
    # x_ref: (1, Cin, FLAT) padded/flattened image; w_ref: (9, Cout, Cin)
    # b_ref: (Cout, 1); mask_ref: (1, Ho*Wp); stats_ref: (1, Cout, 2) = [sum, sumsq]
    acc = _accumulate_conv(x_ref, w_ref, offs, ho_wp) + b_ref[...]
    am = acc * mask_ref[...]                     # mask out wrap-around garbage columns
    ssum = jnp.sum(am, axis=1, keepdims=True)    # (Cout, 1)
    ssq = jnp.sum(am * acc, axis=1, keepdims=True)
    # Only 2*Cout*4 bytes per grid step; a lane-dense (2, Cout) layout only matters
    # for large Cout.
    stats_ref[0, :, :] = jnp.concatenate([ssum, ssq], axis=1)


def _conv_bn_lrelu_kernel(x_ref, w_ref, b_ref, scale_ref, shift_ref, o_ref, *,
                          offs, ho_wp, wp, wo, ho):
    # Recompute the conv accumulator (bitwise identical to pass 1), apply the folded
    # BatchNorm affine + LeakyReLU and store only the Wo valid columns of each row,
    # directly in the (Cout, Ho*Wo) output layout.
    acc = _accumulate_conv(x_ref, w_ref, offs, ho_wp) + b_ref[...]
    z = acc * scale_ref[...] + shift_ref[...]
    z = jnp.where(z >= 0, z, NEG_SLOPE * z).astype(o_ref.dtype)
    for r in range(ho):
        o_ref[0, :, r * wo:(r + 1) * wo] = z[:, r * wp:r * wp + wo]


def _forward_implicit(x, weight, bias, gamma, beta, *, pad, dila, compute_dtype):
    n, cin, h, w = x.shape
    cout, _, ksize, _ = weight.shape
    out_dtype = x.dtype

    hp, wp = h + 2 * pad, w + 2 * pad
    ho, wo = hp - dila * (ksize - 1), wp - dila * (ksize - 1)
    ho_wp = ho * wp
    # Shift offsets in flattened padded-image coordinates (h * Wp + w).
    offs = tuple(kh * dila * wp + kw * dila
                 for kh in range(ksize) for kw in range(ksize))
    # Pad a few extra rows so the largest shifted window never reads out of bounds.
    extra_rows = -(-((ksize - 1) * dila) // wp)
    xp = jnp.pad(x, ((0, 0), (0, 0), (pad, pad + extra_rows), (pad, pad)))
    flat = (hp + extra_rows) * wp
    xflat = xp.reshape(n, cin, flat).astype(compute_dtype)

    # Weights as (9, Cout, Cin); tap index matches the `offs` ordering (kh, kw).
    w9 = jnp.transpose(weight, (2, 3, 0, 1)).reshape(ksize * ksize, cout, cin)
    w9 = w9.astype(compute_dtype)
    bias_col = bias.astype(jnp.float32).reshape(cout, 1)

    # Columns wo' in [Wo, Wp) of the shifted-matmul result are wrap-around garbage:
    # exclude them from BN statistics (they are never stored either).
    mask = (jnp.arange(ho_wp, dtype=jnp.int32) % wp < wo)
    mask = mask.astype(jnp.float32).reshape(1, ho_wp)

    in_isz = jnp.dtype(compute_dtype).itemsize
    footprint = (2 * cin * flat * in_isz                   # double-buffered image slabs
                 + ksize * ksize * cout * cin * in_isz     # resident weights
                 + 2 * cout * ho * wo * jnp.dtype(out_dtype).itemsize
                 + 6 * cout * ho_wp * 4                    # f32 accumulator/temporaries
                 + 4 * ho_wp * 4 + (1 << 16))
    cparams = _compiler_params(footprint)

    # ---- Pass 1: implicit-im2col conv -> tiny per-image partial BN statistics ----
    stats = pl.pallas_call(
        functools.partial(_conv_stats_kernel, offs=offs, ho_wp=ho_wp),
        grid=(n,),
        in_specs=[
            pl.BlockSpec((1, cin, flat), lambda i: (i, 0, 0)),
            pl.BlockSpec((ksize * ksize, cout, cin), lambda i: (0, 0, 0)),
            pl.BlockSpec((cout, 1), lambda i: (0, 0)),
            pl.BlockSpec((1, ho_wp), lambda i: (0, 0)),
        ],
        out_specs=pl.BlockSpec((1, cout, 2), lambda i: (i, 0, 0)),
        out_shape=jax.ShapeDtypeStruct((n, cout, 2), jnp.float32),
        compiler_params=cparams,
    )(xflat, w9, bias_col, mask)

    # ---- Tiny global reduction + BN affine fold (plain JAX, f32) ----
    count = jnp.float32(n * ho * wo)
    tot = jnp.sum(stats, axis=0)                           # (Cout, 2)
    mean = tot[:, 0] / count
    ex2 = tot[:, 1] / count
    # NOTE: E[x^2]-E[x]^2 in f32; switch to a shifted/Welford combine if accuracy
    # regressions appear at very large N*Ho*Wo.
    var = jnp.maximum(ex2 - mean * mean, 0.0)              # biased var (training BN)
    inv_std = jax.lax.rsqrt(var + BN_EPS)
    g32 = gamma.astype(jnp.float32)
    scale = (g32 * inv_std).reshape(cout, 1)
    shift = (beta.astype(jnp.float32) - mean * g32 * inv_std).reshape(cout, 1)

    # ---- Pass 2: recompute conv, fuse BN apply + LeakyReLU, store NCHW-flat ----
    out = pl.pallas_call(
        functools.partial(_conv_bn_lrelu_kernel, offs=offs, ho_wp=ho_wp,
                          wp=wp, wo=wo, ho=ho),
        grid=(n,),
        in_specs=[
            pl.BlockSpec((1, cin, flat), lambda i: (i, 0, 0)),
            pl.BlockSpec((ksize * ksize, cout, cin), lambda i: (0, 0, 0)),
            pl.BlockSpec((cout, 1), lambda i: (0, 0)),
            pl.BlockSpec((cout, 1), lambda i: (0, 0)),
            pl.BlockSpec((cout, 1), lambda i: (0, 0)),
        ],
        out_specs=pl.BlockSpec((1, cout, ho * wo), lambda i: (i, 0, 0)),
        out_shape=jax.ShapeDtypeStruct((n, cout, ho * wo), out_dtype),
        compiler_params=cparams,
    )(xflat, w9, bias_col, scale, shift)

    # Contiguous split of the last dim: free (no HBM copy).
    return out.reshape(n, cout, ho, wo)


# ------------------ fallback path kernels (stride > 1) --------------------- #
# Previously validated wrapper-im2col GEMM path, kept for strided convolutions.

def _gemm_stats_kernel(p_ref, w_ref, o_ref, sum_ref, sq_ref):
    acc = jnp.dot(w_ref[...], p_ref[...], preferred_element_type=jnp.float32)
    o_ref[...] = acc.astype(o_ref.dtype)
    sum_ref[0] = jnp.sum(acc, axis=1, keepdims=True)
    sq_ref[0] = jnp.sum(acc * acc, axis=1, keepdims=True)


def _bn_lrelu_kernel(y_ref, scale_ref, shift_ref, o_ref):
    y = y_ref[...].astype(jnp.float32)
    z = y * scale_ref[...] + shift_ref[...]
    o_ref[...] = jnp.where(z >= 0, z, NEG_SLOPE * z).astype(o_ref.dtype)


def _im2col_t_nchw(x, ksize, stride, pad, dila):
    """3x3 patches as (K = k*k*Cin, M = N*Ho*Wo)."""
    n, c, h, w = x.shape
    xp = jnp.pad(x, ((0, 0), (0, 0), (pad, pad), (pad, pad)))
    ho = (h + 2 * pad - dila * (ksize - 1) - 1) // stride + 1
    wo = (w + 2 * pad - dila * (ksize - 1) - 1) // stride + 1
    cols = []
    for kh in range(ksize):
        for kw in range(ksize):
            sl = xp[:, :,
                    kh * dila: kh * dila + (ho - 1) * stride + 1: stride,
                    kw * dila: kw * dila + (wo - 1) * stride + 1: stride]
            cols.append(sl)
    p = jnp.stack(cols, axis=0).transpose(0, 2, 1, 3, 4)
    return p.reshape(ksize * ksize * c, n * ho * wo), ho, wo


def _forward_im2col(x, weight, bias, gamma, beta, *, stride, pad, dila,
                    compute_dtype, tm_max):
    # TODO(synk): extend the implicit-im2col fast path to strided convolutions.
    # Conv bias cancels exactly under training-mode BatchNorm (batch-mean subtraction),
    # and dropping it keeps the zero-padded M columns stat-neutral.
    del bias
    n, cin, h, w = x.shape
    cout, _, ksize, _ = weight.shape
    out_dtype = x.dtype

    patches_t, ho, wo = _im2col_t_nchw(x, ksize, stride, pad, dila)   # (K, M)
    k, m = patches_t.shape

    m128 = ((m + 127) // 128) * 128
    tm = min(tm_max, m128)
    m_pad = ((m + tm - 1) // tm) * tm
    n_tiles = m_pad // tm
    if m_pad != m:
        patches_t = jnp.pad(patches_t, ((0, 0), (0, m_pad - m)))
    w_t = jnp.transpose(weight, (0, 2, 3, 1)).reshape(cout, k)

    patches_t = patches_t.astype(compute_dtype)
    w_t = w_t.astype(compute_dtype)
    in_isz = jnp.dtype(compute_dtype).itemsize

    tile_bytes = (2 * k * tm * in_isz + 2 * cout * tm * 4
                  + cout * k * 4 + 8 * cout * 4 + 4096)
    cparams = _compiler_params(2 * tile_bytes)

    conv_out, psum, psq = pl.pallas_call(
        _gemm_stats_kernel,
        grid=(n_tiles,),
        in_specs=[pl.BlockSpec((k, tm), lambda i: (0, i)),
                  pl.BlockSpec((cout, k), lambda i: (0, 0))],
        out_specs=(pl.BlockSpec((cout, tm), lambda i: (0, i)),
                   pl.BlockSpec((1, cout, 1), lambda i: (i, 0, 0)),
                   pl.BlockSpec((1, cout, 1), lambda i: (i, 0, 0))),
        out_shape=(jax.ShapeDtypeStruct((cout, m_pad), jnp.float32),
                   jax.ShapeDtypeStruct((n_tiles, cout, 1), jnp.float32),
                   jax.ShapeDtypeStruct((n_tiles, cout, 1), jnp.float32)),
        compiler_params=cparams,
    )(patches_t, w_t)

    m_true = jnp.float32(m)
    mean = jnp.sum(psum[:, :, 0], axis=0) / m_true
    ex2 = jnp.sum(psq[:, :, 0], axis=0) / m_true
    var = jnp.maximum(ex2 - mean * mean, 0.0)
    inv_std = jax.lax.rsqrt(var + BN_EPS)
    g32 = gamma.astype(jnp.float32)
    scale = (g32 * inv_std).reshape(cout, 1)
    shift = (beta.astype(jnp.float32) - mean * g32 * inv_std).reshape(cout, 1)

    out_t = pl.pallas_call(
        _bn_lrelu_kernel,
        grid=(n_tiles,),
        in_specs=[pl.BlockSpec((cout, tm), lambda i: (0, i)),
                  pl.BlockSpec((cout, 1), lambda i: (0, 0)),
                  pl.BlockSpec((cout, 1), lambda i: (0, 0))],
        out_specs=pl.BlockSpec((cout, tm), lambda i: (0, i)),
        out_shape=jax.ShapeDtypeStruct((cout, m_pad), out_dtype),
        compiler_params=cparams,
    )(conv_out, scale, shift)

    return out_t[:, :m].reshape(cout, n, ho, wo).transpose(1, 0, 2, 3)


# ------------------------------ public entry -------------------------------- #

@functools.partial(jax.jit, static_argnames=("stride", "pad", "dila",
                                              "compute_dtype", "tm_max"))
def conv_block1_forward(x, weight, bias, gamma, beta, *, stride, pad, dila,
                        compute_dtype=jnp.bfloat16, tm_max=2048):
    """conv_block1 forward (training-mode BatchNorm, i.e. per-batch statistics)."""
    if stride == 1:
        return _forward_implicit(x, weight, bias, gamma, beta,
                                 pad=pad, dila=dila, compute_dtype=compute_dtype)
    return _forward_im2col(x, weight, bias, gamma, beta, stride=stride, pad=pad,
                           dila=dila, compute_dtype=compute_dtype, tm_max=tm_max)


# -------------------------------- reference --------------------------------- #

def _reference(x, weight, bias, gamma, beta, *, stride, pad, dila):
    y = jax.lax.conv_general_dilated(
        x, weight,
        window_strides=(stride, stride),
        padding=((pad, pad), (pad, pad)),
        rhs_dilation=(dila, dila),
        dimension_numbers=("NCHW", "OIHW", "NCHW"),
    ) + bias.reshape(1, -1, 1, 1)
    mean = jnp.mean(y, axis=(0, 2, 3), keepdims=True)
    var = jnp.mean((y - mean) ** 2, axis=(0, 2, 3), keepdims=True)
    xhat = (y - mean) * jax.lax.rsqrt(var + BN_EPS)
    z = gamma.reshape(1, -1, 1, 1) * xhat + beta.reshape(1, -1, 1, 1)
    return jnp.where(z >= 0, z, NEG_SLOPE * z)


if __name__ == "__main__":
    # Module config: conv_block1(in_ch=4, out_ch=8, strides=1, pads=1, dilas=1)
    in_ch, out_ch = 4, 8
    N, H, W = 2, 16, 16

    key = jax.random.PRNGKey(0)
    kx, kw, kb = jax.random.split(key, 3)
    x = jax.random.normal(kx, (N, in_ch, H, W), dtype=jnp.float32)
    weight = 0.1 * jax.random.normal(kw, (out_ch, in_ch, 3, 3), dtype=jnp.float32)
    bias = 0.1 * jax.random.normal(kb, (out_ch,), dtype=jnp.float32)
    gamma = jnp.ones((out_ch,), dtype=jnp.float32)   # BatchNorm2d default init
    beta = jnp.zeros((out_ch,), dtype=jnp.float32)   # BatchNorm2d default init

    # 1) Module config, f32 MXU inputs: tight tolerance.
    ref1 = _reference(x, weight, bias, gamma, beta, stride=1, pad=1, dila=1)
    out32 = conv_block1_forward(x, weight, bias, gamma, beta, stride=1, pad=1, dila=1,
                                compute_dtype=jnp.float32)
    out32 = jax.block_until_ready(out32)
    assert out32.shape == (N, out_ch, H, W)
    assert jnp.allclose(out32, ref1, atol=1e-4, rtol=1e-4), \
        float(jnp.max(jnp.abs(out32 - ref1)))

    # 2) Module config with the performance default (bf16 MXU inputs, f32 accum).
    outbf = jax.block_until_ready(
        conv_block1_forward(x, weight, bias, gamma, beta, stride=1, pad=1, dila=1))
    assert outbf.shape == (N, out_ch, H, W)
    assert jnp.allclose(outbf, ref1, atol=5e-2, rtol=5e-2), \
        float(jnp.max(jnp.abs(outbf - ref1)))

    # 3) Dilation (fast path) and stride-2 (fallback path) sanity checks, f32.
    for (s, p, d) in [(1, 2, 2), (2, 1, 1)]:
        refc = _reference(x, weight, bias, gamma, beta, stride=s, pad=p, dila=d)
        outc = jax.block_until_ready(
            conv_block1_forward(x, weight, bias, gamma, beta, stride=s, pad=p, dila=d,
                                compute_dtype=jnp.float32))
        assert outc.shape == refc.shape
        assert jnp.allclose(outc, refc, atol=1e-4, rtol=1e-4), \
            float(jnp.max(jnp.abs(outc - refc)))

    print("KERNEL_OK")
</pallas_src>

<mosaic_0001>
module attributes {stable_mosaic.version = 11 : i64} {
  func.func @_conv_stats_kernel(%arg0: i32, %arg1: memref<1x4x342xf32, #tpu.memory_space<vmem>>, %arg2: memref<9x8x4xf32, #tpu.memory_space<vmem>>, %arg3: memref<8x1xf32, #tpu.memory_space<vmem>>, %arg4: memref<1x288xf32, #tpu.memory_space<vmem>>, %arg5: memref<1x8x2xf32, #tpu.memory_space<vmem>>) attributes {dimension_semantics = [#tpu.dimension_semantics<parallel>], iteration_bounds = array<i64: 2>, scalar_prefetch = 0 : i64, scratch_operands = 0 : i64, tpu.core_type = #tpu.core_type<tc>, window_params = [{transform_indices = @transform_0, window_bounds = array<i64: 1, 4, 342>}, {pipeline_mode = #tpu.pipeline_mode<synchronous>, transform_indices = @transform_1, window_bounds = array<i64: 9, 8, 4>}, {pipeline_mode = #tpu.pipeline_mode<synchronous>, transform_indices = @transform_2, window_bounds = array<i64: 8, 1>}, {pipeline_mode = #tpu.pipeline_mode<synchronous>, transform_indices = @transform_3, window_bounds = array<i64: 1, 288>}, {transform_indices = @transform_4, window_bounds = array<i64: 1, 8, 2>}]} {
    %c0 = arith.constant 0 : index
    %c0_0 = arith.constant 0 : index
    %c0_1 = arith.constant 0 : index
    %0 = vector.load %arg2[%c0, %c0_0, %c0_1] : memref<9x8x4xf32, #tpu.memory_space<vmem>>, vector<1x8x4xf32>
    %1 = vector.shape_cast %0 : vector<1x8x4xf32> to vector<8x4xf32>
    %c0_2 = arith.constant 0 : index
    %c0_3 = arith.constant 0 : index
    %c0_4 = arith.constant 0 : index
    %2 = vector.load %arg1[%c0_2, %c0_3, %c0_4] : memref<1x4x342xf32, #tpu.memory_space<vmem>>, vector<1x4x288xf32>
    %3 = vector.shape_cast %2 : vector<1x4x288xf32> to vector<4x288xf32>
    %cst = arith.constant dense<0.000000e+00> : vector<8x288xf32>
    %4 = tpu.matmul %1, %3, %cst {dimension_numbers = #tpu.dot_dimension_numbers<[1], [0], [0], [1], [0, 0, 1, 1], [], []>} : vector<8x4xf32>, vector<4x288xf32>, vector<8x288xf32> -> vector<8x288xf32>
    %c1 = arith.constant 1 : index
    %c0_5 = arith.constant 0 : index
    %c0_6 = arith.constant 0 : index
    %5 = vector.load %arg2[%c1, %c0_5, %c0_6] : memref<9x8x4xf32, #tpu.memory_space<vmem>>, vector<1x8x4xf32>
    %6 = vector.shape_cast %5 : vector<1x8x4xf32> to vector<8x4xf32>
    %c0_7 = arith.constant 0 : index
    %c0_8 = arith.constant 0 : index
    %c1_9 = arith.constant 1 : index
    %7 = vector.load %arg1[%c0_7, %c0_8, %c1_9] : memref<1x4x342xf32, #tpu.memory_space<vmem>>, vector<1x4x288xf32>
    %8 = vector.shape_cast %7 : vector<1x4x288xf32> to vector<4x288xf32>
    %cst_10 = arith.constant dense<0.000000e+00> : vector<8x288xf32>
    %9 = tpu.matmul %6, %8, %cst_10 {dimension_numbers = #tpu.dot_dimension_numbers<[1], [0], [0], [1], [0, 0, 1, 1], [], []>} : vector<8x4xf32>, vector<4x288xf32>, vector<8x288xf32> -> vector<8x288xf32>
    %10 = arith.addf %4, %9 : vector<8x288xf32>
    %c2 = arith.constant 2 : index
    %c0_11 = arith.constant 0 : index
    %c0_12 = arith.constant 0 : index
    %11 = vector.load %arg2[%c2, %c0_11, %c0_12] : memref<9x8x4xf32, #tpu.memory_space<vmem>>, vector<1x8x4xf32>
    %12 = vector.shape_cast %11 : vector<1x8x4xf32> to vector<8x4xf32>
    %c0_13 = arith.constant 0 : index
    %c0_14 = arith.constant 0 : index
    %c2_15 = arith.constant 2 : index
    %13 = vector.load %arg1[%c0_13, %c0_14, %c2_15] : memref<1x4x342xf32, #tpu.memory_space<vmem>>, vector<1x4x288xf32>
    %14 = vector.shape_cast %13 : vector<1x4x288xf32> to vector<4x288xf32>
    %cst_16 = arith.constant dense<0.000000e+00> : vector<8x288xf32>
    %15 = tpu.matmul %12, %14, %cst_16 {dimension_numbers = #tpu.dot_dimension_numbers<[1], [0], [0], [1], [0, 0, 1, 1], [], []>} : vector<8x4xf32>, vector<4x288xf32>, vector<8x288xf32> -> vector<8x288xf32>
    %16 = arith.addf %10, %15 : vector<8x288xf32>
    %c3 = arith.constant 3 : index
    %c0_17 = arith.constant 0 : index
    %c0_18 = arith.constant 0 : index
    %17 = vector.load %arg2[%c3, %c0_17, %c0_18] : memref<9x8x4xf32, #tpu.memory_space<vmem>>, vector<1x8x4xf32>
    %18 = vector.shape_cast %17 : vector<1x8x4xf32> to vector<8x4xf32>
    %c0_19 = arith.constant 0 : index
    %c0_20 = arith.constant 0 : index
    %c18 = arith.constant 18 : index
    %19 = vector.load %arg1[%c0_19, %c0_20, %c18] : memref<1x4x342xf32, #tpu.memory_space<vmem>>, vector<1x4x288xf32>
    %20 = vector.shape_cast %19 : vector<1x4x288xf32> to vector<4x288xf32>
    %cst_21 = arith.constant dense<0.000000e+00> : vector<8x288xf32>
    %21 = tpu.matmul %18, %20, %cst_21 {dimension_numbers = #tpu.dot_dimension_numbers<[1], [0], [0], [1], [0, 0, 1, 1], [], []>} : vector<8x4xf32>, vector<4x288xf32>, vector<8x288xf32> -> vector<8x288xf32>
    %22 = arith.addf %16, %21 : vector<8x288xf32>
    %c4 = arith.constant 4 : index
    %c0_22 = arith.constant 0 : index
    %c0_23 = arith.constant 0 : index
    %23 = vector.load %arg2[%c4, %c0_22, %c0_23] : memref<9x8x4xf32, #tpu.memory_space<vmem>>, vector<1x8x4xf32>
    %24 = vector.shape_cast %23 : vector<1x8x4xf32> to vector<8x4xf32>
    %c0_24 = arith.constant 0 : index
    %c0_25 = arith.constant 0 : index
    %c19 = arith.constant 19 : index
    %25 = vector.load %arg1[%c0_24, %c0_25, %c19] : memref<1x4x342xf32, #tpu.memory_space<vmem>>, vector<1x4x288xf32>
    %26 = vector.shape_cast %25 : vector<1x4x288xf32> to vector<4x288xf32>
    %cst_26 = arith.constant dense<0.000000e+00> : vector<8x288xf32>
    %27 = tpu.matmul %24, %26, %cst_26 {dimension_numbers = #tpu.dot_dimension_numbers<[1], [0], [0], [1], [0, 0, 1, 1], [], []>} : vector<8x4xf32>, vector<4x288xf32>, vector<8x288xf32> -> vector<8x288xf32>
    %28 = arith.addf %22, %27 : vector<8x288xf32>
    %c5 = arith.constant 5 : index
    %c0_27 = arith.constant 0 : index
    %c0_28 = arith.constant 0 : index
    %29 = vector.load %arg2[%c5, %c0_27, %c0_28] : memref<9x8x4xf32, #tpu.memory_space<vmem>>, vector<1x8x4xf32>
    %30 = vector.shape_cast %29 : vector<1x8x4xf32> to vector<8x4xf32>
    %c0_29 = arith.constant 0 : index
    %c0_30 = arith.constant 0 : index
    %c20 = arith.constant 20 : index
    %31 = vector.load %arg1[%c0_29, %c0_30, %c20] : memref<1x4x342xf32, #tpu.memory_space<vmem>>, vector<1x4x288xf32>
    %32 = vector.shape_cast %31 : vector<1x4x288xf32> to vector<4x288xf32>
    %cst_31 = arith.constant dense<0.000000e+00> : vector<8x288xf32>
    %33 = tpu.matmul %30, %32, %cst_31 {dimension_numbers = #tpu.dot_dimension_numbers<[1], [0], [0], [1], [0, 0, 1, 1], [], []>} : vector<8x4xf32>, vector<4x288xf32>, vector<8x288xf32> -> vector<8x288xf32>
    %34 = arith.addf %28, %33 : vector<8x288xf32>
    %c6 = arith.constant 6 : index
    %c0_32 = arith.constant 0 : index
    %c0_33 = arith.constant 0 : index
    %35 = vector.load %arg2[%c6, %c0_32, %c0_33] : memref<9x8x4xf32, #tpu.memory_space<vmem>>, vector<1x8x4xf32>
    %36 = vector.shape_cast %35 : vector<1x8x4xf32> to vector<8x4xf32>
    %c0_34 = arith.constant 0 : index
    %c0_35 = arith.constant 0 : index
    %c36 = arith.constant 36 : index
    %37 = vector.load %arg1[%c0_34, %c0_35, %c36] : memref<1x4x342xf32, #tpu.memory_space<vmem>>, vector<1x4x288xf32>
    %38 = vector.shape_cast %37 : vector<1x4x288xf32> to vector<4x288xf32>
    %cst_36 = arith.constant dense<0.000000e+00> : vector<8x288xf32>
    %39 = tpu.matmul %36, %38, %cst_36 {dimension_numbers = #tpu.dot_dimension_numbers<[1], [0], [0], [1], [0, 0, 1, 1], [], []>} : vector<8x4xf32>, vector<4x288xf32>, vector<8x288xf32> -> vector<8x288xf32>
    %40 = arith.addf %34, %39 : vector<8x288xf32>
    %c7 = arith.constant 7 : index
    %c0_37 = arith.constant 0 : index
    %c0_38 = arith.constant 0 : index
    %41 = vector.load %arg2[%c7, %c0_37, %c0_38] : memref<9x8x4xf32, #tpu.memory_space<vmem>>, vector<1x8x4xf32>
    %42 = vector.shape_cast %41 : vector<1x8x4xf32> to vector<8x4xf32>
    %c0_39 = arith.constant 0 : index
    %c0_40 = arith.constant 0 : index
    %c37 = arith.constant 37 : index
    %43 = vector.load %arg1[%c0_39, %c0_40, %c37] : memref<1x4x342xf32, #tpu.memory_space<vmem>>, vector<1x4x288xf32>
    %44 = vector.shape_cast %43 : vector<1x4x288xf32> to vector<4x288xf32>
    %cst_41 = arith.constant dense<0.000000e+00> : vector<8x288xf32>
    %45 = tpu.matmul %42, %44, %cst_41 {dimension_numbers = #tpu.dot_dimension_numbers<[1], [0], [0], [1], [0, 0, 1, 1], [], []>} : vector<8x4xf32>, vector<4x288xf32>, vector<8x288xf32> -> vector<8x288xf32>
    %46 = arith.addf %40, %45 : vector<8x288xf32>
    %c8 = arith.constant 8 : index
    %c0_42 = arith.constant 0 : index
    %c0_43 = arith.constant 0 : index
    %47 = vector.load %arg2[%c8, %c0_42, %c0_43] : memref<9x8x4xf32, #tpu.memory_space<vmem>>, vector<1x8x4xf32>
    %48 = vector.shape_cast %47 : vector<1x8x4xf32> to vector<8x4xf32>
    %c0_44 = arith.constant 0 : index
    %c0_45 = arith.constant 0 : index
    %c38 = arith.constant 38 : index
    %49 = vector.load %arg1[%c0_44, %c0_45, %c38] : memref<1x4x342xf32, #tpu.memory_space<vmem>>, vector<1x4x288xf32>
    %50 = vector.shape_cast %49 : vector<1x4x288xf32> to vector<4x288xf32>
    %cst_46 = arith.constant dense<0.000000e+00> : vector<8x288xf32>
    %51 = tpu.matmul %48, %50, %cst_46 {dimension_numbers = #tpu.dot_dimension_numbers<[1], [0], [0], [1], [0, 0, 1, 1], [], []>} : vector<8x4xf32>, vector<4x288xf32>, vector<8x288xf32> -> vector<8x288xf32>
    %52 = arith.addf %46, %51 : vector<8x288xf32>
    %c0_47 = arith.constant 0 : index
    %c0_48 = arith.constant 0 : index
    %53 = vector.load %arg3[%c0_47, %c0_48] : memref<8x1xf32, #tpu.memory_space<vmem>>, vector<8x1xf32>
    %54 = vector.broadcast %53 : vector<8x1xf32> to vector<8x288xf32>
    %55 = arith.addf %52, %54 : vector<8x288xf32>
    %c0_49 = arith.constant 0 : index
    %c0_50 = arith.constant 0 : index
    %56 = vector.load %arg4[%c0_49, %c0_50] : memref<1x288xf32, #tpu.memory_space<vmem>>, vector<1x288xf32>
    %57 = vector.broadcast %56 : vector<1x288xf32> to vector<8x288xf32>
    %58 = arith.mulf %55, %57 : vector<8x288xf32>
    %cst_51 = arith.constant dense<0.000000e+00> : vector<8xf32>
    %59 = vector.multi_reduction <add>, %58, %cst_51 [1] : vector<8x288xf32> to vector<8xf32>
    %60 = vector.shape_cast %59 : vector<8xf32> to vector<8x1xf32>
    %61 = arith.mulf %58, %55 : vector<8x288xf32>
    %cst_52 = arith.constant dense<0.000000e+00> : vector<8xf32>
    %62 = vector.multi_reduction <add>, %61, %cst_52 [1] : vector<8x288xf32> to vector<8xf32>
    %63 = vector.shape_cast %62 : vector<8xf32> to vector<8x1xf32>
    %64 = tpu.concatenate %60, %63 in 1 : vector<8x1xf32>, vector<8x1xf32> -> vector<8x2xf32>
    %c0_53 = arith.constant 0 : index
    %c0_54 = arith.constant 0 : index
    %c0_55 = arith.constant 0 : index
    %65 = vector.load %arg5[%c0_53, %c0_54, %c0_55] : memref<1x8x2xf32, #tpu.memory_space<vmem>>, vector<1x8x2xf32>
    %66 = vector.shape_cast %65 : vector<1x8x2xf32> to vector<8x2xf32>
    %67 = vector.shape_cast %64 : vector<8x2xf32> to vector<1x8x2xf32>
    tpu.vector_store %arg5[%c0_53, %c0_54, %c0_55], %67 {strides = array<i32>} : memref<1x8x2xf32, #tpu.memory_space<vmem>>, vector<1x8x2xf32>,
    return
  }
  func.func @transform_0(%arg0: i32) -> (i32, i32, i32) {
    %c0_i32 = arith.constant 0 : i32
    %c0_i32_0 = arith.constant 0 : i32
    %c0_i32_1 = arith.constant 0 : i32
    return %arg0, %c0_i32, %c0_i32_0 : i32, i32, i32
  }
  func.func @transform_1(%arg0: i32) -> (i32, i32, i32) {
    %c0_i32 = arith.constant 0 : i32
    %c0_i32_0 = arith.constant 0 : i32
    %c0_i32_1 = arith.constant 0 : i32
    %c0_i32_2 = arith.constant 0 : i32
    return %c0_i32, %c0_i32_0, %c0_i32_1 : i32, i32, i32
  }
  func.func @transform_2(%arg0: i32) -> (i32, i32) {
    %c0_i32 = arith.constant 0 : i32
    %c0_i32_0 = arith.constant 0 : i32
    %c0_i32_1 = arith.constant 0 : i32
    return %c0_i32, %c0_i32_0 : i32, i32
  }
  func.func @transform_3(%arg0: i32) -> (i32, i32) {
    %c0_i32 = arith.constant 0 : i32
    %c0_i32_0 = arith.constant 0 : i32
    %c0_i32_1 = arith.constant 0 : i32
    return %c0_i32, %c0_i32_0 : i32, i32
  }
  func.func @transform_4(%arg0: i32) -> (i32, i32, i32) {
    %c0_i32 = arith.constant 0 : i32
    %c0_i32_0 = arith.constant 0 : i32
    %c0_i32_1 = arith.constant 0 : i32
    return %arg0, %c0_i32, %c0_i32_0 : i32, i32, i32
  }
}

module attributes {stable_mosaic.version = 11 : i64} {
  func.func @_conv_bn_lrelu_kernel(%arg0: i32, %arg1: memref<1x4x342xf32, #tpu.memory_space<vmem>>, %arg2: memref<9x8x4xf32, #tpu.memory_space<vmem>>, %arg3: memref<8x1xf32, #tpu.memory_space<vmem>>, %arg4: memref<8x1xf32, #tpu.memory_space<vmem>>, %arg5: memref<8x1xf32, #tpu.memory_space<vmem>>, %arg6: memref<1x8x256xf32, #tpu.memory_space<vmem>>) attributes {dimension_semantics = [#tpu.dimension_semantics<parallel>], iteration_bounds = array<i64: 2>, scalar_prefetch = 0 : i64, scratch_operands = 0 : i64, tpu.core_type = #tpu.core_type<tc>, window_params = [{transform_indices = @transform_0, window_bounds = array<i64: 1, 4, 342>}, {pipeline_mode = #tpu.pipeline_mode<synchronous>, transform_indices = @transform_1, window_bounds = array<i64: 9, 8, 4>}, {pipeline_mode = #tpu.pipeline_mode<synchronous>, transform_indices = @transform_2, window_bounds = array<i64: 8, 1>}, {pipeline_mode = #tpu.pipeline_mode<synchronous>, transform_indices = @transform_3, window_bounds = array<i64: 8, 1>}, {pipeline_mode = #tpu.pipeline_mode<synchronous>, transform_indices = @transform_4, window_bounds = array<i64: 8, 1>}, {transform_indices = @transform_5, window_bounds = array<i64: 1, 8, 256>}]} {
    %c0 = arith.constant 0 : index
    %c0_0 = arith.constant 0 : index
    %c0_1 = arith.constant 0 : index
    %0 = vector.load %arg2[%c0, %c0_0, %c0_1] : memref<9x8x4xf32, #tpu.memory_space<vmem>>, vector<1x8x4xf32>
    %1 = vector.shape_cast %0 : vector<1x8x4xf32> to vector<8x4xf32>
    %c0_2 = arith.constant 0 : index
    %c0_3 = arith.constant 0 : index
    %c0_4 = arith.constant 0 : index
    %2 = vector.load %arg1[%c0_2, %c0_3, %c0_4] : memref<1x4x342xf32, #tpu.memory_space<vmem>>, vector<1x4x288xf32>
    %3 = vector.shape_cast %2 : vector<1x4x288xf32> to vector<4x288xf32>
    %cst = arith.constant dense<0.000000e+00> : vector<8x288xf32>
    %4 = tpu.matmul %1, %3, %cst {dimension_numbers = #tpu.dot_dimension_numbers<[1], [0], [0], [1], [0, 0, 1, 1], [], []>} : vector<8x4xf32>, vector<4x288xf32>, vector<8x288xf32> -> vector<8x288xf32>
    %c1 = arith.constant 1 : index
    %c0_5 = arith.constant 0 : index
    %c0_6 = arith.constant 0 : index
    %5 = vector.load %arg2[%c1, %c0_5, %c0_6] : memref<9x8x4xf32, #tpu.memory_space<vmem>>, vector<1x8x4xf32>
    %6 = vector.shape_cast %5 : vector<1x8x4xf32> to vector<8x4xf32>
    %c0_7 = arith.constant 0 : index
    %c0_8 = arith.constant 0 : index
    %c1_9 = arith.constant 1 : index
    %7 = vector.load %arg1[%c0_7, %c0_8, %c1_9] : memref<1x4x342xf32, #tpu.memory_space<vmem>>, vector<1x4x288xf32>
    %8 = vector.shape_cast %7 : vector<1x4x288xf32> to vector<4x288xf32>
    %cst_10 = arith.constant dense<0.000000e+00> : vector<8x288xf32>
    %9 = tpu.matmul %6, %8, %cst_10 {dimension_numbers = #tpu.dot_dimension_numbers<[1], [0], [0], [1], [0, 0, 1, 1], [], []>} : vector<8x4xf32>, vector<4x288xf32>, vector<8x288xf32> -> vector<8x288xf32>
    %10 = arith.addf %4, %9 : vector<8x288xf32>
    %c2 = arith.constant 2 : index
    %c0_11 = arith.constant 0 : index
    %c0_12 = arith.constant 0 : index
    %11 = vector.load %arg2[%c2, %c0_11, %c0_12] : memref<9x8x4xf32, #tpu.memory_space<vmem>>, vector<1x8x4xf32>
    %12 = vector.shape_cast %11 : vector<1x8x4xf32> to vector<8x4xf32>
    %c0_13 = arith.constant 0 : index
    %c0_14 = arith.constant 0 : index
    %c2_15 = arith.constant 2 : index
    %13 = vector.load %arg1[%c0_13, %c0_14, %c2_15] : memref<1x4x342xf32, #tpu.memory_space<vmem>>, vector<1x4x288xf32>
    %14 = vector.shape_cast %13 : vector<1x4x288xf32> to vector<4x288xf32>
    %cst_16 = arith.constant dense<0.000000e+00> : vector<8x288xf32>
    %15 = tpu.matmul %12, %14, %cst_16 {dimension_numbers = #tpu.dot_dimension_numbers<[1], [0], [0], [1], [0, 0, 1, 1], [], []>} : vector<8x4xf32>, vector<4x288xf32>, vector<8x288xf32> -> vector<8x288xf32>
    %16 = arith.addf %10, %15 : vector<8x288xf32>
    %c3 = arith.constant 3 : index
    %c0_17 = arith.constant 0 : index
    %c0_18 = arith.constant 0 : index
    %17 = vector.load %arg2[%c3, %c0_17, %c0_18] : memref<9x8x4xf32, #tpu.memory_space<vmem>>, vector<1x8x4xf32>
    %18 = vector.shape_cast %17 : vector<1x8x4xf32> to vector<8x4xf32>
    %c0_19 = arith.constant 0 : index
    %c0_20 = arith.constant 0 : index
    %c18 = arith.constant 18 : index
    %19 = vector.load %arg1[%c0_19, %c0_20, %c18] : memref<1x4x342xf32, #tpu.memory_space<vmem>>, vector<1x4x288xf32>
    %20 = vector.shape_cast %19 : vector<1x4x288xf32> to vector<4x288xf32>
    %cst_21 = arith.constant dense<0.000000e+00> : vector<8x288xf32>
    %21 = tpu.matmul %18, %20, %cst_21 {dimension_numbers = #tpu.dot_dimension_numbers<[1], [0], [0], [1], [0, 0, 1, 1], [], []>} : vector<8x4xf32>, vector<4x288xf32>, vector<8x288xf32> -> vector<8x288xf32>
    %22 = arith.addf %16, %21 : vector<8x288xf32>
    %c4 = arith.constant 4 : index
    %c0_22 = arith.constant 0 : index
    %c0_23 = arith.constant 0 : index
    %23 = vector.load %arg2[%c4, %c0_22, %c0_23] : memref<9x8x4xf32, #tpu.memory_space<vmem>>, vector<1x8x4xf32>
    %24 = vector.shape_cast %23 : vector<1x8x4xf32> to vector<8x4xf32>
    %c0_24 = arith.constant 0 : index
    %c0_25 = arith.constant 0 : index
    %c19 = arith.constant 19 : index
    %25 = vector.load %arg1[%c0_24, %c0_25, %c19] : memref<1x4x342xf32, #tpu.memory_space<vmem>>, vector<1x4x288xf32>
    %26 = vector.shape_cast %25 : vector<1x4x288xf32> to vector<4x288xf32>
    %cst_26 = arith.constant dense<0.000000e+00> : vector<8x288xf32>
    %27 = tpu.matmul %24, %26, %cst_26 {dimension_numbers = #tpu.dot_dimension_numbers<[1], [0], [0], [1], [0, 0, 1, 1], [], []>} : vector<8x4xf32>, vector<4x288xf32>, vector<8x288xf32> -> vector<8x288xf32>
    %28 = arith.addf %22, %27 : vector<8x288xf32>
    %c5 = arith.constant 5 : index
    %c0_27 = arith.constant 0 : index
    %c0_28 = arith.constant 0 : index
    %29 = vector.load %arg2[%c5, %c0_27, %c0_28] : memref<9x8x4xf32, #tpu.memory_space<vmem>>, vector<1x8x4xf32>
    %30 = vector.shape_cast %29 : vector<1x8x4xf32> to vector<8x4xf32>
    %c0_29 = arith.constant 0 : index
    %c0_30 = arith.constant 0 : index
    %c20 = arith.constant 20 : index
    %31 = vector.load %arg1[%c0_29, %c0_30, %c20] : memref<1x4x342xf32, #tpu.memory_space<vmem>>, vector<1x4x288xf32>
    %32 = vector.shape_cast %31 : vector<1x4x288xf32> to vector<4x288xf32>
    %cst_31 = arith.constant dense<0.000000e+00> : vector<8x288xf32>
    %33 = tpu.matmul %30, %32, %cst_31 {dimension_numbers = #tpu.dot_dimension_numbers<[1], [0], [0], [1], [0, 0, 1, 1], [], []>} : vector<8x4xf32>, vector<4x288xf32>, vector<8x288xf32> -> vector<8x288xf32>
    %34 = arith.addf %28, %33 : vector<8x288xf32>
    %c6 = arith.constant 6 : index
    %c0_32 = arith.constant 0 : index
    %c0_33 = arith.constant 0 : index
    %35 = vector.load %arg2[%c6, %c0_32, %c0_33] : memref<9x8x4xf32, #tpu.memory_space<vmem>>, vector<1x8x4xf32>
    %36 = vector.shape_cast %35 : vector<1x8x4xf32> to vector<8x4xf32>
    %c0_34 = arith.constant 0 : index
    %c0_35 = arith.constant 0 : index
    %c36 = arith.constant 36 : index
    %37 = vector.load %arg1[%c0_34, %c0_35, %c36] : memref<1x4x342xf32, #tpu.memory_space<vmem>>, vector<1x4x288xf32>
    %38 = vector.shape_cast %37 : vector<1x4x288xf32> to vector<4x288xf32>
    %cst_36 = arith.constant dense<0.000000e+00> : vector<8x288xf32>
    %39 = tpu.matmul %36, %38, %cst_36 {dimension_numbers = #tpu.dot_dimension_numbers<[1], [0], [0], [1], [0, 0, 1, 1], [], []>} : vector<8x4xf32>, vector<4x288xf32>, vector<8x288xf32> -> vector<8x288xf32>
    %40 = arith.addf %34, %39 : vector<8x288xf32>
    %c7 = arith.constant 7 : index
    %c0_37 = arith.constant 0 : index
    %c0_38 = arith.constant 0 : index
    %41 = vector.load %arg2[%c7, %c0_37, %c0_38] : memref<9x8x4xf32, #tpu.memory_space<vmem>>, vector<1x8x4xf32>
    %42 = vector.shape_cast %41 : vector<1x8x4xf32> to vector<8x4xf32>
    %c0_39 = arith.constant 0 : index
    %c0_40 = arith.constant 0 : index
    %c37 = arith.constant 37 : index
    %43 = vector.load %arg1[%c0_39, %c0_40, %c37] : memref<1x4x342xf32, #tpu.memory_space<vmem>>, vector<1x4x288xf32>
    %44 = vector.shape_cast %43 : vector<1x4x288xf32> to vector<4x288xf32>
    %cst_41 = arith.constant dense<0.000000e+00> : vector<8x288xf32>
    %45 = tpu.matmul %42, %44, %cst_41 {dimension_numbers = #tpu.dot_dimension_numbers<[1], [0], [0], [1], [0, 0, 1, 1], [], []>} : vector<8x4xf32>, vector<4x288xf32>, vector<8x288xf32> -> vector<8x288xf32>
    %46 = arith.addf %40, %45 : vector<8x288xf32>
    %c8 = arith.constant 8 : index
    %c0_42 = arith.constant 0 : index
    %c0_43 = arith.constant 0 : index
    %47 = vector.load %arg2[%c8, %c0_42, %c0_43] : memref<9x8x4xf32, #tpu.memory_space<vmem>>, vector<1x8x4xf32>
    %48 = vector.shape_cast %47 : vector<1x8x4xf32> to vector<8x4xf32>
    %c0_44 = arith.constant 0 : index
    %c0_45 = arith.constant 0 : index
    %c38 = arith.constant 38 : index
    %49 = vector.load %arg1[%c0_44, %c0_45, %c38] : memref<1x4x342xf32, #tpu.memory_space<vmem>>, vector<1x4x288xf32>
    %50 = vector.shape_cast %49 : vector<1x4x288xf32> to vector<4x288xf32>
    %cst_46 = arith.constant dense<0.000000e+00> : vector<8x288xf32>
    %51 = tpu.matmul %48, %50, %cst_46 {dimension_numbers = #tpu.dot_dimension_numbers<[1], [0], [0], [1], [0, 0, 1, 1], [], []>} : vector<8x4xf32>, vector<4x288xf32>, vector<8x288xf32> -> vector<8x288xf32>
    %52 = arith.addf %46, %51 : vector<8x288xf32>
    %c0_47 = arith.constant 0 : index
    %c0_48 = arith.constant 0 : index
    %53 = vector.load %arg3[%c0_47, %c0_48] : memref<8x1xf32, #tpu.memory_space<vmem>>, vector<8x1xf32>
    %54 = vector.broadcast %53 : vector<8x1xf32> to vector<8x288xf32>
    %55 = arith.addf %52, %54 : vector<8x288xf32>
    %c0_49 = arith.constant 0 : index
    %c0_50 = arith.constant 0 : index
    %56 = vector.load %arg4[%c0_49, %c0_50] : memref<8x1xf32, #tpu.memory_space<vmem>>, vector<8x1xf32>
    %57 = vector.broadcast %56 : vector<8x1xf32> to vector<8x288xf32>
    %58 = arith.mulf %55, %57 : vector<8x288xf32>
    %c0_51 = arith.constant 0 : index
    %c0_52 = arith.constant 0 : index
    %59 = vector.load %arg5[%c0_51, %c0_52] : memref<8x1xf32, #tpu.memory_space<vmem>>, vector<8x1xf32>
    %60 = vector.broadcast %59 : vector<8x1xf32> to vector<8x288xf32>
    %61 = arith.addf %58, %60 : vector<8x288xf32>
    %cst_53 = arith.constant 0.000000e+00 : f32
    %62 = vector.broadcast %cst_53 : f32 to vector<8x288xf32>
    %63 = arith.cmpf oge, %61, %62 : vector<8x288xf32>
    %cst_54 = arith.constant 3.000000e-01 : f32
    %64 = vector.broadcast %cst_54 : f32 to vector<8x288xf32>
    %65 = arith.mulf %64, %61 : vector<8x288xf32>
    %66 = arith.select %63, %61, %65 : vector<8x288xi1>, vector<8x288xf32>
    %67 = vector.extract_strided_slice %66 {offsets = [0, 0], sizes = [8, 16], strides = [1, 1]} : vector<8x288xf32> to vector<8x16xf32>
    %c0_55 = arith.constant 0 : index
    %c0_56 = arith.constant 0 : index
    %c0_57 = arith.constant 0 : index
    %68 = vector.load %arg6[%c0_55, %c0_56, %c0_57] : memref<1x8x256xf32, #tpu.memory_space<vmem>>, vector<1x8x16xf32>
    %69 = vector.shape_cast %68 : vector<1x8x16xf32> to vector<8x16xf32>
    %70 = vector.shape_cast %67 : vector<8x16xf32> to vector<1x8x16xf32>
    tpu.vector_store %arg6[%c0_55, %c0_56, %c0_57], %70 {strides = array<i32>} : memref<1x8x256xf32, #tpu.memory_space<vmem>>, vector<1x8x16xf32>,
    %71 = vector.extract_strided_slice %66 {offsets = [0, 18], sizes = [8, 16], strides = [1, 1]} : vector<8x288xf32> to vector<8x16xf32>
    %c0_58 = arith.constant 0 : index
    %c0_59 = arith.constant 0 : index
    %c16 = arith.constant 16 : index
    %72 = vector.load %arg6[%c0_58, %c0_59, %c16] : memref<1x8x256xf32, #tpu.memory_space<vmem>>, vector<1x8x16xf32>
    %73 = vector.shape_cast %72 : vector<1x8x16xf32> to vector<8x16xf32>
    %74 = vector.shape_cast %71 : vector<8x16xf32> to vector<1x8x16xf32>
    tpu.vector_store %arg6[%c0_58, %c0_59, %c16], %74 {strides = array<i32>} : memref<1x8x256xf32, #tpu.memory_space<vmem>>, vector<1x8x16xf32>,
    %75 = vector.extract_strided_slice %66 {offsets = [0, 36], sizes = [8, 16], strides = [1, 1]} : vector<8x288xf32> to vector<8x16xf32>
    %c0_60 = arith.constant 0 : index
    %c0_61 = arith.constant 0 : index
    %c32 = arith.constant 32 : index
    %76 = vector.load %arg6[%c0_60, %c0_61, %c32] : memref<1x8x256xf32, #tpu.memory_space<vmem>>, vector<1x8x16xf32>
    %77 = vector.shape_cast %76 : vector<1x8x16xf32> to vector<8x16xf32>
    %78 = vector.shape_cast %75 : vector<8x16xf32> to vector<1x8x16xf32>
    tpu.vector_store %arg6[%c0_60, %c0_61, %c32], %78 {strides = array<i32>} : memref<1x8x256xf32, #tpu.memory_space<vmem>>, vector<1x8x16xf32>,
    %79 = vector.extract_strided_slice %66 {offsets = [0, 54], sizes = [8, 16], strides = [1, 1]} : vector<8x288xf32> to vector<8x16xf32>
    %c0_62 = arith.constant 0 : index
    %c0_63 = arith.constant 0 : index
    %c48 = arith.constant 48 : index
    %80 = vector.load %arg6[%c0_62, %c0_63, %c48] : memref<1x8x256xf32, #tpu.memory_space<vmem>>, vector<1x8x16xf32>
    %81 = vector.shape_cast %80 : vector<1x8x16xf32> to vector<8x16xf32>
    %82 = vector.shape_cast %79 : vector<8x16xf32> to vector<1x8x16xf32>
    tpu.vector_store %arg6[%c0_62, %c0_63, %c48], %82 {strides = array<i32>} : memref<1x8x256xf32, #tpu.memory_space<vmem>>, vector<1x8x16xf32>,
    %83 = vector.extract_strided_slice %66 {offsets = [0, 72], sizes = [8, 16], strides = [1, 1]} : vector<8x288xf32> to vector<8x16xf32>
    %c0_64 = arith.constant 0 : index
    %c0_65 = arith.constant 0 : index
    %c64 = arith.constant 64 : index
    %84 = vector.load %arg6[%c0_64, %c0_65, %c64] : memref<1x8x256xf32, #tpu.memory_space<vmem>>, vector<1x8x16xf32>
    %85 = vector.shape_cast %84 : vector<1x8x16xf32> to vector<8x16xf32>
    %86 = vector.shape_cast %83 : vector<8x16xf32> to vector<1x8x16xf32>
    tpu.vector_store %arg6[%c0_64, %c0_65, %c64], %86 {strides = array<i32>} : memref<1x8x256xf32, #tpu.memory_space<vmem>>, vector<1x8x16xf32>,
    %87 = vector.extract_strided_slice %66 {offsets = [0, 90], sizes = [8, 16], strides = [1, 1]} : vector<8x288xf32> to vector<8x16xf32>
    %c0_66 = arith.constant 0 : index
    %c0_67 = arith.constant 0 : index
    %c80 = arith.constant 80 : index
    %88 = vector.load %arg6[%c0_66, %c0_67, %c80] : memref<1x8x256xf32, #tpu.memory_space<vmem>>, vector<1x8x16xf32>
    %89 = vector.shape_cast %88 : vector<1x8x16xf32> to vector<8x16xf32>
    %90 = vector.shape_cast %87 : vector<8x16xf32> to vector<1x8x16xf32>
    tpu.vector_store %arg6[%c0_66, %c0_67, %c80], %90 {strides = array<i32>} : memref<1x8x256xf32, #tpu.memory_space<vmem>>, vector<1x8x16xf32>,
    %91 = vector.extract_strided_slice %66 {offsets = [0, 108], sizes = [8, 16], strides = [1, 1]} : vector<8x288xf32> to vector<8x16xf32>
    %c0_68 = arith.constant 0 : index
    %c0_69 = arith.constant 0 : index
    %c96 = arith.constant 96 : index
    %92 = vector.load %arg6[%c0_68, %c0_69, %c96] : memref<1x8x256xf32, #tpu.memory_space<vmem>>, vector<1x8x16xf32>
    %93 = vector.shape_cast %92 : vector<1x8x16xf32> to vector<8x16xf32>
    %94 = vector.shape_cast %91 : vector<8x16xf32> to vector<1x8x16xf32>
    tpu.vector_store %arg6[%c0_68, %c0_69, %c96], %94 {strides = array<i32>} : memref<1x8x256xf32, #tpu.memory_space<vmem>>, vector<1x8x16xf32>,
    %95 = vector.extract_strided_slice %66 {offsets = [0, 126], sizes = [8, 16], strides = [1, 1]} : vector<8x288xf32> to vector<8x16xf32>
    %c0_70 = arith.constant 0 : index
    %c0_71 = arith.constant 0 : index
    %c112 = arith.constant 112 : index
    %96 = vector.load %arg6[%c0_70, %c0_71, %c112] : memref<1x8x256xf32, #tpu.memory_space<vmem>>, vector<1x8x16xf32>
    %97 = vector.shape_cast %96 : vector<1x8x16xf32> to vector<8x16xf32>
    %98 = vector.shape_cast %95 : vector<8x16xf32> to vector<1x8x16xf32>
    tpu.vector_store %arg6[%c0_70, %c0_71, %c112], %98 {strides = array<i32>} : memref<1x8x256xf32, #tpu.memory_space<vmem>>, vector<1x8x16xf32>,
    %99 = vector.extract_strided_slice %66 {offsets = [0, 144], sizes = [8, 16], strides = [1, 1]} : vector<8x288xf32> to vector<8x16xf32>
    %c0_72 = arith.constant 0 : index
    %c0_73 = arith.constant 0 : index
    %c128 = arith.constant 128 : index
    %100 = vector.load %arg6[%c0_72, %c0_73, %c128] : memref<1x8x256xf32, #tpu.memory_space<vmem>>, vector<1x8x16xf32>
    %101 = vector.shape_cast %100 : vector<1x8x16xf32> to vector<8x16xf32>
    %102 = vector.shape_cast %99 : vector<8x16xf32> to vector<1x8x16xf32>
    tpu.vector_store %arg6[%c0_72, %c0_73, %c128], %102 {strides = array<i32>} : memref<1x8x256xf32, #tpu.memory_space<vmem>>, vector<1x8x16xf32>,
    %103 = vector.extract_strided_slice %66 {offsets = [0, 162], sizes = [8, 16], strides = [1, 1]} : vector<8x288xf32> to vector<8x16xf32>
    %c0_74 = arith.constant 0 : index
    %c0_75 = arith.constant 0 : index
    %c144 = arith.constant 144 : index
    %104 = vector.load %arg6[%c0_74, %c0_75, %c144] : memref<1x8x256xf32, #tpu.memory_space<vmem>>, vector<1x8x16xf32>
    %105 = vector.shape_cast %104 : vector<1x8x16xf32> to vector<8x16xf32>
    %106 = vector.shape_cast %103 : vector<8x16xf32> to vector<1x8x16xf32>
    tpu.vector_store %arg6[%c0_74, %c0_75, %c144], %106 {strides = array<i32>} : memref<1x8x256xf32, #tpu.memory_space<vmem>>, vector<1x8x16xf32>,
    %107 = vector.extract_strided_slice %66 {offsets = [0, 180], sizes = [8, 16], strides = [1, 1]} : vector<8x288xf32> to vector<8x16xf32>
    %c0_76 = arith.constant 0 : index
    %c0_77 = arith.constant 0 : index
    %c160 = arith.constant 160 : index
    %108 = vector.load %arg6[%c0_76, %c0_77, %c160] : memref<1x8x256xf32, #tpu.memory_space<vmem>>, vector<1x8x16xf32>
    %109 = vector.shape_cast %108 : vector<1x8x16xf32> to vector<8x16xf32>
    %110 = vector.shape_cast %107 : vector<8x16xf32> to vector<1x8x16xf32>
    tpu.vector_store %arg6[%c0_76, %c0_77, %c160], %110 {strides = array<i32>} : memref<1x8x256xf32, #tpu.memory_space<vmem>>, vector<1x8x16xf32>,
    %111 = vector.extract_strided_slice %66 {offsets = [0, 198], sizes = [8, 16], strides = [1, 1]} : vector<8x288xf32> to vector<8x16xf32>
    %c0_78 = arith.constant 0 : index
    %c0_79 = arith.constant 0 : index
    %c176 = arith.constant 176 : index
    %112 = vector.load %arg6[%c0_78, %c0_79, %c176] : memref<1x8x256xf32, #tpu.memory_space<vmem>>, vector<1x8x16xf32>
    %113 = vector.shape_cast %112 : vector<1x8x16xf32> to vector<8x16xf32>
    %114 = vector.shape_cast %111 : vector<8x16xf32> to vector<1x8x16xf32>
    tpu.vector_store %arg6[%c0_78, %c0_79, %c176], %114 {strides = array<i32>} : memref<1x8x256xf32, #tpu.memory_space<vmem>>, vector<1x8x16xf32>,
    %115 = vector.extract_strided_slice %66 {offsets = [0, 216], sizes = [8, 16], strides = [1, 1]} : vector<8x288xf32> to vector<8x16xf32>
    %c0_80 = arith.constant 0 : index
    %c0_81 = arith.constant 0 : index
    %c192 = arith.constant 192 : index
    %116 = vector.load %arg6[%c0_80, %c0_81, %c192] : memref<1x8x256xf32, #tpu.memory_space<vmem>>, vector<1x8x16xf32>
    %117 = vector.shape_cast %116 : vector<1x8x16xf32> to vector<8x16xf32>
    %118 = vector.shape_cast %115 : vector<8x16xf32> to vector<1x8x16xf32>
    tpu.vector_store %arg6[%c0_80, %c0_81, %c192], %118 {strides = array<i32>} : memref<1x8x256xf32, #tpu.memory_space<vmem>>, vector<1x8x16xf32>,
    %119 = vector.extract_strided_slice %66 {offsets = [0, 234], sizes = [8, 16], strides = [1, 1]} : vector<8x288xf32> to vector<8x16xf32>
    %c0_82 = arith.constant 0 : index
    %c0_83 = arith.constant 0 : index
    %c208 = arith.constant 208 : index
    %120 = vector.load %arg6[%c0_82, %c0_83, %c208] : memref<1x8x256xf32, #tpu.memory_space<vmem>>, vector<1x8x16xf32>
    %121 = vector.shape_cast %120 : vector<1x8x16xf32> to vector<8x16xf32>
    %122 = vector.shape_cast %119 : vector<8x16xf32> to vector<1x8x16xf32>
    tpu.vector_store %arg6[%c0_82, %c0_83, %c208], %122 {strides = array<i32>} : memref<1x8x256xf32, #tpu.memory_space<vmem>>, vector<1x8x16xf32>,
    %123 = vector.extract_strided_slice %66 {offsets = [0, 252], sizes = [8, 16], strides = [1, 1]} : vector<8x288xf32> to vector<8x16xf32>
    %c0_84 = arith.constant 0 : index
    %c0_85 = arith.constant 0 : index
    %c224 = arith.constant 224 : index
    %124 = vector.load %arg6[%c0_84, %c0_85, %c224] : memref<1x8x256xf32, #tpu.memory_space<vmem>>, vector<1x8x16xf32>
    %125 = vector.shape_cast %124 : vector<1x8x16xf32> to vector<8x16xf32>
    %126 = vector.shape_cast %123 : vector<8x16xf32> to vector<1x8x16xf32>
    tpu.vector_store %arg6[%c0_84, %c0_85, %c224], %126 {strides = array<i32>} : memref<1x8x256xf32, #tpu.memory_space<vmem>>, vector<1x8x16xf32>,
    %127 = vector.extract_strided_slice %66 {offsets = [0, 270], sizes = [8, 16], strides = [1, 1]} : vector<8x288xf32> to vector<8x16xf32>
    %c0_86 = arith.constant 0 : index
    %c0_87 = arith.constant 0 : index
    %c240 = arith.constant 240 : index
    %128 = vector.load %arg6[%c0_86, %c0_87, %c240] : memref<1x8x256xf32, #tpu.memory_space<vmem>>, vector<1x8x16xf32>
    %129 = vector.shape_cast %128 : vector<1x8x16xf32> to vector<8x16xf32>
    %130 = vector.shape_cast %127 : vector<8x16xf32> to vector<1x8x16xf32>
    tpu.vector_store %arg6[%c0_86, %c0_87, %c240], %130 {strides = array<i32>} : memref<1x8x256xf32, #tpu.memory_space<vmem>>, vector<1x8x16xf32>,
    return
  }
  func.func @transform_0(%arg0: i32) -> (i32, i32, i32) {
    %c0_i32 = arith.constant 0 : i32
    %c0_i32_0 = arith.constant 0 : i32
    %c0_i32_1 = arith.constant 0 : i32
    return %arg0, %c0_i32, %c0_i32_0 : i32, i32, i32
  }
  func.func @transform_1(%arg0: i32) -> (i32, i32, i32) {
    %c0_i32 = arith.constant 0 : i32
    %c0_i32_0 = arith.constant 0 : i32
    %c0_i32_1 = arith.constant 0 : i32
    %c0_i32_2 = arith.constant 0 : i32
    return %c0_i32, %c0_i32_0, %c0_i32_1 : i32, i32, i32
  }
  func.func @transform_2(%arg0: i32) -> (i32, i32) {
    %c0_i32 = arith.constant 0 : i32
    %c0_i32_0 = arith.constant 0 : i32
    %c0_i32_1 = arith.constant 0 : i32
    return %c0_i32, %c0_i32_0 : i32, i32
  }
  func.func @transform_3(%arg0: i32) -> (i32, i32) {
    %c0_i32 = arith.constant 0 : i32
    %c0_i32_0 = arith.constant 0 : i32
    %c0_i32_1 = arith.constant 0 : i32
    return %c0_i32, %c0_i32_0 : i32, i32
  }
  func.func @transform_4(%arg0: i32) -> (i32, i32) {
    %c0_i32 = arith.constant 0 : i32
    %c0_i32_0 = arith.constant 0 : i32
    %c0_i32_1 = arith.constant 0 : i32
    return %c0_i32, %c0_i32_0 : i32, i32
  }
  func.func @transform_5(%arg0: i32) -> (i32, i32, i32) {
    %c0_i32 = arith.constant 0 : i32
    %c0_i32_0 = arith.constant 0 : i32
    %c0_i32_1 = arith.constant 0 : i32
    return %arg0, %c0_i32, %c0_i32_0 : i32, i32, i32
  }
}

</mosaic_0001>

<llo_original>
// kernel: conv_block1_forward.2
$region0: #{conv_block1_forward.2}
  #allocation0 [shape = 'u32[]', space=smem, size = 0x4, offset = 0x4, fixed_abs, tag = 'smem constant byte address 0x4 - core index']
  #allocation1 [shape = 'u32[144,128]{1,0:T(1,128)}', space=vmem, size = 0x12000, scoped, tag = 'internal scratch']
  %s0 = inlined_call_operand.vmem [shape: f32[2,4,342], index: 0, kind: input, shape index: {}]
  %s1 = inlined_call_operand.vmem [shape: f32[9,8,4], index: 1, kind: input, shape index: {}]
  %s2 = inlined_call_operand.vmem [shape: f32[8,1], index: 2, kind: input, shape index: {}]
  %s3 = inlined_call_operand.vmem [shape: f32[1,288], index: 3, kind: input, shape index: {}]
  %s4 = inlined_call_operand.vmem [shape: f32[2,8,2], index: 4, kind: output, shape index: {}]
  %s5 = sld [smem:[#allocation0]]
  $region49: #{conv_block1_forward.2} parent=0
    _
  %s7 = ssub.s32 1, %s5
  %s8 = scalar_select 0, %s7, %s5
  loop: start=0, step=1, limit=4
  $region2: #{conv_block1_forward.2} parent=0 // loop_pre_header
    _
  $region3: #{conv_block1_forward.2} parent=0 // loop_header
    %s10 = sphi 0, %s14
    %p11 = scmp.ge.s32.totalorder %s10, 4
    %s20 = sphi 0, %s22
    %s23 = sphi 0, %s20
    %s24 = sphi 0, %s23
    %s40 = sphi 0, %s24
    %s44 = sphi 0, %s44
    %s46 = sphi 0, %s44
    %s47 = sphi 0, %s46
    %s61 = sphi 0, %s47
    %s65 = sphi 0, %s65
    %s67 = sphi 0, %s65
    %s68 = sphi 0, %s67
    %s82 = sphi 0, %s68
    %s86 = sphi 0, %s86
    %s88 = sphi 0, %s86
    %s89 = sphi 0, %s88
    %s103 = sphi 0, %s89
    %s109 = sphi 0, %s111
    %s112 = sphi 0, %s109
    %s113 = sphi 0, %s112
    %s129 = sphi 0, %s113
  $region4: #{conv_block1_forward.2} parent=0 // loop_header_branch
    %13 = sbr.rel (%p11) target = $region8
  $region5: #{conv_block1_forward.2} parent=0 // loop_body
    %s15 = ssub.s32 %s10, 1
    %s16 = ssub.s32 %s10, 2
    %s17 = sadd.s32 %s10, 1
    %s18 = ssub.s32 %s10, %s17
    %p19 = scmp.eq.s32.totalorder %s18, 0
    %s21 = sadd.s32 %s20, 1
    %s22 = scalar_select %p19, %s20, %s21
    %p25 = pneg %p19
    %p26 = scmp.eq.s32.totalorder %s10, 1
    %p27 = por %p25, %p26
    %p28 = scmp.ne.s32.totalorder %s20, %s23
    %p29 = scmp.eq.s32.totalorder %s10, 0
    %p30 = por %p28, %p29
    %p31 = scmp.ne.s32.totalorder %s20, %s23
    %p32 = scmp.eq.s32.totalorder %s15, 1
    %p33 = por %p31, %p32
    %p34 = scmp.ne.s32.totalorder %s23, %s24
    %p35 = scmp.eq.s32.totalorder %s15, 0
    %p36 = por %p34, %p35
    %p37 = scmp.ne.s32.totalorder %s23, %s24
    %p38 = scmp.eq.s32.totalorder %s16, 1
    %p39 = por %p37, %p38
    %p41 = scmp.ne.s32.totalorder %s24, %s40
    %p42 = scmp.eq.s32.totalorder %s16, 0
    %p43 = por %p41, %p42
    %s45 = sadd.s32 %s44, 1
    %p48 = scmp.eq.s32.totalorder %s10, 1
    %p49 = scmp.ne.s32.totalorder %s44, %s46
    %p50 = scmp.eq.s32.totalorder %s10, 0
    %p51 = por %p49, %p50
    %p52 = scmp.ne.s32.totalorder %s44, %s46
    %p53 = scmp.eq.s32.totalorder %s15, 1
    %p54 = por %p52, %p53
    %p55 = scmp.ne.s32.totalorder %s46, %s47
    %p56 = scmp.eq.s32.totalorder %s15, 0
    %p57 = por %p55, %p56
    %p58 = scmp.ne.s32.totalorder %s46, %s47
    %p59 = scmp.eq.s32.totalorder %s16, 1
    %p60 = por %p58, %p59
    %p62 = scmp.ne.s32.totalorder %s47, %s61
    %p63 = scmp.eq.s32.totalorder %s16, 0
    %p64 = por %p62, %p63
    %s66 = sadd.s32 %s65, 1
    %p69 = scmp.eq.s32.totalorder %s10, 1
    %p70 = scmp.ne.s32.totalorder %s65, %s67
    %p71 = scmp.eq.s32.totalorder %s10, 0
    %p72 = por %p70, %p71
    %p73 = scmp.ne.s32.totalorder %s65, %s67
    %p74 = scmp.eq.s32.totalorder %s15, 1
    %p75 = por %p73, %p74
    %p76 = scmp.ne.s32.totalorder %s67, %s68
    %p77 = scmp.eq.s32.totalorder %s15, 0
    %p78 = por %p76, %p77
    %p79 = scmp.ne.s32.totalorder %s67, %s68
    %p80 = scmp.eq.s32.totalorder %s16, 1
    %p81 = por %p79, %p80
    %p83 = scmp.ne.s32.totalorder %s68, %s82
    %p84 = scmp.eq.s32.totalorder %s16, 0
    %p85 = por %p83, %p84
    %s87 = sadd.s32 %s86, 1
    %p90 = scmp.eq.s32.totalorder %s10, 1
    %p91 = scmp.ne.s32.totalorder %s86, %s88
    %p92 = scmp.eq.s32.totalorder %s10, 0
    %p93 = por %p91, %p92
    %p94 = scmp.ne.s32.totalorder %s86, %s88
    %p95 = scmp.eq.s32.totalorder %s15, 1
    %p96 = por %p94, %p95
    %p97 = scmp.ne.s32.totalorder %s88, %s89
    %p98 = scmp.eq.s32.totalorder %s15, 0
    %p99 = por %p97, %p98
    %p100 = scmp.ne.s32.totalorder %s88, %s89
    %p101 = scmp.eq.s32.totalorder %s16, 1
    %p102 = por %p100, %p101
    %p104 = scmp.ne.s32.totalorder %s89, %s103
    %p105 = scmp.eq.s32.totalorder %s16, 0
    %p106 = por %p104, %p105
    %s107 = ssub.s32 %s10, %s17
    %p108 = scmp.eq.s32.totalorder %s107, 0
    %s110 = sadd.s32 %s109, 1
    %s111 = scalar_select %p108, %s109, %s110
    %p114 = pneg %p108
    %p115 = scmp.eq.s32.totalorder %s10, 1
    %p116 = por %p114, %p115
    %p117 = scmp.ne.s32.totalorder %s109, %s112
    %p118 = scmp.eq.s32.totalorder %s10, 0
    %p119 = por %p117, %p118
    %p120 = scmp.ne.s32.totalorder %s109, %s112
    %p121 = scmp.eq.s32.totalorder %s15, 1
    %p122 = por %p120, %p121
    %p123 = scmp.ne.s32.totalorder %s112, %s113
    %p124 = scmp.eq.s32.totalorder %s15, 0
    %p125 = por %p123, %p124
    %p126 = scmp.ne.s32.totalorder %s112, %s113
    %p127 = scmp.eq.s32.totalorder %s16, 1
    %p128 = por %p126, %p127
    %p130 = scmp.ne.s32.totalorder %s113, %s129
    %p131 = scmp.eq.s32.totalorder %s16, 0
    %p132 = por %p130, %p131
    %p133 = scmp.le.s32.totalorder 1, %s10
    %p134 = scmp.lt.s32.totalorder %s10, 3
    %p135 = pnand %p133, %p134
    %p136 = pneg %p135
    // Predicated region
    $region9: #{conv_block1_forward.2} parent=5 // pred_check
      _
    $region10: #{conv_block1_forward.2} parent=5 // pred_check_branch
      %138 = sbr.rel (%p135) target = $region12
    $region11: #{conv_block1_forward.2} parent=5 // pred_region
      %s139 = ssub.s32 %s10, 1
      // Predicated region
      $region13: #{conv_block1_forward.2} parent=11 // pred_check
        %p140 = pneg %p57
      $region14: #{conv_block1_forward.2} parent=11 // pred_check_branch
        %142 = sbr.rel (%p140) target = $region16
      $region15: #{conv_block1_forward.2} parent=11 // pred_region
        _
      $region16: #{conv_block1_forward.2} parent=11 // pred_fallthru
        _
      // Predicated region
      $region17: #{conv_block1_forward.2} parent=11 // pred_check
        %p143 = pneg %p78
      $region18: #{conv_block1_forward.2} parent=11 // pred_check_branch
        %145 = sbr.rel (%p143) target = $region20
      $region19: #{conv_block1_forward.2} parent=11 // pred_region
        _
      $region20: #{conv_block1_forward.2} parent=11 // pred_fallthru
        _
      // Predicated region
      $region21: #{conv_block1_forward.2} parent=11 // pred_check
        %p146 = pneg %p99
      $region22: #{conv_block1_forward.2} parent=11 // pred_check_branch
        %148 = sbr.rel (%p146) target = $region24
      $region23: #{conv_block1_forward.2} parent=11 // pred_region
        _
      $region24: #{conv_block1_forward.2} parent=11 // pred_fallthru
        _
    $region12: #{conv_block1_forward.2} parent=5 // pred_fallthru
      _
    %p149 = scmp.lt.s32.totalorder %s10, 2
    // Predicated region
    $region25: #{conv_block1_forward.2} parent=5 // pred_check
      %p150 = pneg %p149
    $region26: #{conv_block1_forward.2} parent=5 // pred_check_branch
      %152 = sbr.rel (%p150) target = $region28
    $region27: #{conv_block1_forward.2} parent=5 // pred_region
      // Predicated region
      $region29: #{conv_block1_forward.2} parent=27 // pred_check
        %p153 = pneg %p30
      $region30: #{conv_block1_forward.2} parent=27 // pred_check_branch
        %155 = sbr.rel (%p153) target = $region32
      $region31: #{conv_block1_forward.2} parent=27 // pred_region
        %p156 = scmp.lt.s32.totalorder %s10, 1
        %s157 = scalar_select %p156, %s10, 1
        %s158 = smul.addr %s157, 3
        %s159 = smul.addr %s158, 4
        %s160 = scalar_lea.vmem %s0, %s159
      $region32: #{conv_block1_forward.2} parent=27 // pred_fallthru
        _
    $region28: #{conv_block1_forward.2} parent=5 // pred_fallthru
      _
    %p161 = scmp.le.s32.totalorder 1, %s10
    %p162 = scmp.lt.s32.totalorder %s10, 3
    %p163 = pnand %p161, %p162
    %p164 = pneg %p163
    // Predicated region
    $region33: #{conv_block1_forward.2} parent=5 // pred_check
      _
    $region34: #{conv_block1_forward.2} parent=5 // pred_check_branch
      %166 = sbr.rel (%p163) target = $region36
    $region35: #{conv_block1_forward.2} parent=5 // pred_region
      %s167 = ssub.s32 %s10, 1
      %p168 = scmp.lt.s32.totalorder %s15, 1
      %s169 = scalar_select %p168, %s15, 1
      %s170 = smul.addr %s169, 3
      %s171 = smul.addr %s170, 4
      %s172 = scalar_lea.vmem %s0, %s171
      %p173 = pneg %p36
      %p174 = pneg %p33
      %p175 = pneg %p57
      %p176 = pneg %p54
      %p177 = pneg %p78
      %p178 = pneg %p75
      %p179 = pneg %p99
      %p180 = pneg %p96
      %p181 = pneg %p125
      %p182 = pneg %p122
      %p183 = scmp.lt.s32.totalorder %s15, 1
      %s184 = scalar_select %p183, %s15, 1
      %s185 = smul.addr %s184, 8
      %s186 = scalar_lea.vmem %s4, %s185
      %p187 = scmp.lt.s32.totalorder %s15, 1
      %s188 = scalar_select %p187, %s15, 1
      %s189 = smul.addr %s188, 3
      %s190 = smul.addr %s189, 4
      %s191 = scalar_lea.vmem %s0, %s190
      %p192 = scmp.lt.s32.totalorder %s15, 1
      %s193 = scalar_select %p192, %s15, 1
      %s194 = smul.addr %s193, 8
      %s195 = scalar_lea.vmem %s4, %s194
      %v196 = vld [vmem:[%s1] sm:$0xff]
      %v197 = vld [vmem:[%s191] sm:$0xff]
      %v198 = vld [vmem:[%s191 + $0x8] sm:$0xf]
      %s199 = scalar_lea.vmem %s1, 8
      %v200 = vld [vmem:[%s199] sm:$0xff]
      %v203 = vcombine.high %v197, %v197
      %204 = vrot.lane.b32.xlu0 %v197, 127
      %v205 = vpop.permute.xlu0 %204
      %206 = vrot.lane.b32.xlu0 %v203, 127
      %v207 = vpop.permute.xlu0 %206
      %208 = vrot.lane.b32.xlu0 %v198, 127
      %v209 = vpop.permute.xlu0 %208
      %vm210 = vcmask 1039360
      %v211 = vsel %vm210, %v205, %v207
      %v212 = vsel %vm210, %v207, %v209
      %vm213 = vcmask 31744
      %v215 = vsel %vm213, %v200, 0
      %vm217 = vcmask 1043456
      %v218 = vsel %vm217, %v211, 0
      %v220 = vsel %vm217, %v212, 0
      %v222 = vsel %vm217, %v209, 0
      %224 = vmatprep.subr.mxu0 %v220
      %225 = vmatpush1.msra.mxu0 %v218
      %226 = vmatprep.subr.mxu0 0.0
      %227 = vmatpush1.msra.mxu0 0.0
      %228 = vmatprep.subr.mxu0 0.0
      %229 = vmatpush1.msra.mxu0 0.0
      %230 = vmatprep.subr.mxu0 0.0
      %231 = vmatpush1.msra.mxu0 0.0
      %232 = vmatprep.subr.mxu0 0.0
      %233 = vmatpush1.msra.mxu0 0.0
      %234 = vmatprep.subr.mxu0 0.0
      %235 = vmatpush1.msra.mxu0 0.0
      %236 = vmatprep.subr.mxu0 0.0
      %237 = vmatpush1.msra.mxu0 0.0
      %238 = vmatprep.subr.mxu0 0.0
      %239 = vmatpush1.msra.mxu0 0.0
      %240 = vmatprep.subr.mxu0 0.0
      %241 = vmatpush1.msra.mxu0 0.0
      %242 = vmatprep.subr.mxu0 0.0
      %243 = vmatpush1.msra.mxu0 0.0
      %244 = vmatprep.subr.mxu0 0.0
      %245 = vmatpush1.msra.mxu0 0.0
      %246 = vmatprep.subr.mxu0 0.0
      %247 = vmatpush1.msra.mxu0 0.0
      %248 = vmatprep.subr.mxu0 0.0
      %249 = vmatpush1.msra.mxu0 0.0
      %250 = vmatprep.subr.mxu0 0.0
      %251 = vmatpush1.msra.mxu0 0.0
      %252 = vmatprep.subr.mxu0 0.0
      %253 = vmatpush1.msra.mxu0 0.0
      %254 = vmatprep.subr.mxu0 0.0
      %255 = vmatpush1.msra.mxu0 0.0
      %256 = vmatprep.subr.mxu0 0.0
      %257 = vmatpush1.msra.mxu0 0.0
      %258 = vmatprep.subr.mxu0 0.0
      %259 = vmatpush1.msra.mxu0 0.0
      %260 = vmatprep.subr.mxu0 0.0
      %261 = vmatpush1.msra.mxu0 0.0
      %262 = vmatprep.subr.mxu0 0.0
      %263 = vmatpush1.msra.mxu0 0.0
      %264 = vmatprep.subr.mxu0 0.0
      %265 = vmatpush1.msra.mxu0 0.0
      %266 = vmatprep.subr.mxu0 0.0
      %267 = vmatpush1.msra.mxu0 0.0
      %268 = vmatprep.subr.mxu0 0.0
      %269 = vmatpush1.msra.mxu0 0.0
      %270 = vmatprep.subr.mxu0 0.0
      %271 = vmatpush1.msra.mxu0 0.0
      %272 = vmatprep.subr.mxu0 0.0
      %273 = vmatpush1.msra.mxu0 0.0
      %274 = vmatprep.subr.mxu0 0.0
      %275 = vmatpush1.msra.mxu0 0.0
      %276 = vmatprep.subr.mxu0 0.0
      %277 = vmatpush1.msra.mxu0 0.0
      %278 = vmatprep.subr.mxu0 0.0
      %279 = vmatpush1.msra.mxu0 0.0
      %280 = vmatprep.subr.mxu0 0.0
      %281 = vmatpush1.msra.mxu0 0.0
      %282 = vmatprep.subr.mxu0 0.0
      %283 = vmatpush1.msra.mxu0 0.0
      %284 = vmatprep.subr.mxu0 0.0
      %285 = vmatpush1.msra.mxu0 0.0
      %286 = vmatprep.subr.mxu0 0.0
      %287 = vmatpush1.msra.mxu0 0.0
      %288 = vmatprep.mubr.f32.mxu0 0.0
      %289 = vmatmul.mubr.f32.gmra.mrb[0].mxu0 %v215
      %v290 = vpop.f32.mrb[0].mxu0
      %v291 = vadd.f32 0.0, %v290
      %v292 = vpop.f32.mrb[0].mxu0
      %v293 = vadd.f32 0.0, %v292
      %294 = vdwg.mxu0
      %295 = vmatprep.subr.mxu0 0.0
      %296 = vmatpush1.msra.mxu0 %v222
      %297 = vmatprep.subr.mxu0 0.0
      %298 = vmatpush1.msra.mxu0 0.0
      %299 = vmatprep.subr.mxu0 0.0
      %300 = vmatpush1.msra.mxu0 0.0
      %301 = vmatprep.subr.mxu0 0.0
      %302 = vmatpush1.msra.mxu0 0.0
      %303 = vmatprep.subr.mxu0 0.0
      %304 = vmatpush1.msra.mxu0 0.0
      %305 = vmatprep.subr.mxu0 0.0
      %306 = vmatpush1.msra.mxu0 0.0
      %307 = vmatprep.subr.mxu0 0.0
      %308 = vmatpush1.msra.mxu0 0.0
      %309 = vmatprep.subr.mxu0 0.0
      %310 = vmatpush1.msra.mxu0 0.0
      %311 = vmatprep.subr.mxu0 0.0
      %312 = vmatpush1.msra.mxu0 0.0
      %313 = vmatprep.subr.mxu0 0.0
      %314 = vmatpush1.msra.mxu0 0.0
      %315 = vmatprep.subr.mxu0 0.0
      %316 = vmatpush1.msra.mxu0 0.0
      %317 = vmatprep.subr.mxu0 0.0
      %318 = vmatpush1.msra.mxu0 0.0
      %319 = vmatprep.subr.mxu0 0.0
      %320 = vmatpush1.msra.mxu0 0.0
      %321 = vmatprep.subr.mxu0 0.0
      %322 = vmatpush1.msra.mxu0 0.0
      %323 = vmatprep.subr.mxu0 0.0
      %324 = vmatpush1.msra.mxu0 0.0
      %325 = vmatprep.subr.mxu0 0.0
      %326 = vmatpush1.msra.mxu0 0.0
      %327 = vmatprep.subr.mxu0 0.0
      %328 = vmatpush1.msra.mxu0 0.0
      %329 = vmatprep.subr.mxu0 0.0
      %330 = vmatpush1.msra.mxu0 0.0
      %331 = vmatprep.subr.mxu0 0.0
      %332 = vmatpush1.msra.mxu0 0.0
      %333 = vmatprep.subr.mxu0 0.0
      %334 = vmatpush1.msra.mxu0 0.0
      %335 = vmatprep.subr.mxu0 0.0
      %336 = vmatpush1.msra.mxu0 0.0
      %337 = vmatprep.subr.mxu0 0.0
      %338 = vmatpush1.msra.mxu0 0.0
      %339 = vmatprep.subr.mxu0 0.0
      %340 = vmatpush1.msra.mxu0 0.0
      %341 = vmatprep.subr.mxu0 0.0
      %342 = vmatpush1.msra.mxu0 0.0
      %343 = vmatprep.subr.mxu0 0.0
      %344 = vmatpush1.msra.mxu0 0.0
      %345 = vmatprep.subr.mxu0 0.0
      %346 = vmatpush1.msra.mxu0 0.0
      %347 = vmatprep.subr.mxu0 0.0
      %348 = vmatpush1.msra.mxu0 0.0
      %349 = vmatprep.subr.mxu0 0.0
      %350 = vmatpush1.msra.mxu0 0.0
      %351 = vmatprep.subr.mxu0 0.0
      %352 = vmatpush1.msra.mxu0 0.0
      %353 = vmatprep.subr.mxu0 0.0
      %354 = vmatpush1.msra.mxu0 0.0
      %355 = vmatprep.subr.mxu0 0.0
      %356 = vmatpush1.msra.mxu0 0.0
      %357 = vmatprep.subr.mxu0 0.0
      %358 = vmatpush1.msra.mxu0 0.0
      %359 = vmatprep.mubr.f32.mxu0 0.0
      %360 = vmatmul.mubr.f32.gmra.mrb[0].mxu0 %v215
      %v361 = vpop.f32.mrb[0].mxu0
      %v362 = vadd.f32 0.0, %v361
      %v363 = vpop.f32.mrb[0].mxu0
      %364 = vdwg.mxu0
      %v366 = vsel %vm213, %v196, 0
      %v368 = vsel %vm217, %v197, 0
      %v370 = vsel %vm217, %v203, 0
      %v372 = vsel %vm217, %v198, 0
      %374 = vmatprep.subr.mxu0 %v370
      %375 = vmatpush1.msra.mxu0 %v368
      %376 = vmatprep.subr.mxu0 0.0
      %377 = vmatpush1.msra.mxu0 0.0
      %378 = vmatprep.subr.mxu0 0.0
      %379 = vmatpush1.msra.mxu0 0.0
      %380 = vmatprep.subr.mxu0 0.0
      %381 = vmatpush1.msra.mxu0 0.0
      %382 = vmatprep.subr.mxu0 0.0
      %383 = vmatpush1.msra.mxu0 0.0
      %384 = vmatprep.subr.mxu0 0.0
      %385 = vmatpush1.msra.mxu0 0.0
      %386 = vmatprep.subr.mxu0 0.0
      %387 = vmatpush1.msra.mxu0 0.0
      %388 = vmatprep.subr.mxu0 0.0
      %389 = vmatpush1.msra.mxu0 0.0
      %390 = vmatprep.subr.mxu0 0.0
      %391 = vmatpush1.msra.mxu0 0.0
      %392 = vmatprep.subr.mxu0 0.0
      %393 = vmatpush1.msra.mxu0 0.0
      %394 = vmatprep.subr.mxu0 0.0
      %395 = vmatpush1.msra.mxu0 0.0
      %396 = vmatprep.subr.mxu0 0.0
      %397 = vmatpush1.msra.mxu0 0.0
      %398 = vmatprep.subr.mxu0 0.0
      %399 = vmatpush1.msra.mxu0 0.0
      %400 = vmatprep.subr.mxu0 0.0
      %401 = vmatpush1.msra.mxu0 0.0
      %402 = vmatprep.subr.mxu0 0.0
      %403 = vmatpush1.msra.mxu0 0.0
      %404 = vmatprep.subr.mxu0 0.0
      %405 = vmatpush1.msra.mxu0 0.0
      %406 = vmatprep.subr.mxu0 0.0
      %407 = vmatpush1.msra.mxu0 0.0
      %408 = vmatprep.subr.mxu0 0.0
      %409 = vmatpush1.msra.mxu0 0.0
      %410 = vmatprep.subr.mxu0 0.0
      %411 = vmatpush1.msra.mxu0 0.0
      %412 = vmatprep.subr.mxu0 0.0
      %413 = vmatpush1.msra.mxu0 0.0
      %414 = vmatprep.subr.mxu0 0.0
      %415 = vmatpush1.msra.mxu0 0.0
      %416 = vmatprep.subr.mxu0 0.0
      %417 = vmatpush1.msra.mxu0 0.0
      %418 = vmatprep.subr.mxu0 0.0
      %419 = vmatpush1.msra.mxu0 0.0
      %420 = vmatprep.subr.mxu0 0.0
      %421 = vmatpush1.msra.mxu0 0.0
      %422 = vmatprep.subr.mxu0 0.0
      %423 = vmatpush1.msra.mxu0 0.0
      %424 = vmatprep.subr.mxu0 0.0
      %425 = vmatpush1.msra.mxu0 0.0
      %426 = vmatprep.subr.mxu0 0.0
      %427 = vmatpush1.msra.mxu0 0.0
      %428 = vmatprep.subr.mxu0 0.0
      %429 = vmatpush1.msra.mxu0 0.0
      %430 = vmatprep.subr.mxu0 0.0
      %431 = vmatpush1.msra.mxu0 0.0
      %432 = vmatprep.subr.mxu0 0.0
      %433 = vmatpush1.msra.mxu0 0.0
      %434 = vmatprep.subr.mxu0 0.0
      %435 = vmatpush1.msra.mxu0 0.0
      %436 = vmatprep.subr.mxu0 0.0
      %437 = vmatpush1.msra.mxu0 0.0
      %438 = vmatprep.mubr.f32.mxu0 0.0
      %439 = vmatmul.mubr.f32.gmra.mrb[0].mxu0 %v366
      %v440 = vpop.f32.mrb[0].mxu0
      %v441 = vadd.f32 %v291, %v440
      %v442 = vpop.f32.mrb[0].mxu0
      %v443 = vadd.f32 %v293, %v442
      %444 = vdwg.mxu0
      %445 = vmatprep.subr.mxu0 0.0
      %446 = vmatpush1.msra.mxu0 %v372
      %447 = vmatprep.subr.mxu0 0.0
      %448 = vmatpush1.msra.mxu0 0.0
      %449 = vmatprep.subr.mxu0 0.0
      %450 = vmatpush1.msra.mxu0 0.0
      %451 = vmatprep.subr.mxu0 0.0
      %452 = vmatpush1.msra.mxu0 0.0
      %453 = vmatprep.subr.mxu0 0.0
      %454 = vmatpush1.msra.mxu0 0.0
      %455 = vmatprep.subr.mxu0 0.0
      %456 = vmatpush1.msra.mxu0 0.0
      %457 = vmatprep.subr.mxu0 0.0
      %458 = vmatpush1.msra.mxu0 0.0
      %459 = vmatprep.subr.mxu0 0.0
      %460 = vmatpush1.msra.mxu0 0.0
      %461 = vmatprep.subr.mxu0 0.0
      %462 = vmatpush1.msra.mxu0 0.0
      %463 = vmatprep.subr.mxu0 0.0
      %464 = vmatpush1.msra.mxu0 0.0
      %465 = vmatprep.subr.mxu0 0.0
      %466 = vmatpush1.msra.mxu0 0.0
      %467 = vmatprep.subr.mxu0 0.0
      %468 = vmatpush1.msra.mxu0 0.0
      %469 = vmatprep.subr.mxu0 0.0
      %470 = vmatpush1.msra.mxu0 0.0
      %471 = vmatprep.subr.mxu0 0.0
      %472 = vmatpush1.msra.mxu0 0.0
      %473 = vmatprep.subr.mxu0 0.0
      %474 = vmatpush1.msra.mxu0 0.0
      %475 = vmatprep.subr.mxu0 0.0
      %476 = vmatpush1.msra.mxu0 0.0
      %477 = vmatprep.subr.mxu0 0.0
      %478 = vmatpush1.msra.mxu0 0.0
      %479 = vmatprep.subr.mxu0 0.0
      %480 = vmatpush1.msra.mxu0 0.0
      %481 = vmatprep.subr.mxu0 0.0
      %482 = vmatpush1.msra.mxu0 0.0
      %483 = vmatprep.subr.mxu0 0.0
      %484 = vmatpush1.msra.mxu0 0.0
      %485 = vmatprep.subr.mxu0 0.0
      %486 = vmatpush1.msra.mxu0 0.0
      %487 = vmatprep.subr.mxu0 0.0
      %488 = vmatpush1.msra.mxu0 0.0
      %489 = vmatprep.subr.mxu0 0.0
      %490 = vmatpush1.msra.mxu0 0.0
      %491 = vmatprep.subr.mxu0 0.0
      %492 = vmatpush1.msra.mxu0 0.0
      %493 = vmatprep.subr.mxu0 0.0
      %494 = vmatpush1.msra.mxu0 0.0
      %495 = vmatprep.subr.mxu0 0.0
      %496 = vmatpush1.msra.mxu0 0.0
      %497 = vmatprep.subr.mxu0 0.0
      %498 = vmatpush1.msra.mxu0 0.0
      %499 = vmatprep.subr.mxu0 0.0
      %500 = vmatpush1.msra.mxu0 0.0
      %501 = vmatprep.subr.mxu0 0.0
      %502 = vmatpush1.msra.mxu0 0.0
      %503 = vmatprep.subr.mxu0 0.0
      %504 = vmatpush1.msra.mxu0 0.0
      %505 = vmatprep.subr.mxu0 0.0
      %506 = vmatpush1.msra.mxu0 0.0
      %507 = vmatprep.subr.mxu0 0.0
      %508 = vmatpush1.msra.mxu0 0.0
      %509 = vmatprep.mubr.f32.mxu0 0.0
      %510 = vmatmul.mubr.f32.gmra.mrb[0].mxu0 %v366
      %v511 = vpop.f32.mrb[0].mxu0
      %v512 = vadd.f32 %v362, %v511
      %v513 = vpop.f32.mrb[0].mxu0
      %514 = vdwg.mxu0
      %s515 = scalar_lea.vmem %s1, 16
      %v516 = vld [vmem:[%s515] sm:$0xff]
      %v517 = vld [vmem:[%s191] sm:$0xff]
      %v518 = vld [vmem:[%s191 + $0x8] sm:$0xf]
      %v521 = vcombine.high %v517, %v517
      %522 = vrot.lane.b32.xlu0 %v517, 126
      %v523 = vpop.permute.xlu0 %522
      %524 = vrot.lane.b32.xlu0 %v521, 126
      %v525 = vpop.permute.xlu0 %524
      %526 = vrot.lane.b32.xlu0 %v518, 126
      %v527 = vpop.permute.xlu0 %526
      %vm528 = vcmask 1031168
      %v529 = vsel %vm528, %v523, %v525
      %v530 = vsel %vm528, %v525, %v527
      %v532 = vsel %vm213, %v516, 0
      %v534 = vsel %vm217, %v529, 0
      %v536 = vsel %vm217, %v530, 0
      %v538 = vsel %vm217, %v527, 0
      %540 = vmatprep.subr.mxu0 %v536
      %541 = vmatpush1.msra.mxu0 %v534
      %542 = vmatprep.subr.mxu0 0.0
      %543 = vmatpush1.msra.mxu0 0.0
      %544 = vmatprep.subr.mxu0 0.0
      %545 = vmatpush1.msra.mxu0 0.0
      %546 = vmatprep.subr.mxu0 0.0
      %547 = vmatpush1.msra.mxu0 0.0
      %548 = vmatprep.subr.mxu0 0.0
      %549 = vmatpush1.msra.mxu0 0.0
      %550 = vmatprep.subr.mxu0 0.0
      %551 = vmatpush1.msra.mxu0 0.0
      %552 = vmatprep.subr.mxu0 0.0
      %553 = vmatpush1.msra.mxu0 0.0
      %554 = vmatprep.subr.mxu0 0.0
      %555 = vmatpush1.msra.mxu0 0.0
      %556 = vmatprep.subr.mxu0 0.0
      %557 = vmatpush1.msra.mxu0 0.0
      %558 = vmatprep.subr.mxu0 0.0
      %559 = vmatpush1.msra.mxu0 0.0
      %560 = vmatprep.subr.mxu0 0.0
      %561 = vmatpush1.msra.mxu0 0.0
      %562 = vmatprep.subr.mxu0 0.0
      %563 = vmatpush1.msra.mxu0 0.0
      %564 = vmatprep.subr.mxu0 0.0
      %565 = vmatpush1.msra.mxu0 0.0
      %566 = vmatprep.subr.mxu0 0.0
      %567 = vmatpush1.msra.mxu0 0.0
      %568 = vmatprep.subr.mxu0 0.0
      %569 = vmatpush1.msra.mxu0 0.0
      %570 = vmatprep.subr.mxu0 0.0
      %571 = vmatpush1.msra.mxu0 0.0
      %572 = vmatprep.subr.mxu0 0.0
      %573 = vmatpush1.msra.mxu0 0.0
      %574 = vmatprep.subr.mxu0 0.0
      %575 = vmatpush1.msra.mxu0 0.0
      %576 = vmatprep.subr.mxu0 0.0
      %577 = vmatpush1.msra.mxu0 0.0
      %578 = vmatprep.subr.mxu0 0.0
      %579 = vmatpush1.msra.mxu0 0.0
      %580 = vmatprep.subr.mxu0 0.0
      %581 = vmatpush1.msra.mxu0 0.0
      %582 = vmatprep.subr.mxu0 0.0
      %583 = vmatpush1.msra.mxu0 0.0
      %584 = vmatprep.subr.mxu0 0.0
      %585 = vmatpush1.msra.mxu0 0.0
      %586 = vmatprep.subr.mxu0 0.0
      %587 = vmatpush1.msra.mxu0 0.0
      %588 = vmatprep.subr.mxu0 0.0
      %589 = vmatpush1.msra.mxu0 0.0
      %590 = vmatprep.subr.mxu0 0.0
      %591 = vmatpush1.msra.mxu0 0.0
      %592 = vmatprep.subr.mxu0 0.0
      %593 = vmatpush1.msra.mxu0 0.0
      %594 = vmatprep.subr.mxu0 0.0
      %595 = vmatpush1.msra.mxu0 0.0
      %596 = vmatprep.subr.mxu0 0.0
      %597 = vmatpush1.msra.mxu0 0.0
      %598 = vmatprep.subr.mxu0 0.0
      %599 = vmatpush1.msra.mxu0 0.0
      %600 = vmatprep.subr.mxu0 0.0
      %601 = vmatpush1.msra.mxu0 0.0
      %602 = vmatprep.subr.mxu0 0.0
      %603 = vmatpush1.msra.mxu0 0.0
      %604 = vmatprep.mubr.f32.mxu0 0.0
      %605 = vmatmul.mubr.f32.gmra.mrb[0].mxu0 %v532
      %v606 = vpop.f32.mrb[0].mxu0
      %v607 = vadd.f32 0.0, %v606
      %v608 = vpop.f32.mrb[0].mxu0
      %v609 = vadd.f32 0.0, %v608
      %610 = vdwg.mxu0
      %611 = vmatprep.subr.mxu0 0.0
      %612 = vmatpush1.msra.mxu0 %v538
      %613 = vmatprep.subr.mxu0 0.0
      %614 = vmatpush1.msra.mxu0 0.0
      %615 = vmatprep.subr.mxu0 0.0
      %616 = vmatpush1.msra.mxu0 0.0
      %617 = vmatprep.subr.mxu0 0.0
      %618 = vmatpush1.msra.mxu0 0.0
      %619 = vmatprep.subr.mxu0 0.0
      %620 = vmatpush1.msra.mxu0 0.0
      %621 = vmatprep.subr.mxu0 0.0
      %622 = vmatpush1.msra.mxu0 0.0
      %623 = vmatprep.subr.mxu0 0.0
      %624 = vmatpush1.msra.mxu0 0.0
      %625 = vmatprep.subr.mxu0 0.0
      %626 = vmatpush1.msra.mxu0 0.0
      %627 = vmatprep.subr.mxu0 0.0
      %628 = vmatpush1.msra.mxu0 0.0
      %629 = vmatprep.subr.mxu0 0.0
      %630 = vmatpush1.msra.mxu0 0.0
      %631 = vmatprep.subr.mxu0 0.0
      %632 = vmatpush1.msra.mxu0 0.0
      %633 = vmatprep.subr.mxu0 0.0
      %634 = vmatpush1.msra.mxu0 0.0
      %635 = vmatprep.subr.mxu0 0.0
      %636 = vmatpush1.msra.mxu0 0.0
      %637 = vmatprep.subr.mxu0 0.0
      %638 = vmatpush1.msra.mxu0 0.0
      %639 = vmatprep.subr.mxu0 0.0
      %640 = vmatpush1.msra.mxu0 0.0
      %641 = vmatprep.subr.mxu0 0.0
      %642 = vmatpush1.msra.mxu0 0.0
      %643 = vmatprep.subr.mxu0 0.0
      %644 = vmatpush1.msra.mxu0 0.0
      %645 = vmatprep.subr.mxu0 0.0
      %646 = vmatpush1.msra.mxu0 0.0
      %647 = vmatprep.subr.mxu0 0.0
      %648 = vmatpush1.msra.mxu0 0.0
      %649 = vmatprep.subr.mxu0 0.0
      %650 = vmatpush1.msra.mxu0 0.0
      %651 = vmatprep.subr.mxu0 0.0
      %652 = vmatpush1.msra.mxu0 0.0
      %653 = vmatprep.subr.mxu0 0.0
      %654 = vmatpush1.msra.mxu0 0.0
      %655 = vmatprep.subr.mxu0 0.0
      %656 = vmatpush1.msra.mxu0 0.0
      %657 = vmatprep.subr.mxu0 0.0
      %658 = vmatpush1.msra.mxu0 0.0
      %659 = vmatprep.subr.mxu0 0.0
      %660 = vmatpush1.msra.mxu0 0.0
      %661 = vmatprep.subr.mxu0 0.0
      %662 = vmatpush1.msra.mxu0 0.0
      %663 = vmatprep.subr.mxu0 0.0
      %664 = vmatpush1.msra.mxu0 0.0
      %665 = vmatprep.subr.mxu0 0.0
      %666 = vmatpush1.msra.mxu0 0.0
      %667 = vmatprep.subr.mxu0 0.0
      %668 = vmatpush1.msra.mxu0 0.0
      %669 = vmatprep.subr.mxu0 0.0
      %670 = vmatpush1.msra.mxu0 0.0
      %671 = vmatprep.subr.mxu0 0.0
      %672 = vmatpush1.msra.mxu0 0.0
      %673 = vmatprep.subr.mxu0 0.0
      %674 = vmatpush1.msra.mxu0 0.0
      %675 = vmatprep.mubr.f32.mxu0 0.0
      %676 = vmatmul.mubr.f32.gmra.mrb[0].mxu0 %v532
      %v677 = vpop.f32.mrb[0].mxu0
      %v678 = vadd.f32 0.0, %v677
      %v679 = vpop.f32.mrb[0].mxu0
      %680 = vdwg.mxu0
      %v681 = vadd.f32 %v441, %v607
      %v682 = vadd.f32 %v443, %v609
      %v683 = vadd.f32 %v512, %v678
      %s684 = scalar_lea.vmem %s1, 24
      %v685 = vld [vmem:[%s684] sm:$0xff]
      %v686 = vld [vmem:[%s191] sm:$0xff]
      %v687 = vld [vmem:[%s191 + $0x8] sm:$0xf]
      %v690 = vcombine.high %v686, %v686
      %691 = vrot.lane.b32.xlu0 %v686, 110
      %v692 = vpop.permute.xlu0 %691
      %693 = vrot.lane.b32.xlu0 %v690, 110
      %v694 = vpop.permute.xlu0 %693
      %695 = vrot.lane.b32.xlu0 %v687, 110
      %v696 = vpop.permute.xlu0 %695
      %vm697 = vcmask 900096
      %v698 = vsel %vm697, %v692, %v694
      %v699 = vsel %vm697, %v694, %v696
      %v701 = vsel %vm213, %v685, 0
      %v703 = vsel %vm217, %v698, 0
      %v705 = vsel %vm217, %v699, 0
      %v707 = vsel %vm217, %v696, 0
      %709 = vmatprep.subr.mxu0 %v705
      %710 = vmatpush1.msra.mxu0 %v703
      %711 = vmatprep.subr.mxu0 0.0
      %712 = vmatpush1.msra.mxu0 0.0
      %713 = vmatprep.subr.mxu0 0.0
      %714 = vmatpush1.msra.mxu0 0.0
      %715 = vmatprep.subr.mxu0 0.0
      %716 = vmatpush1.msra.mxu0 0.0
      %717 = vmatprep.subr.mxu0 0.0
      %718 = vmatpush1.msra.mxu0 0.0
      %719 = vmatprep.subr.mxu0 0.0
      %720 = vmatpush1.msra.mxu0 0.0
      %721 = vmatprep.subr.mxu0 0.0
      %722 = vmatpush1.msra.mxu0 0.0
      %723 = vmatprep.subr.mxu0 0.0
      %724 = vmatpush1.msra.mxu0 0.0
      %725 = vmatprep.subr.mxu0 0.0
      %726 = vmatpush1.msra.mxu0 0.0
      %727 = vmatprep.subr.mxu0 0.0
      %728 = vmatpush1.msra.mxu0 0.0
      %729 = vmatprep.subr.mxu0 0.0
      %730 = vmatpush1.msra.mxu0 0.0
      %731 = vmatprep.subr.mxu0 0.0
      %732 = vmatpush1.msra.mxu0 0.0
      %733 = vmatprep.subr.mxu0 0.0
      %734 = vmatpush1.msra.mxu0 0.0
      %735 = vmatprep.subr.mxu0 0.0
      %736 = vmatpush1.msra.mxu0 0.0
      %737 = vmatprep.subr.mxu0 0.0
      %738 = vmatpush1.msra.mxu0 0.0
      %739 = vmatprep.subr.mxu0 0.0
      %740 = vmatpush1.msra.mxu0 0.0
      %741 = vmatprep.subr.mxu0 0.0
      %742 = vmatpush1.msra.mxu0 0.0
      %743 = vmatprep.subr.mxu0 0.0
      %744 = vmatpush1.msra.mxu0 0.0
      %745 = vmatprep.subr.mxu0 0.0
      %746 = vmatpush1.msra.mxu0 0.0
      %747 = vmatprep.subr.mxu0 0.0
      %748 = vmatpush1.msra.mxu0 0.0
      %749 = vmatprep.subr.mxu0 0.0
      %750 = vmatpush1.msra.mxu0 0.0
      %751 = vmatprep.subr.mxu0 0.0
      %752 = vmatpush1.msra.mxu0 0.0
      %753 = vmatprep.subr.mxu0 0.0
      %754 = vmatpush1.msra.mxu0 0.0
      %755 = vmatprep.subr.mxu0 0.0
      %756 = vmatpush1.msra.mxu0 0.0
      %757 = vmatprep.subr.mxu0 0.0
      %758 = vmatpush1.msra.mxu0 0.0
      %759 = vmatprep.subr.mxu0 0.0
      %760 = vmatpush1.msra.mxu0 0.0
      %761 = vmatprep.subr.mxu0 0.0
      %762 = vmatpush1.msra.mxu0 0.0
      %763 = vmatprep.subr.mxu0 0.0
      %764 = vmatpush1.msra.mxu0 0.0
      %765 = vmatprep.subr.mxu0 0.0
      %766 = vmatpush1.msra.mxu0 0.0
      %767 = vmatprep.subr.mxu0 0.0
      %768 = vmatpush1.msra.mxu0 0.0
      %769 = vmatprep.subr.mxu0 0.0
      %770 = vmatpush1.msra.mxu0 0.0
      %771 = vmatprep.subr.mxu0 0.0
      %772 = vmatpush1.msra.mxu0 0.0
      %773 = vmatprep.mubr.f32.mxu0 0.0
      %774 = vmatmul.mubr.f32.gmra.mrb[0].mxu0 %v701
      %v775 = vpop.f32.mrb[0].mxu0
      %v776 = vadd.f32 0.0, %v775
      %v777 = vpop.f32.mrb[0].mxu0
      %v778 = vadd.f32 0.0, %v777
      %779 = vdwg.mxu0
      %780 = vmatprep.subr.mxu0 0.0
      %781 = vmatpush1.msra.mxu0 %v707
      %782 = vmatprep.subr.mxu0 0.0
      %783 = vmatpush1.msra.mxu0 0.0
      %784 = vmatprep.subr.mxu0 0.0
      %785 = vmatpush1.msra.mxu0 0.0
      %786 = vmatprep.subr.mxu0 0.0
      %787 = vmatpush1.msra.mxu0 0.0
      %788 = vmatprep.subr.mxu0 0.0
      %789 = vmatpush1.msra.mxu0 0.0
      %790 = vmatprep.subr.mxu0 0.0
      %791 = vmatpush1.msra.mxu0 0.0
      %792 = vmatprep.subr.mxu0 0.0
      %793 = vmatpush1.msra.mxu0 0.0
      %794 = vmatprep.subr.mxu0 0.0
      %795 = vmatpush1.msra.mxu0 0.0
      %796 = vmatprep.subr.mxu0 0.0
      %797 = vmatpush1.msra.mxu0 0.0
      %798 = vmatprep.subr.mxu0 0.0
      %799 = vmatpush1.msra.mxu0 0.0
      %800 = vmatprep.subr.mxu0 0.0
      %801 = vmatpush1.msra.mxu0 0.0
      %802 = vmatprep.subr.mxu0 0.0
      %803 = vmatpush1.msra.mxu0 0.0
      %804 = vmatprep.subr.mxu0 0.0
      %805 = vmatpush1.msra.mxu0 0.0
      %806 = vmatprep.subr.mxu0 0.0
      %807 = vmatpush1.msra.mxu0 0.0
      %808 = vmatprep.subr.mxu0 0.0
      %809 = vmatpush1.msra.mxu0 0.0
      %810 = vmatprep.subr.mxu0 0.0
      %811 = vmatpush1.msra.mxu0 0.0
      %812 = vmatprep.subr.mxu0 0.0
      %813 = vmatpush1.msra.mxu0 0.0
      %814 = vmatprep.subr.mxu0 0.0
      %815 = vmatpush1.msra.mxu0 0.0
      %816 = vmatprep.subr.mxu0 0.0
      %817 = vmatpush1.msra.mxu0 0.0
      %818 = vmatprep.subr.mxu0 0.0
      %819 = vmatpush1.msra.mxu0 0.0
      %820 = vmatprep.subr.mxu0 0.0
      %821 = vmatpush1.msra.mxu0 0.0
      %822 = vmatprep.subr.mxu0 0.0
      %823 = vmatpush1.msra.mxu0 0.0
      %824 = vmatprep.subr.mxu0 0.0
      %825 = vmatpush1.msra.mxu0 0.0
      %826 = vmatprep.subr.mxu0 0.0
      %827 = vmatpush1.msra.mxu0 0.0
      %828 = vmatprep.subr.mxu0 0.0
      %829 = vmatpush1.msra.mxu0 0.0
      %830 = vmatprep.subr.mxu0 0.0
      %831 = vmatpush1.msra.mxu0 0.0
      %832 = vmatprep.subr.mxu0 0.0
      %833 = vmatpush1.msra.mxu0 0.0
      %834 = vmatprep.subr.mxu0 0.0
      %835 = vmatpush1.msra.mxu0 0.0
      %836 = vmatprep.subr.mxu0 0.0
      %837 = vmatpush1.msra.mxu0 0.0
      %838 = vmatprep.subr.mxu0 0.0
      %839 = vmatpush1.msra.mxu0 0.0
      %840 = vmatprep.subr.mxu0 0.0
      %841 = vmatpush1.msra.mxu0 0.0
      %842 = vmatprep.subr.mxu0 0.0
      %843 = vmatpush1.msra.mxu0 0.0
      %844 = vmatprep.mubr.f32.mxu0 0.0
      %845 = vmatmul.mubr.f32.gmra.mrb[0].mxu0 %v701
      %v846 = vpop.f32.mrb[0].mxu0
      %v847 = vadd.f32 0.0, %v846
      %v848 = vpop.f32.mrb[0].mxu0
      %849 = vdwg.mxu0
      %v850 = vadd.f32 %v681, %v776
      %v851 = vadd.f32 %v682, %v778
      %v852 = vadd.f32 %v683, %v847
      %s853 = scalar_lea.vmem %s1, 32
      %v854 = vld [vmem:[%s853] sm:$0xff]
      %v855 = vld [vmem:[%s191] sm:$0xff]
      %v856 = vld [vmem:[%s191 + $0x8] sm:$0xf]
      %v859 = vcombine.high %v855, %v855
      %860 = vrot.lane.b32.xlu0 %v855, 109
      %v861 = vpop.permute.xlu0 %860
      %862 = vrot.lane.b32.xlu0 %v859, 109
      %v863 = vpop.permute.xlu0 %862
      %864 = vrot.lane.b32.xlu0 %v856, 109
      %v865 = vpop.permute.xlu0 %864
      %vm866 = vcmask 891904
      %v867 = vsel %vm866, %v861, %v863
      %v868 = vsel %vm866, %v863, %v865
      %v870 = vsel %vm213, %v854, 0
      %v872 = vsel %vm217, %v867, 0
      %v874 = vsel %vm217, %v868, 0
      %v876 = vsel %vm217, %v865, 0
      %878 = vmatprep.subr.mxu0 %v874
      %879 = vmatpush1.msra.mxu0 %v872
      %880 = vmatprep.subr.mxu0 0.0
      %881 = vmatpush1.msra.mxu0 0.0
      %882 = vmatprep.subr.mxu0 0.0
      %883 = vmatpush1.msra.mxu0 0.0
      %884 = vmatprep.subr.mxu0 0.0
      %885 = vmatpush1.msra.mxu0 0.0
      %886 = vmatprep.subr.mxu0 0.0
      %887 = vmatpush1.msra.mxu0 0.0
      %888 = vmatprep.subr.mxu0 0.0
      %889 = vmatpush1.msra.mxu0 0.0
      %890 = vmatprep.subr.mxu0 0.0
      %891 = vmatpush1.msra.mxu0 0.0
      %892 = vmatprep.subr.mxu0 0.0
      %893 = vmatpush1.msra.mxu0 0.0
      %894 = vmatprep.subr.mxu0 0.0
      %895 = vmatpush1.msra.mxu0 0.0
      %896 = vmatprep.subr.mxu0 0.0
      %897 = vmatpush1.msra.mxu0 0.0
      %898 = vmatprep.subr.mxu0 0.0
      %899 = vmatpush1.msra.mxu0 0.0
      %900 = vmatprep.subr.mxu0 0.0
      %901 = vmatpush1.msra.mxu0 0.0
      %902 = vmatprep.subr.mxu0 0.0
      %903 = vmatpush1.msra.mxu0 0.0
      %904 = vmatprep.subr.mxu0 0.0
      %905 = vmatpush1.msra.mxu0 0.0
      %906 = vmatprep.subr.mxu0 0.0
      %907 = vmatpush1.msra.mxu0 0.0
      %908 = vmatprep.subr.mxu0 0.0
      %909 = vmatpush1.msra.mxu0 0.0
      %910 = vmatprep.subr.mxu0 0.0
      %911 = vmatpush1.msra.mxu0 0.0
      %912 = vmatprep.subr.mxu0 0.0
      %913 = vmatpush1.msra.mxu0 0.0
      %914 = vmatprep.subr.mxu0 0.0
      %915 = vmatpush1.msra.mxu0 0.0
      %916 = vmatprep.subr.mxu0 0.0
      %917 = vmatpush1.msra.mxu0 0.0
      %918 = vmatprep.subr.mxu0 0.0
      %919 = vmatpush1.msra.mxu0 0.0
      %920 = vmatprep.subr.mxu0 0.0
      %921 = vmatpush1.msra.mxu0 0.0
      %922 = vmatprep.subr.mxu0 0.0
      %923 = vmatpush1.msra.mxu0 0.0
      %924 = vmatprep.subr.mxu0 0.0
      %925 = vmatpush1.msra.mxu0 0.0
      %926 = vmatprep.subr.mxu0 0.0
      %927 = vmatpush1.msra.mxu0 0.0
      %928 = vmatprep.subr.mxu0 0.0
      %929 = vmatpush1.msra.mxu0 0.0
      %930 = vmatprep.subr.mxu0 0.0
      %931 = vmatpush1.msra.mxu0 0.0
      %932 = vmatprep.subr.mxu0 0.0
      %933 = vmatpush1.msra.mxu0 0.0
      %934 = vmatprep.subr.mxu0 0.0
      %935 = vmatpush1.msra.mxu0 0.0
      %936 = vmatprep.subr.mxu0 0.0
      %937 = vmatpush1.msra.mxu0 0.0
      %938 = vmatprep.subr.mxu0 0.0
      %939 = vmatpush1.msra.mxu0 0.0
      %940 = vmatprep.subr.mxu0 0.0
      %941 = vmatpush1.msra.mxu0 0.0
      %942 = vmatprep.mubr.f32.mxu0 0.0
      %943 = vmatmul.mubr.f32.gmra.mrb[0].mxu0 %v870
      %v944 = vpop.f32.mrb[0].mxu0
      %v945 = vadd.f32 0.0, %v944
      %v946 = vpop.f32.mrb[0].mxu0
      %v947 = vadd.f32 0.0, %v946
      %948 = vdwg.mxu0
      %949 = vmatprep.subr.mxu0 0.0
      %950 = vmatpush1.msra.mxu0 %v876
      %951 = vmatprep.subr.mxu0 0.0
      %952 = vmatpush1.msra.mxu0 0.0
      %953 = vmatprep.subr.mxu0 0.0
      %954 = vmatpush1.msra.mxu0 0.0
      %955 = vmatprep.subr.mxu0 0.0
      %956 = vmatpush1.msra.mxu0 0.0
      %957 = vmatprep.subr.mxu0 0.0
      %958 = vmatpush1.msra.mxu0 0.0
      %959 = vmatprep.subr.mxu0 0.0
      %960 = vmatpush1.msra.mxu0 0.0
      %961 = vmatprep.subr.mxu0 0.0
      %962 = vmatpush1.msra.mxu0 0.0
      %963 = vmatprep.subr.mxu0 0.0
      %964 = vmatpush1.msra.mxu0 0.0
      %965 = vmatprep.subr.mxu0 0.0
      %966 = vmatpush1.msra.mxu0 0.0
      %967 = vmatprep.subr.mxu0 0.0
      %968 = vmatpush1.msra.mxu0 0.0
      %969 = vmatprep.subr.mxu0 0.0
      %970 = vmatpush1.msra.mxu0 0.0
      %971 = vmatprep.subr.mxu0 0.0
      %972 = vmatpush1.msra.mxu0 0.0
      %973 = vmatprep.subr.mxu0 0.0
      %974 = vmatpush1.msra.mxu0 0.0
      %975 = vmatprep.subr.mxu0 0.0
      %976 = vmatpush1.msra.mxu0 0.0
      %977 = vmatprep.subr.mxu0 0.0
      %978 = vmatpush1.msra.mxu0 0.0
      %979 = vmatprep.subr.mxu0 0.0
      %980 = vmatpush1.msra.mxu0 0.0
      %981 = vmatprep.subr.mxu0 0.0
      %982 = vmatpush1.msra.mxu0 0.0
      %983 = vmatprep.subr.mxu0 0.0
      %984 = vmatpush1.msra.mxu0 0.0
      %985 = vmatprep.subr.mxu0 0.0
      %986 = vmatpush1.msra.mxu0 0.0
      %987 = vmatprep.subr.mxu0 0.0
      %988 = vmatpush1.msra.mxu0 0.0
      %989 = vmatprep.subr.mxu0 0.0
      %990 = vmatpush1.msra.mxu0 0.0
      %991 = vmatprep.subr.mxu0 0.0
      %992 = vmatpush1.msra.mxu0 0.0
      %993 = vmatprep.subr.mxu0 0.0
      %994 = vmatpush1.msra.mxu0 0.0
      %995 = vmatprep.subr.mxu0 0.0
      %996 = vmatpush1.msra.mxu0 0.0
      %997 = vmatprep.subr.mxu0 0.0
      %998 = vmatpush1.msra.mxu0 0.0
      %999 = vmatprep.subr.mxu0 0.0
      %1000 = vmatpush1.msra.mxu0 0.0
      %1001 = vmatprep.subr.mxu0 0.0
      %1002 = vmatpush1.msra.mxu0 0.0
      %1003 = vmatprep.subr.mxu0 0.0
      %1004 = vmatpush1.msra.mxu0 0.0
      %1005 = vmatprep.subr.mxu0 0.0
      %1006 = vmatpush1.msra.mxu0 0.0
      %1007 = vmatprep.subr.mxu0 0.0
      %1008 = vmatpush1.msra.mxu0 0.0
      %1009 = vmatprep.subr.mxu0 0.0
      %1010 = vmatpush1.msra.mxu0 0.0
      %1011 = vmatprep.subr.mxu0 0.0
      %1012 = vmatpush1.msra.mxu0 0.0
      %1013 = vmatprep.mubr.f32.mxu0 0.0
      %1014 = vmatmul.mubr.f32.gmra.mrb[0].mxu0 %v870
      %v1015 = vpop.f32.mrb[0].mxu0
      %v1016 = vadd.f32 0.0, %v1015
      %v1017 = vpop.f32.mrb[0].mxu0
      %1018 = vdwg.mxu0
      %v1019 = vadd.f32 %v850, %v945
      %v1020 = vadd.f32 %v851, %v947
      %v1021 = vadd.f32 %v852, %v1016
      %s1022 = scalar_lea.vmem %s1, 40
      %v1023 = vld [vmem:[%s1022] sm:$0xff]
      %v1024 = vld [vmem:[%s191] sm:$0xff]
      %v1025 = vld [vmem:[%s191 + $0x8] sm:$0xf]
      %v1028 = vcombine.high %v1024, %v1024
      %1029 = vrot.lane.b32.xlu0 %v1024, 108
      %v1030 = vpop.permute.xlu0 %1029
      %1031 = vrot.lane.b32.xlu0 %v1028, 108
      %v1032 = vpop.permute.xlu0 %1031
      %1033 = vrot.lane.b32.xlu0 %v1025, 108
      %v1034 = vpop.permute.xlu0 %1033
      %vm1035 = vcmask 883712
      %v1036 = vsel %vm1035, %v1030, %v1032
      %v1037 = vsel %vm1035, %v1032, %v1034
      %v1039 = vsel %vm213, %v1023, 0
      %v1041 = vsel %vm217, %v1036, 0
      %v1043 = vsel %vm217, %v1037, 0
      %v1045 = vsel %vm217, %v1034, 0
      %1047 = vmatprep.subr.mxu0 %v1043
      %1048 = vmatpush1.msra.mxu0 %v1041
      %1049 = vmatprep.subr.mxu0 0.0
      %1050 = vmatpush1.msra.mxu0 0.0
      %1051 = vmatprep.subr.mxu0 0.0
      %1052 = vmatpush1.msra.mxu0 0.0
      %1053 = vmatprep.subr.mxu0 0.0
      %1054 = vmatpush1.msra.mxu0 0.0
      %1055 = vmatprep.subr.mxu0 0.0
      %1056 = vmatpush1.msra.mxu0 0.0
      %1057 = vmatprep.subr.mxu0 0.0
      %1058 = vmatpush1.msra.mxu0 0.0
      %1059 = vmatprep.subr.mxu0 0.0
      %1060 = vmatpush1.msra.mxu0 0.0
      %1061 = vmatprep.subr.mxu0 0.0
      %1062 = vmatpush1.msra.mxu0 0.0
      %1063 = vmatprep.subr.mxu0 0.0
      %1064 = vmatpush1.msra.mxu0 0.0
      %1065 = vmatprep.subr.mxu0 0.0
      %1066 = vmatpush1.msra.mxu0 0.0
      %1067 = vmatprep.subr.mxu0 0.0
      %1068 = vmatpush1.msra.mxu0 0.0
      %1069 = vmatprep.subr.mxu0 0.0
      %1070 = vmatpush1.msra.mxu0 0.0
      %1071 = vmatprep.subr.mxu0 0.0
      %1072 = vmatpush1.msra.mxu0 0.0
      %1073 = vmatprep.subr.mxu0 0.0
      %1074 = vmatpush1.msra.mxu0 0.0
      %1075 = vmatprep.subr.mxu0 0.0
      %1076 = vmatpush1.msra.mxu0 0.0
      %1077 = vmatprep.subr.mxu0 0.0
      %1078 = vmatpush1.msra.mxu0 0.0
      %1079 = vmatprep.subr.mxu0 0.0
      %1080 = vmatpush1.msra.mxu0 0.0
      %1081 = vmatprep.subr.mxu0 0.0
      %1082 = vmatpush1.msra.mxu0 0.0
      %1083 = vmatprep.subr.mxu0 0.0
      %1084 = vmatpush1.msra.mxu0 0.0
      %1085 = vmatprep.subr.mxu0 0.0
      %1086 = vmatpush1.msra.mxu0 0.0
      %1087 = vmatprep.subr.mxu0 0.0
      %1088 = vmatpush1.msra.mxu0 0.0
      %1089 = vmatprep.subr.mxu0 0.0
      %1090 = vmatpush1.msra.mxu0 0.0
      %1091 = vmatprep.subr.mxu0 0.0
      %1092 = vmatpush1.msra.mxu0 0.0
      %1093 = vmatprep.subr.mxu0 0.0
      %1094 = vmatpush1.msra.mxu0 0.0
      %1095 = vmatprep.subr.mxu0 0.0
      %1096 = vmatpush1.msra.mxu0 0.0
      %1097 = vmatprep.subr.mxu0 0.0
      %1098 = vmatpush1.msra.mxu0 0.0
      %1099 = vmatprep.subr.mxu0 0.0
      %1100 = vmatpush1.msra.mxu0 0.0
      %1101 = vmatprep.subr.mxu0 0.0
      %1102 = vmatpush1.msra.mxu0 0.0
      %1103 = vmatprep.subr.mxu0 0.0
      %1104 = vmatpush1.msra.mxu0 0.0
      %1105 = vmatprep.subr.mxu0 0.0
      %1106 = vmatpush1.msra.mxu0 0.0
      %1107 = vmatprep.subr.mxu0 0.0
      %1108 = vmatpush1.msra.mxu0 0.0
      %1109 = vmatprep.subr.mxu0 0.0
      %1110 = vmatpush1.msra.mxu0 0.0
      %1111 = vmatprep.mubr.f32.mxu0 0.0
      %1112 = vmatmul.mubr.f32.gmra.mrb[0].mxu0 %v1039
      %v1113 = vpop.f32.mrb[0].mxu0
      %v1114 = vadd.f32 0.0, %v1113
      %v1115 = vpop.f32.mrb[0].mxu0
      %v1116 = vadd.f32 0.0, %v1115
      %1117 = vdwg.mxu0
      %1118 = vmatprep.subr.mxu0 0.0
      %1119 = vmatpush1.msra.mxu0 %v1045
      %1120 = vmatprep.subr.mxu0 0.0
      %1121 = vmatpush1.msra.mxu0 0.0
      %1122 = vmatprep.subr.mxu0 0.0
      %1123 = vmatpush1.msra.mxu0 0.0
      %1124 = vmatprep.subr.mxu0 0.0
      %1125 = vmatpush1.msra.mxu0 0.0
      %1126 = vmatprep.subr.mxu0 0.0
      %1127 = vmatpush1.msra.mxu0 0.0
      %1128 = vmatprep.subr.mxu0 0.0
      %1129 = vmatpush1.msra.mxu0 0.0
      %1130 = vmatprep.subr.mxu0 0.0
      %1131 = vmatpush1.msra.mxu0 0.0
      %1132 = vmatprep.subr.mxu0 0.0
      %1133 = vmatpush1.msra.mxu0 0.0
      %1134 = vmatprep.subr.mxu0 0.0
      %1135 = vmatpush1.msra.mxu0 0.0
      %1136 = vmatprep.subr.mxu0 0.0
      %1137 = vmatpush1.msra.mxu0 0.0
      %1138 = vmatprep.subr.mxu0 0.0
      %1139 = vmatpush1.msra.mxu0 0.0
      %1140 = vmatprep.subr.mxu0 0.0
      %1141 = vmatpush1.msra.mxu0 0.0
      %1142 = vmatprep.subr.mxu0 0.0
      %1143 = vmatpush1.msra.mxu0 0.0
      %1144 = vmatprep.subr.mxu0 0.0
      %1145 = vmatpush1.msra.mxu0 0.0
      %1146 = vmatprep.subr.mxu0 0.0
      %1147 = vmatpush1.msra.mxu0 0.0
      %1148 = vmatprep.subr.mxu0 0.0
      %1149 = vmatpush1.msra.mxu0 0.0
      %1150 = vmatprep.subr.mxu0 0.0
      %1151 = vmatpush1.msra.mxu0 0.0
      %1152 = vmatprep.subr.mxu0 0.0
      %1153 = vmatpush1.msra.mxu0 0.0
      %1154 = vmatprep.subr.mxu0 0.0
      %1155 = vmatpush1.msra.mxu0 0.0
      %1156 = vmatprep.subr.mxu0 0.0
      %1157 = vmatpush1.msra.mxu0 0.0
      %1158 = vmatprep.subr.mxu0 0.0
      %1159 = vmatpush1.msra.mxu0 0.0
      %1160 = vmatprep.subr.mxu0 0.0
      %1161 = vmatpush1.msra.mxu0 0.0
      %1162 = vmatprep.subr.mxu0 0.0
      %1163 = vmatpush1.msra.mxu0 0.0
      %1164 = vmatprep.subr.mxu0 0.0
      %1165 = vmatpush1.msra.mxu0 0.0
      %1166 = vmatprep.subr.mxu0 0.0
      %1167 = vmatpush1.msra.mxu0 0.0
      %1168 = vmatprep.subr.mxu0 0.0
      %1169 = vmatpush1.msra.mxu0 0.0
      %1170 = vmatprep.subr.mxu0 0.0
      %1171 = vmatpush1.msra.mxu0 0.0
      %1172 = vmatprep.subr.mxu0 0.0
      %1173 = vmatpush1.msra.mxu0 0.0
      %1174 = vmatprep.subr.mxu0 0.0
      %1175 = vmatpush1.msra.mxu0 0.0
      %1176 = vmatprep.subr.mxu0 0.0
      %1177 = vmatpush1.msra.mxu0 0.0
      %1178 = vmatprep.subr.mxu0 0.0
      %1179 = vmatpush1.msra.mxu0 0.0
      %1180 = vmatprep.subr.mxu0 0.0
      %1181 = vmatpush1.msra.mxu0 0.0
      %1182 = vmatprep.mubr.f32.mxu0 0.0
      %1183 = vmatmul.mubr.f32.gmra.mrb[0].mxu0 %v1039
      %v1184 = vpop.f32.mrb[0].mxu0
      %v1185 = vadd.f32 0.0, %v1184
      %v1186 = vpop.f32.mrb[0].mxu0
      %1187 = vdwg.mxu0
      %v1188 = vadd.f32 %v1019, %v1114
      %v1189 = vadd.f32 %v1020, %v1116
      %v1190 = vadd.f32 %v1021, %v1185
      %s1191 = scalar_lea.vmem %s1, 48
      %v1192 = vld [vmem:[%s1191] sm:$0xff]
      %v1193 = vld [vmem:[%s191] sm:$0xff]
      %v1194 = vld [vmem:[%s191 + $0x8] sm:$0xf]
      %v1197 = vcombine.high %v1193, %v1193
      %1198 = vrot.lane.b32.xlu0 %v1193, 92
      %v1199 = vpop.permute.xlu0 %1198
      %1200 = vrot.lane.b32.xlu0 %v1197, 92
      %v1201 = vpop.permute.xlu0 %1200
      %1202 = vrot.lane.b32.xlu0 %v1194, 92
      %v1203 = vpop.permute.xlu0 %1202
      %vm1204 = vcmask 752640
      %v1205 = vsel %vm1204, %v1199, %v1201
      %v1206 = vsel %vm1204, %v1201, %v1203
      %v1208 = vsel %vm213, %v1192, 0
      %v1210 = vsel %vm217, %v1205, 0
      %v1212 = vsel %vm217, %v1206, 0
      %v1214 = vsel %vm217, %v1203, 0
      %1216 = vmatprep.subr.mxu0 %v1212
      %1217 = vmatpush1.msra.mxu0 %v1210
      %1218 = vmatprep.subr.mxu0 0.0
      %1219 = vmatpush1.msra.mxu0 0.0
      %1220 = vmatprep.subr.mxu0 0.0
      %1221 = vmatpush1.msra.mxu0 0.0
      %1222 = vmatprep.subr.mxu0 0.0
      %1223 = vmatpush1.msra.mxu0 0.0
      %1224 = vmatprep.subr.mxu0 0.0
      %1225 = vmatpush1.msra.mxu0 0.0
      %1226 = vmatprep.subr.mxu0 0.0
      %1227 = vmatpush1.msra.mxu0 0.0
      %1228 = vmatprep.subr.mxu0 0.0
      %1229 = vmatpush1.msra.mxu0 0.0
      %1230 = vmatprep.subr.mxu0 0.0
      %1231 = vmatpush1.msra.mxu0 0.0
      %1232 = vmatprep.subr.mxu0 0.0
      %1233 = vmatpush1.msra.mxu0 0.0
      %1234 = vmatprep.subr.mxu0 0.0
      %1235 = vmatpush1.msra.mxu0 0.0
      %1236 = vmatprep.subr.mxu0 0.0
      %1237 = vmatpush1.msra.mxu0 0.0
      %1238 = vmatprep.subr.mxu0 0.0
      %1239 = vmatpush1.msra.mxu0 0.0
      %1240 = vmatprep.subr.mxu0 0.0
      %1241 = vmatpush1.msra.mxu0 0.0
      %1242 = vmatprep.subr.mxu0 0.0
      %1243 = vmatpush1.msra.mxu0 0.0
      %1244 = vmatprep.subr.mxu0 0.0
      %1245 = vmatpush1.msra.mxu0 0.0
      %1246 = vmatprep.subr.mxu0 0.0
      %1247 = vmatpush1.msra.mxu0 0.0
      %1248 = vmatprep.subr.mxu0 0.0
      %1249 = vmatpush1.msra.mxu0 0.0
      %1250 = vmatprep.subr.mxu0 0.0
      %1251 = vmatpush1.msra.mxu0 0.0
      %1252 = vmatprep.subr.mxu0 0.0
      %1253 = vmatpush1.msra.mxu0 0.0
      %1254 = vmatprep.subr.mxu0 0.0
      %1255 = vmatpush1.msra.mxu0 0.0
      %1256 = vmatprep.subr.mxu0 0.0
      %1257 = vmatpush1.msra.mxu0 0.0
      %1258 = vmatprep.subr.mxu0 0.0
      %1259 = vmatpush1.msra.mxu0 0.0
      %1260 = vmatprep.subr.mxu0 0.0
      %1261 = vmatpush1.msra.mxu0 0.0
      %1262 = vmatprep.subr.mxu0 0.0
      %1263 = vmatpush1.msra.mxu0 0.0
      %1264 = vmatprep.subr.mxu0 0.0
      %1265 = vmatpush1.msra.mxu0 0.0
      %1266 = vmatprep.subr.mxu0 0.0
      %1267 = vmatpush1.msra.mxu0 0.0
      %1268 = vmatprep.subr.mxu0 0.0
      %1269 = vmatpush1.msra.mxu0 0.0
      %1270 = vmatprep.subr.mxu0 0.0
      %1271 = vmatpush1.msra.mxu0 0.0
      %1272 = vmatprep.subr.mxu0 0.0
      %1273 = vmatpush1.msra.mxu0 0.0
      %1274 = vmatprep.subr.mxu0 0.0
      %1275 = vmatpush1.msra.mxu0 0.0
      %1276 = vmatprep.subr.mxu0 0.0
      %1277 = vmatpush1.msra.mxu0 0.0
      %1278 = vmatprep.subr.mxu0 0.0
      %1279 = vmatpush1.msra.mxu0 0.0
      %1280 = vmatprep.mubr.f32.mxu0 0.0
      %1281 = vmatmul.mubr.f32.gmra.mrb[0].mxu0 %v1208
      %v1282 = vpop.f32.mrb[0].mxu0
      %v1283 = vadd.f32 0.0, %v1282
      %v1284 = vpop.f32.mrb[0].mxu0
      %v1285 = vadd.f32 0.0, %v1284
      %1286 = vdwg.mxu0
      %1287 = vmatprep.subr.mxu0 0.0
      %1288 = vmatpush1.msra.mxu0 %v1214
      %1289 = vmatprep.subr.mxu0 0.0
      %1290 = vmatpush1.msra.mxu0 0.0
      %1291 = vmatprep.subr.mxu0 0.0
      %1292 = vmatpush1.msra.mxu0 0.0
      %1293 = vmatprep.subr.mxu0 0.0
      %1294 = vmatpush1.msra.mxu0 0.0
      %1295 = vmatprep.subr.mxu0 0.0
      %1296 = vmatpush1.msra.mxu0 0.0
      %1297 = vmatprep.subr.mxu0 0.0
      %1298 = vmatpush1.msra.mxu0 0.0
      %1299 = vmatprep.subr.mxu0 0.0
      %1300 = vmatpush1.msra.mxu0 0.0
      %1301 = vmatprep.subr.mxu0 0.0
      %1302 = vmatpush1.msra.mxu0 0.0
      %1303 = vmatprep.subr.mxu0 0.0
      %1304 = vmatpush1.msra.mxu0 0.0
      %1305 = vmatprep.subr.mxu0 0.0
      %1306 = vmatpush1.msra.mxu0 0.0
      %1307 = vmatprep.subr.mxu0 0.0
      %1308 = vmatpush1.msra.mxu0 0.0
      %1309 = vmatprep.subr.mxu0 0.0
      %1310 = vmatpush1.msra.mxu0 0.0
      %1311 = vmatprep.subr.mxu0 0.0
      %1312 = vmatpush1.msra.mxu0 0.0
      %1313 = vmatprep.subr.mxu0 0.0
      %1314 = vmatpush1.msra.mxu0 0.0
      %1315 = vmatprep.subr.mxu0 0.0
      %1316 = vmatpush1.msra.mxu0 0.0
      %1317 = vmatprep.subr.mxu0 0.0
      %1318 = vmatpush1.msra.mxu0 0.0
      %1319 = vmatprep.subr.mxu0 0.0
      %1320 = vmatpush1.msra.mxu0 0.0
      %1321 = vmatprep.subr.mxu0 0.0
      %1322 = vmatpush1.msra.mxu0 0.0
      %1323 = vmatprep.subr.mxu0 0.0
      %1324 = vmatpush1.msra.mxu0 0.0
      %1325 = vmatprep.subr.mxu0 0.0
      %1326 = vmatpush1.msra.mxu0 0.0
      %1327 = vmatprep.subr.mxu0 0.0
      %1328 = vmatpush1.msra.mxu0 0.0
      %1329 = vmatprep.subr.mxu0 0.0
      %1330 = vmatpush1.msra.mxu0 0.0
      %1331 = vmatprep.subr.mxu0 0.0
      %1332 = vmatpush1.msra.mxu0 0.0
      %1333 = vmatprep.subr.mxu0 0.0
      %1334 = vmatpush1.msra.mxu0 0.0
      %1335 = vmatprep.subr.mxu0 0.0
      %1336 = vmatpush1.msra.mxu0 0.0
      %1337 = vmatprep.subr.mxu0 0.0
      %1338 = vmatpush1.msra.mxu0 0.0
      %1339 = vmatprep.subr.mxu0 0.0
      %1340 = vmatpush1.msra.mxu0 0.0
      %1341 = vmatprep.subr.mxu0 0.0
      %1342 = vmatpush1.msra.mxu0 0.0
      %1343 = vmatprep.subr.mxu0 0.0
      %1344 = vmatpush1.msra.mxu0 0.0
      %1345 = vmatprep.subr.mxu0 0.0
      %1346 = vmatpush1.msra.mxu0 0.0
      %1347 = vmatprep.subr.mxu0 0.0
      %1348 = vmatpush1.msra.mxu0 0.0
      %1349 = vmatprep.subr.mxu0 0.0
      %1350 = vmatpush1.msra.mxu0 0.0
      %1351 = vmatprep.mubr.f32.mxu0 0.0
      %1352 = vmatmul.mubr.f32.gmra.mrb[0].mxu0 %v1208
      %v1353 = vpop.f32.mrb[0].mxu0
      %v1354 = vadd.f32 0.0, %v1353
      %v1355 = vpop.f32.mrb[0].mxu0
      %1356 = vdwg.mxu0
      %v1357 = vadd.f32 %v1188, %v1283
      %v1358 = vadd.f32 %v1189, %v1285
      %v1359 = vadd.f32 %v1190, %v1354
      %s1360 = scalar_lea.vmem %s1, 56
      %v1361 = vld [vmem:[%s1360] sm:$0xff]
      %v1362 = vld [vmem:[%s191] sm:$0xff]
      %v1363 = vld [vmem:[%s191 + $0x8] sm:$0xf]
      %v1366 = vcombine.high %v1362, %v1362
      %1367 = vrot.lane.b32.xlu0 %v1362, 91
      %v1368 = vpop.permute.xlu0 %1367
      %1369 = vrot.lane.b32.xlu0 %v1366, 91
      %v1370 = vpop.permute.xlu0 %1369
      %1371 = vrot.lane.b32.xlu0 %v1363, 91
      %v1372 = vpop.permute.xlu0 %1371
      %vm1373 = vcmask 744448
      %v1374 = vsel %vm1373, %v1368, %v1370
      %v1375 = vsel %vm1373, %v1370, %v1372
      %v1377 = vsel %vm213, %v1361, 0
      %v1379 = vsel %vm217, %v1374, 0
      %v1381 = vsel %vm217, %v1375, 0
      %v1383 = vsel %vm217, %v1372, 0
      %1385 = vmatprep.subr.mxu0 %v1381
      %1386 = vmatpush1.msra.mxu0 %v1379
      %1387 = vmatprep.subr.mxu0 0.0
      %1388 = vmatpush1.msra.mxu0 0.0
      %1389 = vmatprep.subr.mxu0 0.0
      %1390 = vmatpush1.msra.mxu0 0.0
      %1391 = vmatprep.subr.mxu0 0.0
      %1392 = vmatpush1.msra.mxu0 0.0
      %1393 = vmatprep.subr.mxu0 0.0
      %1394 = vmatpush1.msra.mxu0 0.0
      %1395 = vmatprep.subr.mxu0 0.0
      %1396 = vmatpush1.msra.mxu0 0.0
      %1397 = vmatprep.subr.mxu0 0.0
      %1398 = vmatpush1.msra.mxu0 0.0
      %1399 = vmatprep.subr.mxu0 0.0
      %1400 = vmatpush1.msra.mxu0 0.0
      %1401 = vmatprep.subr.mxu0 0.0
      %1402 = vmatpush1.msra.mxu0 0.0
      %1403 = vmatprep.subr.mxu0 0.0
      %1404 = vmatpush1.msra.mxu0 0.0
      %1405 = vmatprep.subr.mxu0 0.0
      %1406 = vmatpush1.msra.mxu0 0.0
      %1407 = vmatprep.subr.mxu0 0.0
      %1408 = vmatpush1.msra.mxu0 0.0
      %1409 = vmatprep.subr.mxu0 0.0
      %1410 = vmatpush1.msra.mxu0 0.0
      %1411 = vmatprep.subr.mxu0 0.0
      %1412 = vmatpush1.msra.mxu0 0.0
      %1413 = vmatprep.subr.mxu0 0.0
      %1414 = vmatpush1.msra.mxu0 0.0
      %1415 = vmatprep.subr.mxu0 0.0
      %1416 = vmatpush1.msra.mxu0 0.0
      %1417 = vmatprep.subr.mxu0 0.0
      %1418 = vmatpush1.msra.mxu0 0.0
      %1419 = vmatprep.subr.mxu0 0.0
      %1420 = vmatpush1.msra.mxu0 0.0
      %1421 = vmatprep.subr.mxu0 0.0
      %1422 = vmatpush1.msra.mxu0 0.0
      %1423 = vmatprep.subr.mxu0 0.0
      %1424 = vmatpush1.msra.mxu0 0.0
      %1425 = vmatprep.subr.mxu0 0.0
      %1426 = vmatpush1.msra.mxu0 0.0
      %1427 = vmatprep.subr.mxu0 0.0
      %1428 = vmatpush1.msra.mxu0 0.0
      %1429 = vmatprep.subr.mxu0 0.0
      %1430 = vmatpush1.msra.mxu0 0.0
      %1431 = vmatprep.subr.mxu0 0.0
      %1432 = vmatpush1.msra.mxu0 0.0
      %1433 = vmatprep.subr.mxu0 0.0
      %1434 = vmatpush1.msra.mxu0 0.0
      %1435 = vmatprep.subr.mxu0 0.0
      %1436 = vmatpush1.msra.mxu0 0.0
      %1437 = vmatprep.subr.mxu0 0.0
      %1438 = vmatpush1.msra.mxu0 0.0
      %1439 = vmatprep.subr.mxu0 0.0
      %1440 = vmatpush1.msra.mxu0 0.0
      %1441 = vmatprep.subr.mxu0 0.0
      %1442 = vmatpush1.msra.mxu0 0.0
      %1443 = vmatprep.subr.mxu0 0.0
      %1444 = vmatpush1.msra.mxu0 0.0
      %1445 = vmatprep.subr.mxu0 0.0
      %1446 = vmatpush1.msra.mxu0 0.0
      %1447 = vmatprep.subr.mxu0 0.0
      %1448 = vmatpush1.msra.mxu0 0.0
      %1449 = vmatprep.mubr.f32.mxu0 0.0
      %1450 = vmatmul.mubr.f32.gmra.mrb[0].mxu0 %v1377
      %v1451 = vpop.f32.mrb[0].mxu0
      %v1452 = vadd.f32 0.0, %v1451
      %v1453 = vpop.f32.mrb[0].mxu0
      %v1454 = vadd.f32 0.0, %v1453
      %1455 = vdwg.mxu0
      %1456 = vmatprep.subr.mxu0 0.0
      %1457 = vmatpush1.msra.mxu0 %v1383
      %1458 = vmatprep.subr.mxu0 0.0
      %1459 = vmatpush1.msra.mxu0 0.0
      %1460 = vmatprep.subr.mxu0 0.0
      %1461 = vmatpush1.msra.mxu0 0.0
      %1462 = vmatprep.subr.mxu0 0.0
      %1463 = vmatpush1.msra.mxu0 0.0
      %1464 = vmatprep.subr.mxu0 0.0
      %1465 = vmatpush1.msra.mxu0 0.0
      %1466 = vmatprep.subr.mxu0 0.0
      %1467 = vmatpush1.msra.mxu0 0.0
      %1468 = vmatprep.subr.mxu0 0.0
      %1469 = vmatpush1.msra.mxu0 0.0
      %1470 = vmatprep.subr.mxu0 0.0
      %1471 = vmatpush1.msra.mxu0 0.0
      %1472 = vmatprep.subr.mxu0 0.0
      %1473 = vmatpush1.msra.mxu0 0.0
      %1474 = vmatprep.subr.mxu0 0.0
      %1475 = vmatpush1.msra.mxu0 0.0
      %1476 = vmatprep.subr.mxu0 0.0
      %1477 = vmatpush1.msra.mxu0 0.0
      %1478 = vmatprep.subr.mxu0 0.0
      %1479 = vmatpush1.msra.mxu0 0.0
      %1480 = vmatprep.subr.mxu0 0.0
      %1481 = vmatpush1.msra.mxu0 0.0
      %1482 = vmatprep.subr.mxu0 0.0
      %1483 = vmatpush1.msra.mxu0 0.0
      %1484 = vmatprep.subr.mxu0 0.0
      %1485 = vmatpush1.msra.mxu0 0.0
      %1486 = vmatprep.subr.mxu0 0.0
      %1487 = vmatpush1.msra.mxu0 0.0
      %1488 = vmatprep.subr.mxu0 0.0
      %1489 = vmatpush1.msra.mxu0 0.0
      %1490 = vmatprep.subr.mxu0 0.0
      %1491 = vmatpush1.msra.mxu0 0.0
      %1492 = vmatprep.subr.mxu0 0.0
      %1493 = vmatpush1.msra.mxu0 0.0
      %1494 = vmatprep.subr.mxu0 0.0
      %1495 = vmatpush1.msra.mxu0 0.0
      %1496 = vmatprep.subr.mxu0 0.0
      %1497 = vmatpush1.msra.mxu0 0.0
      %1498 = vmatprep.subr.mxu0 0.0
      %1499 = vmatpush1.msra.mxu0 0.0
      %1500 = vmatprep.subr.mxu0 0.0
      %1501 = vmatpush1.msra.mxu0 0.0
      %1502 = vmatprep.subr.mxu0 0.0
      %1503 = vmatpush1.msra.mxu0 0.0
      %1504 = vmatprep.subr.mxu0 0.0
      %1505 = vmatpush1.msra.mxu0 0.0
      %1506 = vmatprep.subr.mxu0 0.0
      %1507 = vmatpush1.msra.mxu0 0.0
      %1508 = vmatprep.subr.mxu0 0.0
      %1509 = vmatpush1.msra.mxu0 0.0
      %1510 = vmatprep.subr.mxu0 0.0
      %1511 = vmatpush1.msra.mxu0 0.0
      %1512 = vmatprep.subr.mxu0 0.0
      %1513 = vmatpush1.msra.mxu0 0.0
      %1514 = vmatprep.subr.mxu0 0.0
      %1515 = vmatpush1.msra.mxu0 0.0
      %1516 = vmatprep.subr.mxu0 0.0
      %1517 = vmatpush1.msra.mxu0 0.0
      %1518 = vmatprep.subr.mxu0 0.0
      %1519 = vmatpush1.msra.mxu0 0.0
      %1520 = vmatprep.mubr.f32.mxu0 0.0
      %1521 = vmatmul.mubr.f32.gmra.mrb[0].mxu0 %v1377
      %v1522 = vpop.f32.mrb[0].mxu0
      %v1523 = vadd.f32 0.0, %v1522
      %v1524 = vpop.f32.mrb[0].mxu0
      %1525 = vdwg.mxu0
      %v1526 = vadd.f32 %v1357, %v1452
      %v1527 = vadd.f32 %v1358, %v1454
      %v1528 = vadd.f32 %v1359, %v1523
      %s1529 = scalar_lea.vmem %s1, 64
      %v1530 = vld [vmem:[%s1529] sm:$0xff]
      %v1531 = vld [vmem:[%s191] sm:$0xff]
      %v1532 = vld [vmem:[%s191 + $0x8] sm:$0xf]
      %v1535 = vcombine.high %v1531, %v1531
      %1536 = vrot.lane.b32.xlu0 %v1531, 90
      %v1537 = vpop.permute.xlu0 %1536
      %1538 = vrot.lane.b32.xlu0 %v1535, 90
      %v1539 = vpop.permute.xlu0 %1538
      %1540 = vrot.lane.b32.xlu0 %v1532, 90
      %v1541 = vpop.permute.xlu0 %1540
      %vm1542 = vcmask 736256
      %v1543 = vsel %vm1542, %v1537, %v1539
      %v1544 = vsel %vm1542, %v1539, %v1541
      %v1546 = vsel %vm213, %v1530, 0
      %v1548 = vsel %vm217, %v1543, 0
      %v1550 = vsel %vm217, %v1544, 0
      %v1552 = vsel %vm217, %v1541, 0
      %1554 = vmatprep.subr.mxu0 %v1550
      %1555 = vmatpush1.msra.mxu0 %v1548
      %1556 = vmatprep.subr.mxu0 0.0
      %1557 = vmatpush1.msra.mxu0 0.0
      %1558 = vmatprep.subr.mxu0 0.0
      %1559 = vmatpush1.msra.mxu0 0.0
      %1560 = vmatprep.subr.mxu0 0.0
      %1561 = vmatpush1.msra.mxu0 0.0
      %1562 = vmatprep.subr.mxu0 0.0
      %1563 = vmatpush1.msra.mxu0 0.0
      %1564 = vmatprep.subr.mxu0 0.0
      %1565 = vmatpush1.msra.mxu0 0.0
      %1566 = vmatprep.subr.mxu0 0.0
      %1567 = vmatpush1.msra.mxu0 0.0
      %1568 = vmatprep.subr.mxu0 0.0
      %1569 = vmatpush1.msra.mxu0 0.0
      %1570 = vmatprep.subr.mxu0 0.0
      %1571 = vmatpush1.msra.mxu0 0.0
      %1572 = vmatprep.subr.mxu0 0.0
      %1573 = vmatpush1.msra.mxu0 0.0
      %1574 = vmatprep.subr.mxu0 0.0
      %1575 = vmatpush1.msra.mxu0 0.0
      %1576 = vmatprep.subr.mxu0 0.0
      %1577 = vmatpush1.msra.mxu0 0.0
      %1578 = vmatprep.subr.mxu0 0.0
      %1579 = vmatpush1.msra.mxu0 0.0
      %1580 = vmatprep.subr.mxu0 0.0
      %1581 = vmatpush1.msra.mxu0 0.0
      %1582 = vmatprep.subr.mxu0 0.0
      %1583 = vmatpush1.msra.mxu0 0.0
      %1584 = vmatprep.subr.mxu0 0.0
      %1585 = vmatpush1.msra.mxu0 0.0
      %1586 = vmatprep.subr.mxu0 0.0
      %1587 = vmatpush1.msra.mxu0 0.0
      %1588 = vmatprep.subr.mxu0 0.0
      %1589 = vmatpush1.msra.mxu0 0.0
      %1590 = vmatprep.subr.mxu0 0.0
      %1591 = vmatpush1.msra.mxu0 0.0
      %1592 = vmatprep.subr.mxu0 0.0
      %1593 = vmatpush1.msra.mxu0 0.0
      %1594 = vmatprep.subr.mxu0 0.0
      %1595 = vmatpush1.msra.mxu0 0.0
      %1596 = vmatprep.subr.mxu0 0.0
      %1597 = vmatpush1.msra.mxu0 0.0
      %1598 = vmatprep.subr.mxu0 0.0
      %1599 = vmatpush1.msra.mxu0 0.0
      %1600 = vmatprep.subr.mxu0 0.0
      %1601 = vmatpush1.msra.mxu0 0.0
      %1602 = vmatprep.subr.mxu0 0.0
      %1603 = vmatpush1.msra.mxu0 0.0
      %1604 = vmatprep.subr.mxu0 0.0
      %1605 = vmatpush1.msra.mxu0 0.0
      %1606 = vmatprep.subr.mxu0 0.0
      %1607 = vmatpush1.msra.mxu0 0.0
      %1608 = vmatprep.subr.mxu0 0.0
      %1609 = vmatpush1.msra.mxu0 0.0
      %1610 = vmatprep.subr.mxu0 0.0
      %1611 = vmatpush1.msra.mxu0 0.0
      %1612 = vmatprep.subr.mxu0 0.0
      %1613 = vmatpush1.msra.mxu0 0.0
      %1614 = vmatprep.subr.mxu0 0.0
      %1615 = vmatpush1.msra.mxu0 0.0
      %1616 = vmatprep.subr.mxu0 0.0
      %1617 = vmatpush1.msra.mxu0 0.0
      %1618 = vmatprep.mubr.f32.mxu0 0.0
      %1619 = vmatmul.mubr.f32.gmra.mrb[0].mxu0 %v1546
      %v1620 = vpop.f32.mrb[0].mxu0
      %v1621 = vadd.f32 0.0, %v1620
      %v1622 = vpop.f32.mrb[0].mxu0
      %v1623 = vadd.f32 0.0, %v1622
      %1624 = vdwg.mxu0
      %1625 = vmatprep.subr.mxu0 0.0
      %1626 = vmatpush1.msra.mxu0 %v1552
      %1627 = vmatprep.subr.mxu0 0.0
      %1628 = vmatpush1.msra.mxu0 0.0
      %1629 = vmatprep.subr.mxu0 0.0
      %1630 = vmatpush1.msra.mxu0 0.0
      %1631 = vmatprep.subr.mxu0 0.0
      %1632 = vmatpush1.msra.mxu0 0.0
      %1633 = vmatprep.subr.mxu0 0.0
      %1634 = vmatpush1.msra.mxu0 0.0
      %1635 = vmatprep.subr.mxu0 0.0
      %1636 = vmatpush1.msra.mxu0 0.0
      %1637 = vmatprep.subr.mxu0 0.0
      %1638 = vmatpush1.msra.mxu0 0.0
      %1639 = vmatprep.subr.mxu0 0.0
      %1640 = vmatpush1.msra.mxu0 0.0
      %1641 = vmatprep.subr.mxu0 0.0
      %1642 = vmatpush1.msra.mxu0 0.0
      %1643 = vmatprep.subr.mxu0 0.0
      %1644 = vmatpush1.msra.mxu0 0.0
      %1645 = vmatprep.subr.mxu0 0.0
      %1646 = vmatpush1.msra.mxu0 0.0
      %1647 = vmatprep.subr.mxu0 0.0
      %1648 = vmatpush1.msra.mxu0 0.0
      %1649 = vmatprep.subr.mxu0 0.0
      %1650 = vmatpush1.msra.mxu0 0.0
      %1651 = vmatprep.subr.mxu0 0.0
      %1652 = vmatpush1.msra.mxu0 0.0
      %1653 = vmatprep.subr.mxu0 0.0
      %1654 = vmatpush1.msra.mxu0 0.0
      %1655 = vmatprep.subr.mxu0 0.0
      %1656 = vmatpush1.msra.mxu0 0.0
      %1657 = vmatprep.subr.mxu0 0.0
      %1658 = vmatpush1.msra.mxu0 0.0
      %1659 = vmatprep.subr.mxu0 0.0
      %1660 = vmatpush1.msra.mxu0 0.0
      %1661 = vmatprep.subr.mxu0 0.0
      %1662 = vmatpush1.msra.mxu0 0.0
      %1663 = vmatprep.subr.mxu0 0.0
      %1664 = vmatpush1.msra.mxu0 0.0
      %1665 = vmatprep.subr.mxu0 0.0
      %1666 = vmatpush1.msra.mxu0 0.0
      %1667 = vmatprep.subr.mxu0 0.0
      %1668 = vmatpush1.msra.mxu0 0.0
      %1669 = vmatprep.subr.mxu0 0.0
      %1670 = vmatpush1.msra.mxu0 0.0
      %1671 = vmatprep.subr.mxu0 0.0
      %1672 = vmatpush1.msra.mxu0 0.0
      %1673 = vmatprep.subr.mxu0 0.0
      %1674 = vmatpush1.msra.mxu0 0.0
      %1675 = vmatprep.subr.mxu0 0.0
      %1676 = vmatpush1.msra.mxu0 0.0
      %1677 = vmatprep.subr.mxu0 0.0
      %1678 = vmatpush1.msra.mxu0 0.0
      %1679 = vmatprep.subr.mxu0 0.0
      %1680 = vmatpush1.msra.mxu0 0.0
      %1681 = vmatprep.subr.mxu0 0.0
      %1682 = vmatpush1.msra.mxu0 0.0
      %1683 = vmatprep.subr.mxu0 0.0
      %1684 = vmatpush1.msra.mxu0 0.0
      %1685 = vmatprep.subr.mxu0 0.0
      %1686 = vmatpush1.msra.mxu0 0.0
      %1687 = vmatprep.subr.mxu0 0.0
      %1688 = vmatpush1.msra.mxu0 0.0
      %1689 = vmatprep.mubr.f32.mxu0 0.0
      %1690 = vmatmul.mubr.f32.gmra.mrb[0].mxu0 %v1546
      %v1691 = vpop.f32.mrb[0].mxu0
      %v1692 = vadd.f32 0.0, %v1691
      %v1693 = vpop.f32.mrb[0].mxu0
      %1694 = vdwg.mxu0
      %v1695 = vadd.f32 %v1526, %v1621
      %v1696 = vadd.f32 %v1527, %v1623
      %v1697 = vadd.f32 %v1528, %v1692
      %v1698 = vld [vmem:[%s2] sm:$0xff]
      %1700 = vset.pattern.permute.xlu0 0
      %1701 = vperm.xlu0 %1700, %v1698
      %v1702 = vpop.permute.xlu0 %1701
      %v1704 = vadd.f32 %v1695, %v1702
      %v1705 = vadd.f32 %v1696, %v1702
      %v1706 = vadd.f32 %v1697, %v1702
      %v1707 = vld [vmem:[%s3] sm:$0x7]
      %v1709 = vlaneseq
      %v1710 = vshrl.u32 %v1709, 7
      %v1711 = vsub.s32 0, %v1710
      %v1712 = vrot.slane %v1707, %v1711
      %v1713 = vlaneseq
      %v1714 = vshrl.u32 %v1713, 7
      %v1715 = vsub.s32 1, %v1714
      %v1716 = vrot.slane %v1707, %v1715
      %v1717 = vlaneseq
      %v1718 = vshrl.u32 %v1717, 7
      %v1719 = vsub.s32 2, %v1718
      %v1720 = vrot.slane %v1707, %v1719
      %v1724 = vmul.f32 %v1704, %v1712
      %v1725 = vmul.f32 %v1705, %v1716
      %v1726 = vmul.f32 %v1706, %v1720
      %v1727 = vadd.f32 %v1724, %v1725
      %vm1728 = vcmask 261120
      %v1729 = vsel %vm1728, %v1726, 0.0
      %v1730 = vadd.f32 %v1727, %v1729
      %1731 = vadd.xlane.f32.xlu0 %v1730
      %v1732 = vpop.xlane.xlu0 %1731
      %v1733 = vmul.f32 %v1724, %v1704
      %v1734 = vmul.f32 %v1725, %v1705
      %v1735 = vmul.f32 %v1726, %v1706
      %v1736 = vadd.f32 %v1733, %v1734
      %v1737 = vsel %vm1728, %v1735, 0.0
      %v1738 = vadd.f32 %v1736, %v1737
      %1739 = vadd.xlane.f32.xlu0 %v1738
      %v1740 = vpop.xlane.xlu0 %1739
      %vm1741 = vcmask 7168
      %v1742 = vsel %vm1741, %v1732, %v1740
      %vm1743 = vcmask 15360
      %1744 = vst.msk [vmem:[%s195] sm:$0xff] %vm1743, %v1742
      %p1745 = scmp.lt.s32.totalorder %s15, 1
      %s1746 = scalar_select %p1745, %s15, 1
      %s1747 = smul.addr %s1746, 8
      %s1748 = scalar_lea.vmem %s4, %s1747
      // Predicated region
      $region37: #{conv_block1_forward.2} parent=35 // pred_check
        %p1749 = pneg %p122
      $region38: #{conv_block1_forward.2} parent=35 // pred_check_branch
        %1751 = sbr.rel (%p1749) target = $region40
      $region39: #{conv_block1_forward.2} parent=35 // pred_region
        _
      $region40: #{conv_block1_forward.2} parent=35 // pred_fallthru
        _
    $region36: #{conv_block1_forward.2} parent=5 // pred_fallthru
      _
    %p1752 = scmp.le.s32.totalorder 2, %s10
    // Predicated region
    $region41: #{conv_block1_forward.2} parent=5 // pred_check
      %p1753 = pneg %p1752
    $region42: #{conv_block1_forward.2} parent=5 // pred_check_branch
      %1755 = sbr.rel (%p1753) target = $region44
    $region43: #{conv_block1_forward.2} parent=5 // pred_region
      %s1756 = ssub.s32 %s10, 2
      // Predicated region
      $region45: #{conv_block1_forward.2} parent=43 // pred_check
        %p1757 = pneg %p128
      $region46: #{conv_block1_forward.2} parent=43 // pred_check_branch
        %1759 = sbr.rel (%p1757) target = $region48
      $region47: #{conv_block1_forward.2} parent=43 // pred_region
        %p1760 = scmp.lt.s32.totalorder %s16, 1
        %s1761 = scalar_select %p1760, %s16, 1
        %s1762 = smul.addr %s1761, 8
        %s1763 = scalar_lea.vmem %s4, %s1762
      $region48: #{conv_block1_forward.2} parent=43 // pred_fallthru
        _
    $region44: #{conv_block1_forward.2} parent=5 // pred_fallthru
      _
  $region6: #{conv_block1_forward.2} parent=0 // loop_footer
    %s14 = sadd.s32 1, %s10
  $region7: #{conv_block1_forward.2} parent=0 // loop_footer_branch
    %9 = sbr.rel target = $region3
  $region8: #{conv_block1_forward.2} parent=0 // loop_exit
    _

// kernel: conv_block1_forward.3
$region0: #{conv_block1_forward.3}
  #allocation0 [shape = 'u32[]', space=smem, size = 0x4, offset = 0x4, fixed_abs, tag = 'smem constant byte address 0x4 - core index']
  #allocation1 [shape = 'u32[144,128]{1,0:T(1,128)}', space=vmem, size = 0x12000, scoped, tag = 'internal scratch']
  %s0 = inlined_call_operand.vmem [shape: f32[2,4,342], index: 0, kind: input, shape index: {}]
  %s1 = inlined_call_operand.vmem [shape: f32[9,8,4], index: 1, kind: input, shape index: {}]
  %s2 = inlined_call_operand.vmem [shape: f32[8,1], index: 2, kind: input, shape index: {}]
  %s3 = inlined_call_operand.vmem [shape: f32[8,1], index: 3, kind: input, shape index: {}]
  %s4 = inlined_call_operand.vmem [shape: f32[8,1], index: 4, kind: input, shape index: {}]
  %s5 = inlined_call_operand.vmem [shape: f32[2,8,256], index: 5, kind: output, shape index: {}]
  %s6 = sld [smem:[#allocation0]]
  $region53: #{conv_block1_forward.3} parent=0
    _
  %s8 = ssub.s32 1, %s6
  %s9 = scalar_select 0, %s8, %s6
  loop: start=0, step=1, limit=4
  $region2: #{conv_block1_forward.3} parent=0 // loop_pre_header
    _
  $region3: #{conv_block1_forward.3} parent=0 // loop_header
    %s11 = sphi 0, %s15
    %p12 = scmp.ge.s32.totalorder %s11, 4
    %s21 = sphi 0, %s23
    %s24 = sphi 0, %s21
    %s25 = sphi 0, %s24
    %s41 = sphi 0, %s25
    %s45 = sphi 0, %s45
    %s47 = sphi 0, %s45
    %s48 = sphi 0, %s47
    %s62 = sphi 0, %s48
    %s66 = sphi 0, %s66
    %s68 = sphi 0, %s66
    %s69 = sphi 0, %s68
    %s83 = sphi 0, %s69
    %s87 = sphi 0, %s87
    %s89 = sphi 0, %s87
    %s90 = sphi 0, %s89
    %s104 = sphi 0, %s90
    %s108 = sphi 0, %s108
    %s110 = sphi 0, %s108
    %s111 = sphi 0, %s110
    %s125 = sphi 0, %s111
    %s131 = sphi 0, %s133
    %s134 = sphi 0, %s131
    %s135 = sphi 0, %s134
    %s151 = sphi 0, %s135
  $region4: #{conv_block1_forward.3} parent=0 // loop_header_branch
    %14 = sbr.rel (%p12) target = $region8
  $region5: #{conv_block1_forward.3} parent=0 // loop_body
    %s16 = ssub.s32 %s11, 1
    %s17 = ssub.s32 %s11, 2
    %s18 = sadd.s32 %s11, 1
    %s19 = ssub.s32 %s11, %s18
    %p20 = scmp.eq.s32.totalorder %s19, 0
    %s22 = sadd.s32 %s21, 1
    %s23 = scalar_select %p20, %s21, %s22
    %p26 = pneg %p20
    %p27 = scmp.eq.s32.totalorder %s11, 1
    %p28 = por %p26, %p27
    %p29 = scmp.ne.s32.totalorder %s21, %s24
    %p30 = scmp.eq.s32.totalorder %s11, 0
    %p31 = por %p29, %p30
    %p32 = scmp.ne.s32.totalorder %s21, %s24
    %p33 = scmp.eq.s32.totalorder %s16, 1
    %p34 = por %p32, %p33
    %p35 = scmp.ne.s32.totalorder %s24, %s25
    %p36 = scmp.eq.s32.totalorder %s16, 0
    %p37 = por %p35, %p36
    %p38 = scmp.ne.s32.totalorder %s24, %s25
    %p39 = scmp.eq.s32.totalorder %s17, 1
    %p40 = por %p38, %p39
    %p42 = scmp.ne.s32.totalorder %s25, %s41
    %p43 = scmp.eq.s32.totalorder %s17, 0
    %p44 = por %p42, %p43
    %s46 = sadd.s32 %s45, 1
    %p49 = scmp.eq.s32.totalorder %s11, 1
    %p50 = scmp.ne.s32.totalorder %s45, %s47
    %p51 = scmp.eq.s32.totalorder %s11, 0
    %p52 = por %p50, %p51
    %p53 = scmp.ne.s32.totalorder %s45, %s47
    %p54 = scmp.eq.s32.totalorder %s16, 1
    %p55 = por %p53, %p54
    %p56 = scmp.ne.s32.totalorder %s47, %s48
    %p57 = scmp.eq.s32.totalorder %s16, 0
    %p58 = por %p56, %p57
    %p59 = scmp.ne.s32.totalorder %s47, %s48
    %p60 = scmp.eq.s32.totalorder %s17, 1
    %p61 = por %p59, %p60
    %p63 = scmp.ne.s32.totalorder %s48, %s62
    %p64 = scmp.eq.s32.totalorder %s17, 0
    %p65 = por %p63, %p64
    %s67 = sadd.s32 %s66, 1
    %p70 = scmp.eq.s32.totalorder %s11, 1
    %p71 = scmp.ne.s32.totalorder %s66, %s68
    %p72 = scmp.eq.s32.totalorder %s11, 0
    %p73 = por %p71, %p72
    %p74 = scmp.ne.s32.totalorder %s66, %s68
    %p75 = scmp.eq.s32.totalorder %s16, 1
    %p76 = por %p74, %p75
    %p77 = scmp.ne.s32.totalorder %s68, %s69
    %p78 = scmp.eq.s32.totalorder %s16, 0
    %p79 = por %p77, %p78
    %p80 = scmp.ne.s32.totalorder %s68, %s69
    %p81 = scmp.eq.s32.totalorder %s17, 1
    %p82 = por %p80, %p81
    %p84 = scmp.ne.s32.totalorder %s69, %s83
    %p85 = scmp.eq.s32.totalorder %s17, 0
    %p86 = por %p84, %p85
    %s88 = sadd.s32 %s87, 1
    %p91 = scmp.eq.s32.totalorder %s11, 1
    %p92 = scmp.ne.s32.totalorder %s87, %s89
    %p93 = scmp.eq.s32.totalorder %s11, 0
    %p94 = por %p92, %p93
    %p95 = scmp.ne.s32.totalorder %s87, %s89
    %p96 = scmp.eq.s32.totalorder %s16, 1
    %p97 = por %p95, %p96
    %p98 = scmp.ne.s32.totalorder %s89, %s90
    %p99 = scmp.eq.s32.totalorder %s16, 0
    %p100 = por %p98, %p99
    %p101 = scmp.ne.s32.totalorder %s89, %s90
    %p102 = scmp.eq.s32.totalorder %s17, 1
    %p103 = por %p101, %p102
    %p105 = scmp.ne.s32.totalorder %s90, %s104
    %p106 = scmp.eq.s32.totalorder %s17, 0
    %p107 = por %p105, %p106
    %s109 = sadd.s32 %s108, 1
    %p112 = scmp.eq.s32.totalorder %s11, 1
    %p113 = scmp.ne.s32.totalorder %s108, %s110
    %p114 = scmp.eq.s32.totalorder %s11, 0
    %p115 = por %p113, %p114
    %p116 = scmp.ne.s32.totalorder %s108, %s110
    %p117 = scmp.eq.s32.totalorder %s16, 1
    %p118 = por %p116, %p117
    %p119 = scmp.ne.s32.totalorder %s110, %s111
    %p120 = scmp.eq.s32.totalorder %s16, 0
    %p121 = por %p119, %p120
    %p122 = scmp.ne.s32.totalorder %s110, %s111
    %p123 = scmp.eq.s32.totalorder %s17, 1
    %p124 = por %p122, %p123
    %p126 = scmp.ne.s32.totalorder %s111, %s125
    %p127 = scmp.eq.s32.totalorder %s17, 0
    %p128 = por %p126, %p127
    %s129 = ssub.s32 %s11, %s18
    %p130 = scmp.eq.s32.totalorder %s129, 0
    %s132 = sadd.s32 %s131, 1
    %s133 = scalar_select %p130, %s131, %s132
    %p136 = pneg %p130
    %p137 = scmp.eq.s32.totalorder %s11, 1
    %p138 = por %p136, %p137
    %p139 = scmp.ne.s32.totalorder %s131, %s134
    %p140 = scmp.eq.s32.totalorder %s11, 0
    %p141 = por %p139, %p140
    %p142 = scmp.ne.s32.totalorder %s131, %s134
    %p143 = scmp.eq.s32.totalorder %s16, 1
    %p144 = por %p142, %p143
    %p145 = scmp.ne.s32.totalorder %s134, %s135
    %p146 = scmp.eq.s32.totalorder %s16, 0
    %p147 = por %p145, %p146
    %p148 = scmp.ne.s32.totalorder %s134, %s135
    %p149 = scmp.eq.s32.totalorder %s17, 1
    %p150 = por %p148, %p149
    %p152 = scmp.ne.s32.totalorder %s135, %s151
    %p153 = scmp.eq.s32.totalorder %s17, 0
    %p154 = por %p152, %p153
    %p155 = scmp.le.s32.totalorder 1, %s11
    %p156 = scmp.lt.s32.totalorder %s11, 3
    %p157 = pnand %p155, %p156
    %p158 = pneg %p157
    // Predicated region
    $region9: #{conv_block1_forward.3} parent=5 // pred_check
      _
    $region10: #{conv_block1_forward.3} parent=5 // pred_check_branch
      %160 = sbr.rel (%p157) target = $region12
    $region11: #{conv_block1_forward.3} parent=5 // pred_region
      %s161 = ssub.s32 %s11, 1
      // Predicated region
      $region13: #{conv_block1_forward.3} parent=11 // pred_check
        %p162 = pneg %p58
      $region14: #{conv_block1_forward.3} parent=11 // pred_check_branch
        %164 = sbr.rel (%p162) target = $region16
      $region15: #{conv_block1_forward.3} parent=11 // pred_region
        _
      $region16: #{conv_block1_forward.3} parent=11 // pred_fallthru
        _
      // Predicated region
      $region17: #{conv_block1_forward.3} parent=11 // pred_check
        %p165 = pneg %p79
      $region18: #{conv_block1_forward.3} parent=11 // pred_check_branch
        %167 = sbr.rel (%p165) target = $region20
      $region19: #{conv_block1_forward.3} parent=11 // pred_region
        _
      $region20: #{conv_block1_forward.3} parent=11 // pred_fallthru
        _
      // Predicated region
      $region21: #{conv_block1_forward.3} parent=11 // pred_check
        %p168 = pneg %p100
      $region22: #{conv_block1_forward.3} parent=11 // pred_check_branch
        %170 = sbr.rel (%p168) target = $region24
      $region23: #{conv_block1_forward.3} parent=11 // pred_region
        _
      $region24: #{conv_block1_forward.3} parent=11 // pred_fallthru
        _
      // Predicated region
      $region25: #{conv_block1_forward.3} parent=11 // pred_check
        %p171 = pneg %p121
      $region26: #{conv_block1_forward.3} parent=11 // pred_check_branch
        %173 = sbr.rel (%p171) target = $region28
      $region27: #{conv_block1_forward.3} parent=11 // pred_region
        _
      $region28: #{conv_block1_forward.3} parent=11 // pred_fallthru
        _
    $region12: #{conv_block1_forward.3} parent=5 // pred_fallthru
      _
    %p174 = scmp.lt.s32.totalorder %s11, 2
    // Predicated region
    $region29: #{conv_block1_forward.3} parent=5 // pred_check
      %p175 = pneg %p174
    $region30: #{conv_block1_forward.3} parent=5 // pred_check_branch
      %177 = sbr.rel (%p175) target = $region32
    $region31: #{conv_block1_forward.3} parent=5 // pred_region
      // Predicated region
      $region33: #{conv_block1_forward.3} parent=31 // pred_check
        %p178 = pneg %p31
      $region34: #{conv_block1_forward.3} parent=31 // pred_check_branch
        %180 = sbr.rel (%p178) target = $region36
      $region35: #{conv_block1_forward.3} parent=31 // pred_region
        %p181 = scmp.lt.s32.totalorder %s11, 1
        %s182 = scalar_select %p181, %s11, 1
        %s183 = smul.addr %s182, 3
        %s184 = smul.addr %s183, 4
        %s185 = scalar_lea.vmem %s0, %s184
      $region36: #{conv_block1_forward.3} parent=31 // pred_fallthru
        _
    $region32: #{conv_block1_forward.3} parent=5 // pred_fallthru
      _
    %p186 = scmp.le.s32.totalorder 1, %s11
    %p187 = scmp.lt.s32.totalorder %s11, 3
    %p188 = pnand %p186, %p187
    %p189 = pneg %p188
    // Predicated region
    $region37: #{conv_block1_forward.3} parent=5 // pred_check
      _
    $region38: #{conv_block1_forward.3} parent=5 // pred_check_branch
      %191 = sbr.rel (%p188) target = $region40
    $region39: #{conv_block1_forward.3} parent=5 // pred_region
      %s192 = ssub.s32 %s11, 1
      %p193 = scmp.lt.s32.totalorder %s16, 1
      %s194 = scalar_select %p193, %s16, 1
      %s195 = smul.addr %s194, 3
      %s196 = smul.addr %s195, 4
      %s197 = scalar_lea.vmem %s0, %s196
      %p198 = pneg %p37
      %p199 = pneg %p34
      %p200 = pneg %p58
      %p201 = pneg %p55
      %p202 = pneg %p79
      %p203 = pneg %p76
      %p204 = pneg %p100
      %p205 = pneg %p97
      %p206 = pneg %p121
      %p207 = pneg %p118
      %p208 = pneg %p147
      %p209 = pneg %p144
      %p210 = scmp.lt.s32.totalorder %s16, 1
      %s211 = scalar_select %p210, %s16, 1
      %s212 = smul.addr %s211, 2
      %s213 = smul.addr %s212, 8
      %s214 = scalar_lea.vmem %s5, %s213
      %p215 = scmp.lt.s32.totalorder %s16, 1
      %s216 = scalar_select %p215, %s16, 1
      %s217 = smul.addr %s216, 3
      %s218 = smul.addr %s217, 4
      %s219 = scalar_lea.vmem %s0, %s218
      %p220 = scmp.lt.s32.totalorder %s16, 1
      %s221 = scalar_select %p220, %s16, 1
      %s222 = smul.addr %s221, 2
      %s223 = smul.addr %s222, 8
      %s224 = scalar_lea.vmem %s5, %s223
      %v225 = vld [vmem:[%s1] sm:$0xff]
      %v226 = vld [vmem:[%s219] sm:$0xff]
      %v227 = vld [vmem:[%s219 + $0x8] sm:$0xf]
      %s228 = scalar_lea.vmem %s1, 8
      %v229 = vld [vmem:[%s228] sm:$0xff]
      %v232 = vcombine.high %v226, %v226
      %233 = vrot.lane.b32.xlu0 %v226, 127
      %v234 = vpop.permute.xlu0 %233
      %235 = vrot.lane.b32.xlu0 %v232, 127
      %v236 = vpop.permute.xlu0 %235
      %237 = vrot.lane.b32.xlu0 %v227, 127
      %v238 = vpop.permute.xlu0 %237
      %vm239 = vcmask 1039360
      %v240 = vsel %vm239, %v234, %v236
      %v241 = vsel %vm239, %v236, %v238
      %vm242 = vcmask 31744
      %v244 = vsel %vm242, %v229, 0
      %vm246 = vcmask 1043456
      %v247 = vsel %vm246, %v240, 0
      %v249 = vsel %vm246, %v241, 0
      %v251 = vsel %vm246, %v238, 0
      %253 = vmatprep.subr.mxu0 %v249
      %254 = vmatpush1.msra.mxu0 %v247
      %255 = vmatprep.subr.mxu0 0.0
      %256 = vmatpush1.msra.mxu0 0.0
      %257 = vmatprep.subr.mxu0 0.0
      %258 = vmatpush1.msra.mxu0 0.0
      %259 = vmatprep.subr.mxu0 0.0
      %260 = vmatpush1.msra.mxu0 0.0
      %261 = vmatprep.subr.mxu0 0.0
      %262 = vmatpush1.msra.mxu0 0.0
      %263 = vmatprep.subr.mxu0 0.0
      %264 = vmatpush1.msra.mxu0 0.0
      %265 = vmatprep.subr.mxu0 0.0
      %266 = vmatpush1.msra.mxu0 0.0
      %267 = vmatprep.subr.mxu0 0.0
      %268 = vmatpush1.msra.mxu0 0.0
      %269 = vmatprep.subr.mxu0 0.0
      %270 = vmatpush1.msra.mxu0 0.0
      %271 = vmatprep.subr.mxu0 0.0
      %272 = vmatpush1.msra.mxu0 0.0
      %273 = vmatprep.subr.mxu0 0.0
      %274 = vmatpush1.msra.mxu0 0.0
      %275 = vmatprep.subr.mxu0 0.0
      %276 = vmatpush1.msra.mxu0 0.0
      %277 = vmatprep.subr.mxu0 0.0
      %278 = vmatpush1.msra.mxu0 0.0
      %279 = vmatprep.subr.mxu0 0.0
      %280 = vmatpush1.msra.mxu0 0.0
      %281 = vmatprep.subr.mxu0 0.0
      %282 = vmatpush1.msra.mxu0 0.0
      %283 = vmatprep.subr.mxu0 0.0
      %284 = vmatpush1.msra.mxu0 0.0
      %285 = vmatprep.subr.mxu0 0.0
      %286 = vmatpush1.msra.mxu0 0.0
      %287 = vmatprep.subr.mxu0 0.0
      %288 = vmatpush1.msra.mxu0 0.0
      %289 = vmatprep.subr.mxu0 0.0
      %290 = vmatpush1.msra.mxu0 0.0
      %291 = vmatprep.subr.mxu0 0.0
      %292 = vmatpush1.msra.mxu0 0.0
      %293 = vmatprep.subr.mxu0 0.0
      %294 = vmatpush1.msra.mxu0 0.0
      %295 = vmatprep.subr.mxu0 0.0
      %296 = vmatpush1.msra.mxu0 0.0
      %297 = vmatprep.subr.mxu0 0.0
      %298 = vmatpush1.msra.mxu0 0.0
      %299 = vmatprep.subr.mxu0 0.0
      %300 = vmatpush1.msra.mxu0 0.0
      %301 = vmatprep.subr.mxu0 0.0
      %302 = vmatpush1.msra.mxu0 0.0
      %303 = vmatprep.subr.mxu0 0.0
      %304 = vmatpush1.msra.mxu0 0.0
      %305 = vmatprep.subr.mxu0 0.0
      %306 = vmatpush1.msra.mxu0 0.0
      %307 = vmatprep.subr.mxu0 0.0
      %308 = vmatpush1.msra.mxu0 0.0
      %309 = vmatprep.subr.mxu0 0.0
      %310 = vmatpush1.msra.mxu0 0.0
      %311 = vmatprep.subr.mxu0 0.0
      %312 = vmatpush1.msra.mxu0 0.0
      %313 = vmatprep.subr.mxu0 0.0
      %314 = vmatpush1.msra.mxu0 0.0
      %315 = vmatprep.subr.mxu0 0.0
      %316 = vmatpush1.msra.mxu0 0.0
      %317 = vmatprep.mubr.f32.mxu0 0.0
      %318 = vmatmul.mubr.f32.gmra.mrb[0].mxu0 %v244
      %v319 = vpop.f32.mrb[0].mxu0
      %v320 = vadd.f32 0.0, %v319
      %v321 = vpop.f32.mrb[0].mxu0
      %v322 = vadd.f32 0.0, %v321
      %323 = vdwg.mxu0
      %324 = vmatprep.subr.mxu0 0.0
      %325 = vmatpush1.msra.mxu0 %v251
      %326 = vmatprep.subr.mxu0 0.0
      %327 = vmatpush1.msra.mxu0 0.0
      %328 = vmatprep.subr.mxu0 0.0
      %329 = vmatpush1.msra.mxu0 0.0
      %330 = vmatprep.subr.mxu0 0.0
      %331 = vmatpush1.msra.mxu0 0.0
      %332 = vmatprep.subr.mxu0 0.0
      %333 = vmatpush1.msra.mxu0 0.0
      %334 = vmatprep.subr.mxu0 0.0
      %335 = vmatpush1.msra.mxu0 0.0
      %336 = vmatprep.subr.mxu0 0.0
      %337 = vmatpush1.msra.mxu0 0.0
      %338 = vmatprep.subr.mxu0 0.0
      %339 = vmatpush1.msra.mxu0 0.0
      %340 = vmatprep.subr.mxu0 0.0
      %341 = vmatpush1.msra.mxu0 0.0
      %342 = vmatprep.subr.mxu0 0.0
      %343 = vmatpush1.msra.mxu0 0.0
      %344 = vmatprep.subr.mxu0 0.0
      %345 = vmatpush1.msra.mxu0 0.0
      %346 = vmatprep.subr.mxu0 0.0
      %347 = vmatpush1.msra.mxu0 0.0
      %348 = vmatprep.subr.mxu0 0.0
      %349 = vmatpush1.msra.mxu0 0.0
      %350 = vmatprep.subr.mxu0 0.0
      %351 = vmatpush1.msra.mxu0 0.0
      %352 = vmatprep.subr.mxu0 0.0
      %353 = vmatpush1.msra.mxu0 0.0
      %354 = vmatprep.subr.mxu0 0.0
      %355 = vmatpush1.msra.mxu0 0.0
      %356 = vmatprep.subr.mxu0 0.0
      %357 = vmatpush1.msra.mxu0 0.0
      %358 = vmatprep.subr.mxu0 0.0
      %359 = vmatpush1.msra.mxu0 0.0
      %360 = vmatprep.subr.mxu0 0.0
      %361 = vmatpush1.msra.mxu0 0.0
      %362 = vmatprep.subr.mxu0 0.0
      %363 = vmatpush1.msra.mxu0 0.0
      %364 = vmatprep.subr.mxu0 0.0
      %365 = vmatpush1.msra.mxu0 0.0
      %366 = vmatprep.subr.mxu0 0.0
      %367 = vmatpush1.msra.mxu0 0.0
      %368 = vmatprep.subr.mxu0 0.0
      %369 = vmatpush1.msra.mxu0 0.0
      %370 = vmatprep.subr.mxu0 0.0
      %371 = vmatpush1.msra.mxu0 0.0
      %372 = vmatprep.subr.mxu0 0.0
      %373 = vmatpush1.msra.mxu0 0.0
      %374 = vmatprep.subr.mxu0 0.0
      %375 = vmatpush1.msra.mxu0 0.0
      %376 = vmatprep.subr.mxu0 0.0
      %377 = vmatpush1.msra.mxu0 0.0
      %378 = vmatprep.subr.mxu0 0.0
      %379 = vmatpush1.msra.mxu0 0.0
      %380 = vmatprep.subr.mxu0 0.0
      %381 = vmatpush1.msra.mxu0 0.0
      %382 = vmatprep.subr.mxu0 0.0
      %383 = vmatpush1.msra.mxu0 0.0
      %384 = vmatprep.subr.mxu0 0.0
      %385 = vmatpush1.msra.mxu0 0.0
      %386 = vmatprep.subr.mxu0 0.0
      %387 = vmatpush1.msra.mxu0 0.0
      %388 = vmatprep.mubr.f32.mxu0 0.0
      %389 = vmatmul.mubr.f32.gmra.mrb[0].mxu0 %v244
      %v390 = vpop.f32.mrb[0].mxu0
      %v391 = vadd.f32 0.0, %v390
      %v392 = vpop.f32.mrb[0].mxu0
      %393 = vdwg.mxu0
      %v395 = vsel %vm242, %v225, 0
      %v397 = vsel %vm246, %v226, 0
      %v399 = vsel %vm246, %v232, 0
      %v401 = vsel %vm246, %v227, 0
      %403 = vmatprep.subr.mxu0 %v399
      %404 = vmatpush1.msra.mxu0 %v397
      %405 = vmatprep.subr.mxu0 0.0
      %406 = vmatpush1.msra.mxu0 0.0
      %407 = vmatprep.subr.mxu0 0.0
      %408 = vmatpush1.msra.mxu0 0.0
      %409 = vmatprep.subr.mxu0 0.0
      %410 = vmatpush1.msra.mxu0 0.0
      %411 = vmatprep.subr.mxu0 0.0
      %412 = vmatpush1.msra.mxu0 0.0
      %413 = vmatprep.subr.mxu0 0.0
      %414 = vmatpush1.msra.mxu0 0.0
      %415 = vmatprep.subr.mxu0 0.0
      %416 = vmatpush1.msra.mxu0 0.0
      %417 = vmatprep.subr.mxu0 0.0
      %418 = vmatpush1.msra.mxu0 0.0
      %419 = vmatprep.subr.mxu0 0.0
      %420 = vmatpush1.msra.mxu0 0.0
      %421 = vmatprep.subr.mxu0 0.0
      %422 = vmatpush1.msra.mxu0 0.0
      %423 = vmatprep.subr.mxu0 0.0
      %424 = vmatpush1.msra.mxu0 0.0
      %425 = vmatprep.subr.mxu0 0.0
      %426 = vmatpush1.msra.mxu0 0.0
      %427 = vmatprep.subr.mxu0 0.0
      %428 = vmatpush1.msra.mxu0 0.0
      %429 = vmatprep.subr.mxu0 0.0
      %430 = vmatpush1.msra.mxu0 0.0
      %431 = vmatprep.subr.mxu0 0.0
      %432 = vmatpush1.msra.mxu0 0.0
      %433 = vmatprep.subr.mxu0 0.0
      %434 = vmatpush1.msra.mxu0 0.0
      %435 = vmatprep.subr.mxu0 0.0
      %436 = vmatpush1.msra.mxu0 0.0
      %437 = vmatprep.subr.mxu0 0.0
      %438 = vmatpush1.msra.mxu0 0.0
      %439 = vmatprep.subr.mxu0 0.0
      %440 = vmatpush1.msra.mxu0 0.0
      %441 = vmatprep.subr.mxu0 0.0
      %442 = vmatpush1.msra.mxu0 0.0
      %443 = vmatprep.subr.mxu0 0.0
      %444 = vmatpush1.msra.mxu0 0.0
      %445 = vmatprep.subr.mxu0 0.0
      %446 = vmatpush1.msra.mxu0 0.0
      %447 = vmatprep.subr.mxu0 0.0
      %448 = vmatpush1.msra.mxu0 0.0
      %449 = vmatprep.subr.mxu0 0.0
      %450 = vmatpush1.msra.mxu0 0.0
      %451 = vmatprep.subr.mxu0 0.0
      %452 = vmatpush1.msra.mxu0 0.0
      %453 = vmatprep.subr.mxu0 0.0
      %454 = vmatpush1.msra.mxu0 0.0
      %455 = vmatprep.subr.mxu0 0.0
      %456 = vmatpush1.msra.mxu0 0.0
      %457 = vmatprep.subr.mxu0 0.0
      %458 = vmatpush1.msra.mxu0 0.0
      %459 = vmatprep.subr.mxu0 0.0
      %460 = vmatpush1.msra.mxu0 0.0
      %461 = vmatprep.subr.mxu0 0.0
      %462 = vmatpush1.msra.mxu0 0.0
      %463 = vmatprep.subr.mxu0 0.0
      %464 = vmatpush1.msra.mxu0 0.0
      %465 = vmatprep.subr.mxu0 0.0
      %466 = vmatpush1.msra.mxu0 0.0
      %467 = vmatprep.mubr.f32.mxu0 0.0
      %468 = vmatmul.mubr.f32.gmra.mrb[0].mxu0 %v395
      %v469 = vpop.f32.mrb[0].mxu0
      %v470 = vadd.f32 %v320, %v469
      %v471 = vpop.f32.mrb[0].mxu0
      %v472 = vadd.f32 %v322, %v471
      %473 = vdwg.mxu0
      %474 = vmatprep.subr.mxu0 0.0
      %475 = vmatpush1.msra.mxu0 %v401
      %476 = vmatprep.subr.mxu0 0.0
      %477 = vmatpush1.msra.mxu0 0.0
      %478 = vmatprep.subr.mxu0 0.0
      %479 = vmatpush1.msra.mxu0 0.0
      %480 = vmatprep.subr.mxu0 0.0
      %481 = vmatpush1.msra.mxu0 0.0
      %482 = vmatprep.subr.mxu0 0.0
      %483 = vmatpush1.msra.mxu0 0.0
      %484 = vmatprep.subr.mxu0 0.0
      %485 = vmatpush1.msra.mxu0 0.0
      %486 = vmatprep.subr.mxu0 0.0
      %487 = vmatpush1.msra.mxu0 0.0
      %488 = vmatprep.subr.mxu0 0.0
      %489 = vmatpush1.msra.mxu0 0.0
      %490 = vmatprep.subr.mxu0 0.0
      %491 = vmatpush1.msra.mxu0 0.0
      %492 = vmatprep.subr.mxu0 0.0
      %493 = vmatpush1.msra.mxu0 0.0
      %494 = vmatprep.subr.mxu0 0.0
      %495 = vmatpush1.msra.mxu0 0.0
      %496 = vmatprep.subr.mxu0 0.0
      %497 = vmatpush1.msra.mxu0 0.0
      %498 = vmatprep.subr.mxu0 0.0
      %499 = vmatpush1.msra.mxu0 0.0
      %500 = vmatprep.subr.mxu0 0.0
      %501 = vmatpush1.msra.mxu0 0.0
      %502 = vmatprep.subr.mxu0 0.0
      %503 = vmatpush1.msra.mxu0 0.0
      %504 = vmatprep.subr.mxu0 0.0
      %505 = vmatpush1.msra.mxu0 0.0
      %506 = vmatprep.subr.mxu0 0.0
      %507 = vmatpush1.msra.mxu0 0.0
      %508 = vmatprep.subr.mxu0 0.0
      %509 = vmatpush1.msra.mxu0 0.0
      %510 = vmatprep.subr.mxu0 0.0
      %511 = vmatpush1.msra.mxu0 0.0
      %512 = vmatprep.subr.mxu0 0.0
      %513 = vmatpush1.msra.mxu0 0.0
      %514 = vmatprep.subr.mxu0 0.0
      %515 = vmatpush1.msra.mxu0 0.0
      %516 = vmatprep.subr.mxu0 0.0
      %517 = vmatpush1.msra.mxu0 0.0
      %518 = vmatprep.subr.mxu0 0.0
      %519 = vmatpush1.msra.mxu0 0.0
      %520 = vmatprep.subr.mxu0 0.0
      %521 = vmatpush1.msra.mxu0 0.0
      %522 = vmatprep.subr.mxu0 0.0
      %523 = vmatpush1.msra.mxu0 0.0
      %524 = vmatprep.subr.mxu0 0.0
      %525 = vmatpush1.msra.mxu0 0.0
      %526 = vmatprep.subr.mxu0 0.0
      %527 = vmatpush1.msra.mxu0 0.0
      %528 = vmatprep.subr.mxu0 0.0
      %529 = vmatpush1.msra.mxu0 0.0
      %530 = vmatprep.subr.mxu0 0.0
      %531 = vmatpush1.msra.mxu0 0.0
      %532 = vmatprep.subr.mxu0 0.0
      %533 = vmatpush1.msra.mxu0 0.0
      %534 = vmatprep.subr.mxu0 0.0
      %535 = vmatpush1.msra.mxu0 0.0
      %536 = vmatprep.subr.mxu0 0.0
      %537 = vmatpush1.msra.mxu0 0.0
      %538 = vmatprep.mubr.f32.mxu0 0.0
      %539 = vmatmul.mubr.f32.gmra.mrb[0].mxu0 %v395
      %v540 = vpop.f32.mrb[0].mxu0
      %v541 = vadd.f32 %v391, %v540
      %v542 = vpop.f32.mrb[0].mxu0
      %543 = vdwg.mxu0
      %s544 = scalar_lea.vmem %s1, 16
      %v545 = vld [vmem:[%s544] sm:$0xff]
      %v546 = vld [vmem:[%s219] sm:$0xff]
      %v547 = vld [vmem:[%s219 + $0x8] sm:$0xf]
      %v550 = vcombine.high %v546, %v546
      %551 = vrot.lane.b32.xlu0 %v546, 126
      %v552 = vpop.permute.xlu0 %551
      %553 = vrot.lane.b32.xlu0 %v550, 126
      %v554 = vpop.permute.xlu0 %553
      %555 = vrot.lane.b32.xlu0 %v547, 126
      %v556 = vpop.permute.xlu0 %555
      %vm557 = vcmask 1031168
      %v558 = vsel %vm557, %v552, %v554
      %v559 = vsel %vm557, %v554, %v556
      %v561 = vsel %vm242, %v545, 0
      %v563 = vsel %vm246, %v558, 0
      %v565 = vsel %vm246, %v559, 0
      %v567 = vsel %vm246, %v556, 0
      %569 = vmatprep.subr.mxu0 %v565
      %570 = vmatpush1.msra.mxu0 %v563
      %571 = vmatprep.subr.mxu0 0.0
      %572 = vmatpush1.msra.mxu0 0.0
      %573 = vmatprep.subr.mxu0 0.0
      %574 = vmatpush1.msra.mxu0 0.0
      %575 = vmatprep.subr.mxu0 0.0
      %576 = vmatpush1.msra.mxu0 0.0
      %577 = vmatprep.subr.mxu0 0.0
      %578 = vmatpush1.msra.mxu0 0.0
      %579 = vmatprep.subr.mxu0 0.0
      %580 = vmatpush1.msra.mxu0 0.0
      %581 = vmatprep.subr.mxu0 0.0
      %582 = vmatpush1.msra.mxu0 0.0
      %583 = vmatprep.subr.mxu0 0.0
      %584 = vmatpush1.msra.mxu0 0.0
      %585 = vmatprep.subr.mxu0 0.0
      %586 = vmatpush1.msra.mxu0 0.0
      %587 = vmatprep.subr.mxu0 0.0
      %588 = vmatpush1.msra.mxu0 0.0
      %589 = vmatprep.subr.mxu0 0.0
      %590 = vmatpush1.msra.mxu0 0.0
      %591 = vmatprep.subr.mxu0 0.0
      %592 = vmatpush1.msra.mxu0 0.0
      %593 = vmatprep.subr.mxu0 0.0
      %594 = vmatpush1.msra.mxu0 0.0
      %595 = vmatprep.subr.mxu0 0.0
      %596 = vmatpush1.msra.mxu0 0.0
      %597 = vmatprep.subr.mxu0 0.0
      %598 = vmatpush1.msra.mxu0 0.0
      %599 = vmatprep.subr.mxu0 0.0
      %600 = vmatpush1.msra.mxu0 0.0
      %601 = vmatprep.subr.mxu0 0.0
      %602 = vmatpush1.msra.mxu0 0.0
      %603 = vmatprep.subr.mxu0 0.0
      %604 = vmatpush1.msra.mxu0 0.0
      %605 = vmatprep.subr.mxu0 0.0
      %606 = vmatpush1.msra.mxu0 0.0
      %607 = vmatprep.subr.mxu0 0.0
      %608 = vmatpush1.msra.mxu0 0.0
      %609 = vmatprep.subr.mxu0 0.0
      %610 = vmatpush1.msra.mxu0 0.0
      %611 = vmatprep.subr.mxu0 0.0
      %612 = vmatpush1.msra.mxu0 0.0
      %613 = vmatprep.subr.mxu0 0.0
      %614 = vmatpush1.msra.mxu0 0.0
      %615 = vmatprep.subr.mxu0 0.0
      %616 = vmatpush1.msra.mxu0 0.0
      %617 = vmatprep.subr.mxu0 0.0
      %618 = vmatpush1.msra.mxu0 0.0
      %619 = vmatprep.subr.mxu0 0.0
      %620 = vmatpush1.msra.mxu0 0.0
      %621 = vmatprep.subr.mxu0 0.0
      %622 = vmatpush1.msra.mxu0 0.0
      %623 = vmatprep.subr.mxu0 0.0
      %624 = vmatpush1.msra.mxu0 0.0
      %625 = vmatprep.subr.mxu0 0.0
      %626 = vmatpush1.msra.mxu0 0.0
      %627 = vmatprep.subr.mxu0 0.0
      %628 = vmatpush1.msra.mxu0 0.0
      %629 = vmatprep.subr.mxu0 0.0
      %630 = vmatpush1.msra.mxu0 0.0
      %631 = vmatprep.subr.mxu0 0.0
      %632 = vmatpush1.msra.mxu0 0.0
      %633 = vmatprep.mubr.f32.mxu0 0.0
      %634 = vmatmul.mubr.f32.gmra.mrb[0].mxu0 %v561
      %v635 = vpop.f32.mrb[0].mxu0
      %v636 = vadd.f32 0.0, %v635
      %v637 = vpop.f32.mrb[0].mxu0
      %v638 = vadd.f32 0.0, %v637
      %639 = vdwg.mxu0
      %640 = vmatprep.subr.mxu0 0.0
      %641 = vmatpush1.msra.mxu0 %v567
      %642 = vmatprep.subr.mxu0 0.0
      %643 = vmatpush1.msra.mxu0 0.0
      %644 = vmatprep.subr.mxu0 0.0
      %645 = vmatpush1.msra.mxu0 0.0
      %646 = vmatprep.subr.mxu0 0.0
      %647 = vmatpush1.msra.mxu0 0.0
      %648 = vmatprep.subr.mxu0 0.0
      %649 = vmatpush1.msra.mxu0 0.0
      %650 = vmatprep.subr.mxu0 0.0
      %651 = vmatpush1.msra.mxu0 0.0
      %652 = vmatprep.subr.mxu0 0.0
      %653 = vmatpush1.msra.mxu0 0.0
      %654 = vmatprep.subr.mxu0 0.0
      %655 = vmatpush1.msra.mxu0 0.0
      %656 = vmatprep.subr.mxu0 0.0
      %657 = vmatpush1.msra.mxu0 0.0
      %658 = vmatprep.subr.mxu0 0.0
      %659 = vmatpush1.msra.mxu0 0.0
      %660 = vmatprep.subr.mxu0 0.0
      %661 = vmatpush1.msra.mxu0 0.0
      %662 = vmatprep.subr.mxu0 0.0
      %663 = vmatpush1.msra.mxu0 0.0
      %664 = vmatprep.subr.mxu0 0.0
      %665 = vmatpush1.msra.mxu0 0.0
      %666 = vmatprep.subr.mxu0 0.0
      %667 = vmatpush1.msra.mxu0 0.0
      %668 = vmatprep.subr.mxu0 0.0
      %669 = vmatpush1.msra.mxu0 0.0
      %670 = vmatprep.subr.mxu0 0.0
      %671 = vmatpush1.msra.mxu0 0.0
      %672 = vmatprep.subr.mxu0 0.0
      %673 = vmatpush1.msra.mxu0 0.0
      %674 = vmatprep.subr.mxu0 0.0
      %675 = vmatpush1.msra.mxu0 0.0
      %676 = vmatprep.subr.mxu0 0.0
      %677 = vmatpush1.msra.mxu0 0.0
      %678 = vmatprep.subr.mxu0 0.0
      %679 = vmatpush1.msra.mxu0 0.0
      %680 = vmatprep.subr.mxu0 0.0
      %681 = vmatpush1.msra.mxu0 0.0
      %682 = vmatprep.subr.mxu0 0.0
      %683 = vmatpush1.msra.mxu0 0.0
      %684 = vmatprep.subr.mxu0 0.0
      %685 = vmatpush1.msra.mxu0 0.0
      %686 = vmatprep.subr.mxu0 0.0
      %687 = vmatpush1.msra.mxu0 0.0
      %688 = vmatprep.subr.mxu0 0.0
      %689 = vmatpush1.msra.mxu0 0.0
      %690 = vmatprep.subr.mxu0 0.0
      %691 = vmatpush1.msra.mxu0 0.0
      %692 = vmatprep.subr.mxu0 0.0
      %693 = vmatpush1.msra.mxu0 0.0
      %694 = vmatprep.subr.mxu0 0.0
      %695 = vmatpush1.msra.mxu0 0.0
      %696 = vmatprep.subr.mxu0 0.0
      %697 = vmatpush1.msra.mxu0 0.0
      %698 = vmatprep.subr.mxu0 0.0
      %699 = vmatpush1.msra.mxu0 0.0
      %700 = vmatprep.subr.mxu0 0.0
      %701 = vmatpush1.msra.mxu0 0.0
      %702 = vmatprep.subr.mxu0 0.0
      %703 = vmatpush1.msra.mxu0 0.0
      %704 = vmatprep.mubr.f32.mxu0 0.0
      %705 = vmatmul.mubr.f32.gmra.mrb[0].mxu0 %v561
      %v706 = vpop.f32.mrb[0].mxu0
      %v707 = vadd.f32 0.0, %v706
      %v708 = vpop.f32.mrb[0].mxu0
      %709 = vdwg.mxu0
      %v710 = vadd.f32 %v470, %v636
      %v711 = vadd.f32 %v472, %v638
      %v712 = vadd.f32 %v541, %v707
      %s713 = scalar_lea.vmem %s1, 24
      %v714 = vld [vmem:[%s713] sm:$0xff]
      %v715 = vld [vmem:[%s219] sm:$0xff]
      %v716 = vld [vmem:[%s219 + $0x8] sm:$0xf]
      %v719 = vcombine.high %v715, %v715
      %720 = vrot.lane.b32.xlu0 %v715, 110
      %v721 = vpop.permute.xlu0 %720
      %722 = vrot.lane.b32.xlu0 %v719, 110
      %v723 = vpop.permute.xlu0 %722
      %724 = vrot.lane.b32.xlu0 %v716, 110
      %v725 = vpop.permute.xlu0 %724
      %vm726 = vcmask 900096
      %v727 = vsel %vm726, %v721, %v723
      %v728 = vsel %vm726, %v723, %v725
      %v730 = vsel %vm242, %v714, 0
      %v732 = vsel %vm246, %v727, 0
      %v734 = vsel %vm246, %v728, 0
      %v736 = vsel %vm246, %v725, 0
      %738 = vmatprep.subr.mxu0 %v734
      %739 = vmatpush1.msra.mxu0 %v732
      %740 = vmatprep.subr.mxu0 0.0
      %741 = vmatpush1.msra.mxu0 0.0
      %742 = vmatprep.subr.mxu0 0.0
      %743 = vmatpush1.msra.mxu0 0.0
      %744 = vmatprep.subr.mxu0 0.0
      %745 = vmatpush1.msra.mxu0 0.0
      %746 = vmatprep.subr.mxu0 0.0
      %747 = vmatpush1.msra.mxu0 0.0
      %748 = vmatprep.subr.mxu0 0.0
      %749 = vmatpush1.msra.mxu0 0.0
      %750 = vmatprep.subr.mxu0 0.0
      %751 = vmatpush1.msra.mxu0 0.0
      %752 = vmatprep.subr.mxu0 0.0
      %753 = vmatpush1.msra.mxu0 0.0
      %754 = vmatprep.subr.mxu0 0.0
      %755 = vmatpush1.msra.mxu0 0.0
      %756 = vmatprep.subr.mxu0 0.0
      %757 = vmatpush1.msra.mxu0 0.0
      %758 = vmatprep.subr.mxu0 0.0
      %759 = vmatpush1.msra.mxu0 0.0
      %760 = vmatprep.subr.mxu0 0.0
      %761 = vmatpush1.msra.mxu0 0.0
      %762 = vmatprep.subr.mxu0 0.0
      %763 = vmatpush1.msra.mxu0 0.0
      %764 = vmatprep.subr.mxu0 0.0
      %765 = vmatpush1.msra.mxu0 0.0
      %766 = vmatprep.subr.mxu0 0.0
      %767 = vmatpush1.msra.mxu0 0.0
      %768 = vmatprep.subr.mxu0 0.0
      %769 = vmatpush1.msra.mxu0 0.0
      %770 = vmatprep.subr.mxu0 0.0
      %771 = vmatpush1.msra.mxu0 0.0
      %772 = vmatprep.subr.mxu0 0.0
      %773 = vmatpush1.msra.mxu0 0.0
      %774 = vmatprep.subr.mxu0 0.0
      %775 = vmatpush1.msra.mxu0 0.0
      %776 = vmatprep.subr.mxu0 0.0
      %777 = vmatpush1.msra.mxu0 0.0
      %778 = vmatprep.subr.mxu0 0.0
      %779 = vmatpush1.msra.mxu0 0.0
      %780 = vmatprep.subr.mxu0 0.0
      %781 = vmatpush1.msra.mxu0 0.0
      %782 = vmatprep.subr.mxu0 0.0
      %783 = vmatpush1.msra.mxu0 0.0
      %784 = vmatprep.subr.mxu0 0.0
      %785 = vmatpush1.msra.mxu0 0.0
      %786 = vmatprep.subr.mxu0 0.0
      %787 = vmatpush1.msra.mxu0 0.0
      %788 = vmatprep.subr.mxu0 0.0
      %789 = vmatpush1.msra.mxu0 0.0
      %790 = vmatprep.subr.mxu0 0.0
      %791 = vmatpush1.msra.mxu0 0.0
      %792 = vmatprep.subr.mxu0 0.0
      %793 = vmatpush1.msra.mxu0 0.0
      %794 = vmatprep.subr.mxu0 0.0
      %795 = vmatpush1.msra.mxu0 0.0
      %796 = vmatprep.subr.mxu0 0.0
      %797 = vmatpush1.msra.mxu0 0.0
      %798 = vmatprep.subr.mxu0 0.0
      %799 = vmatpush1.msra.mxu0 0.0
      %800 = vmatprep.subr.mxu0 0.0
      %801 = vmatpush1.msra.mxu0 0.0
      %802 = vmatprep.mubr.f32.mxu0 0.0
      %803 = vmatmul.mubr.f32.gmra.mrb[0].mxu0 %v730
      %v804 = vpop.f32.mrb[0].mxu0
      %v805 = vadd.f32 0.0, %v804
      %v806 = vpop.f32.mrb[0].mxu0
      %v807 = vadd.f32 0.0, %v806
      %808 = vdwg.mxu0
      %809 = vmatprep.subr.mxu0 0.0
      %810 = vmatpush1.msra.mxu0 %v736
      %811 = vmatprep.subr.mxu0 0.0
      %812 = vmatpush1.msra.mxu0 0.0
      %813 = vmatprep.subr.mxu0 0.0
      %814 = vmatpush1.msra.mxu0 0.0
      %815 = vmatprep.subr.mxu0 0.0
      %816 = vmatpush1.msra.mxu0 0.0
      %817 = vmatprep.subr.mxu0 0.0
      %818 = vmatpush1.msra.mxu0 0.0
      %819 = vmatprep.subr.mxu0 0.0
      %820 = vmatpush1.msra.mxu0 0.0
      %821 = vmatprep.subr.mxu0 0.0
      %822 = vmatpush1.msra.mxu0 0.0
      %823 = vmatprep.subr.mxu0 0.0
      %824 = vmatpush1.msra.mxu0 0.0
      %825 = vmatprep.subr.mxu0 0.0
      %826 = vmatpush1.msra.mxu0 0.0
      %827 = vmatprep.subr.mxu0 0.0
      %828 = vmatpush1.msra.mxu0 0.0
      %829 = vmatprep.subr.mxu0 0.0
      %830 = vmatpush1.msra.mxu0 0.0
      %831 = vmatprep.subr.mxu0 0.0
      %832 = vmatpush1.msra.mxu0 0.0
      %833 = vmatprep.subr.mxu0 0.0
      %834 = vmatpush1.msra.mxu0 0.0
      %835 = vmatprep.subr.mxu0 0.0
      %836 = vmatpush1.msra.mxu0 0.0
      %837 = vmatprep.subr.mxu0 0.0
      %838 = vmatpush1.msra.mxu0 0.0
      %839 = vmatprep.subr.mxu0 0.0
      %840 = vmatpush1.msra.mxu0 0.0
      %841 = vmatprep.subr.mxu0 0.0
      %842 = vmatpush1.msra.mxu0 0.0
      %843 = vmatprep.subr.mxu0 0.0
      %844 = vmatpush1.msra.mxu0 0.0
      %845 = vmatprep.subr.mxu0 0.0
      %846 = vmatpush1.msra.mxu0 0.0
      %847 = vmatprep.subr.mxu0 0.0
      %848 = vmatpush1.msra.mxu0 0.0
      %849 = vmatprep.subr.mxu0 0.0
      %850 = vmatpush1.msra.mxu0 0.0
      %851 = vmatprep.subr.mxu0 0.0
      %852 = vmatpush1.msra.mxu0 0.0
      %853 = vmatprep.subr.mxu0 0.0
      %854 = vmatpush1.msra.mxu0 0.0
      %855 = vmatprep.subr.mxu0 0.0
      %856 = vmatpush1.msra.mxu0 0.0
      %857 = vmatprep.subr.mxu0 0.0
      %858 = vmatpush1.msra.mxu0 0.0
      %859 = vmatprep.subr.mxu0 0.0
      %860 = vmatpush1.msra.mxu0 0.0
      %861 = vmatprep.subr.mxu0 0.0
      %862 = vmatpush1.msra.mxu0 0.0
      %863 = vmatprep.subr.mxu0 0.0
      %864 = vmatpush1.msra.mxu0 0.0
      %865 = vmatprep.subr.mxu0 0.0
      %866 = vmatpush1.msra.mxu0 0.0
      %867 = vmatprep.subr.mxu0 0.0
      %868 = vmatpush1.msra.mxu0 0.0
      %869 = vmatprep.subr.mxu0 0.0
      %870 = vmatpush1.msra.mxu0 0.0
      %871 = vmatprep.subr.mxu0 0.0
      %872 = vmatpush1.msra.mxu0 0.0
      %873 = vmatprep.mubr.f32.mxu0 0.0
      %874 = vmatmul.mubr.f32.gmra.mrb[0].mxu0 %v730
      %v875 = vpop.f32.mrb[0].mxu0
      %v876 = vadd.f32 0.0, %v875
      %v877 = vpop.f32.mrb[0].mxu0
      %878 = vdwg.mxu0
      %v879 = vadd.f32 %v710, %v805
      %v880 = vadd.f32 %v711, %v807
      %v881 = vadd.f32 %v712, %v876
      %s882 = scalar_lea.vmem %s1, 32
      %v883 = vld [vmem:[%s882] sm:$0xff]
      %v884 = vld [vmem:[%s219] sm:$0xff]
      %v885 = vld [vmem:[%s219 + $0x8] sm:$0xf]
      %v888 = vcombine.high %v884, %v884
      %889 = vrot.lane.b32.xlu0 %v884, 109
      %v890 = vpop.permute.xlu0 %889
      %891 = vrot.lane.b32.xlu0 %v888, 109
      %v892 = vpop.permute.xlu0 %891
      %893 = vrot.lane.b32.xlu0 %v885, 109
      %v894 = vpop.permute.xlu0 %893
      %vm895 = vcmask 891904
      %v896 = vsel %vm895, %v890, %v892
      %v897 = vsel %vm895, %v892, %v894
      %v899 = vsel %vm242, %v883, 0
      %v901 = vsel %vm246, %v896, 0
      %v903 = vsel %vm246, %v897, 0
      %v905 = vsel %vm246, %v894, 0
      %907 = vmatprep.subr.mxu0 %v903
      %908 = vmatpush1.msra.mxu0 %v901
      %909 = vmatprep.subr.mxu0 0.0
      %910 = vmatpush1.msra.mxu0 0.0
      %911 = vmatprep.subr.mxu0 0.0
      %912 = vmatpush1.msra.mxu0 0.0
      %913 = vmatprep.subr.mxu0 0.0
      %914 = vmatpush1.msra.mxu0 0.0
      %915 = vmatprep.subr.mxu0 0.0
      %916 = vmatpush1.msra.mxu0 0.0
      %917 = vmatprep.subr.mxu0 0.0
      %918 = vmatpush1.msra.mxu0 0.0
      %919 = vmatprep.subr.mxu0 0.0
      %920 = vmatpush1.msra.mxu0 0.0
      %921 = vmatprep.subr.mxu0 0.0
      %922 = vmatpush1.msra.mxu0 0.0
      %923 = vmatprep.subr.mxu0 0.0
      %924 = vmatpush1.msra.mxu0 0.0
      %925 = vmatprep.subr.mxu0 0.0
      %926 = vmatpush1.msra.mxu0 0.0
      %927 = vmatprep.subr.mxu0 0.0
      %928 = vmatpush1.msra.mxu0 0.0
      %929 = vmatprep.subr.mxu0 0.0
      %930 = vmatpush1.msra.mxu0 0.0
      %931 = vmatprep.subr.mxu0 0.0
      %932 = vmatpush1.msra.mxu0 0.0
      %933 = vmatprep.subr.mxu0 0.0
      %934 = vmatpush1.msra.mxu0 0.0
      %935 = vmatprep.subr.mxu0 0.0
      %936 = vmatpush1.msra.mxu0 0.0
      %937 = vmatprep.subr.mxu0 0.0
      %938 = vmatpush1.msra.mxu0 0.0
      %939 = vmatprep.subr.mxu0 0.0
      %940 = vmatpush1.msra.mxu0 0.0
      %941 = vmatprep.subr.mxu0 0.0
      %942 = vmatpush1.msra.mxu0 0.0
      %943 = vmatprep.subr.mxu0 0.0
      %944 = vmatpush1.msra.mxu0 0.0
      %945 = vmatprep.subr.mxu0 0.0
      %946 = vmatpush1.msra.mxu0 0.0
      %947 = vmatprep.subr.mxu0 0.0
      %948 = vmatpush1.msra.mxu0 0.0
      %949 = vmatprep.subr.mxu0 0.0
      %950 = vmatpush1.msra.mxu0 0.0
      %951 = vmatprep.subr.mxu0 0.0
      %952 = vmatpush1.msra.mxu0 0.0
      %953 = vmatprep.subr.mxu0 0.0
      %954 = vmatpush1.msra.mxu0 0.0
      %955 = vmatprep.subr.mxu0 0.0
      %956 = vmatpush1.msra.mxu0 0.0
      %957 = vmatprep.subr.mxu0 0.0
      %958 = vmatpush1.msra.mxu0 0.0
      %959 = vmatprep.subr.mxu0 0.0
      %960 = vmatpush1.msra.mxu0 0.0
      %961 = vmatprep.subr.mxu0 0.0
      %962 = vmatpush1.msra.mxu0 0.0
      %963 = vmatprep.subr.mxu0 0.0
      %964 = vmatpush1.msra.mxu0 0.0
      %965 = vmatprep.subr.mxu0 0.0
      %966 = vmatpush1.msra.mxu0 0.0
      %967 = vmatprep.subr.mxu0 0.0
      %968 = vmatpush1.msra.mxu0 0.0
      %969 = vmatprep.subr.mxu0 0.0
      %970 = vmatpush1.msra.mxu0 0.0
      %971 = vmatprep.mubr.f32.mxu0 0.0
      %972 = vmatmul.mubr.f32.gmra.mrb[0].mxu0 %v899
      %v973 = vpop.f32.mrb[0].mxu0
      %v974 = vadd.f32 0.0, %v973
      %v975 = vpop.f32.mrb[0].mxu0
      %v976 = vadd.f32 0.0, %v975
      %977 = vdwg.mxu0
      %978 = vmatprep.subr.mxu0 0.0
      %979 = vmatpush1.msra.mxu0 %v905
      %980 = vmatprep.subr.mxu0 0.0
      %981 = vmatpush1.msra.mxu0 0.0
      %982 = vmatprep.subr.mxu0 0.0
      %983 = vmatpush1.msra.mxu0 0.0
      %984 = vmatprep.subr.mxu0 0.0
      %985 = vmatpush1.msra.mxu0 0.0
      %986 = vmatprep.subr.mxu0 0.0
      %987 = vmatpush1.msra.mxu0 0.0
      %988 = vmatprep.subr.mxu0 0.0
      %989 = vmatpush1.msra.mxu0 0.0
      %990 = vmatprep.subr.mxu0 0.0
      %991 = vmatpush1.msra.mxu0 0.0
      %992 = vmatprep.subr.mxu0 0.0
      %993 = vmatpush1.msra.mxu0 0.0
      %994 = vmatprep.subr.mxu0 0.0
      %995 = vmatpush1.msra.mxu0 0.0
      %996 = vmatprep.subr.mxu0 0.0
      %997 = vmatpush1.msra.mxu0 0.0
      %998 = vmatprep.subr.mxu0 0.0
      %999 = vmatpush1.msra.mxu0 0.0
      %1000 = vmatprep.subr.mxu0 0.0
      %1001 = vmatpush1.msra.mxu0 0.0
      %1002 = vmatprep.subr.mxu0 0.0
      %1003 = vmatpush1.msra.mxu0 0.0
      %1004 = vmatprep.subr.mxu0 0.0
      %1005 = vmatpush1.msra.mxu0 0.0
      %1006 = vmatprep.subr.mxu0 0.0
      %1007 = vmatpush1.msra.mxu0 0.0
      %1008 = vmatprep.subr.mxu0 0.0
      %1009 = vmatpush1.msra.mxu0 0.0
      %1010 = vmatprep.subr.mxu0 0.0
      %1011 = vmatpush1.msra.mxu0 0.0
      %1012 = vmatprep.subr.mxu0 0.0
      %1013 = vmatpush1.msra.mxu0 0.0
      %1014 = vmatprep.subr.mxu0 0.0
      %1015 = vmatpush1.msra.mxu0 0.0
      %1016 = vmatprep.subr.mxu0 0.0
      %1017 = vmatpush1.msra.mxu0 0.0
      %1018 = vmatprep.subr.mxu0 0.0
      %1019 = vmatpush1.msra.mxu0 0.0
      %1020 = vmatprep.subr.mxu0 0.0
      %1021 = vmatpush1.msra.mxu0 0.0
      %1022 = vmatprep.subr.mxu0 0.0
      %1023 = vmatpush1.msra.mxu0 0.0
      %1024 = vmatprep.subr.mxu0 0.0
      %1025 = vmatpush1.msra.mxu0 0.0
      %1026 = vmatprep.subr.mxu0 0.0
      %1027 = vmatpush1.msra.mxu0 0.0
      %1028 = vmatprep.subr.mxu0 0.0
      %1029 = vmatpush1.msra.mxu0 0.0
      %1030 = vmatprep.subr.mxu0 0.0
      %1031 = vmatpush1.msra.mxu0 0.0
      %1032 = vmatprep.subr.mxu0 0.0
      %1033 = vmatpush1.msra.mxu0 0.0
      %1034 = vmatprep.subr.mxu0 0.0
      %1035 = vmatpush1.msra.mxu0 0.0
      %1036 = vmatprep.subr.mxu0 0.0
      %1037 = vmatpush1.msra.mxu0 0.0
      %1038 = vmatprep.subr.mxu0 0.0
      %1039 = vmatpush1.msra.mxu0 0.0
      %1040 = vmatprep.subr.mxu0 0.0
      %1041 = vmatpush1.msra.mxu0 0.0
      %1042 = vmatprep.mubr.f32.mxu0 0.0
      %1043 = vmatmul.mubr.f32.gmra.mrb[0].mxu0 %v899
      %v1044 = vpop.f32.mrb[0].mxu0
      %v1045 = vadd.f32 0.0, %v1044
      %v1046 = vpop.f32.mrb[0].mxu0
      %1047 = vdwg.mxu0
      %v1048 = vadd.f32 %v879, %v974
      %v1049 = vadd.f32 %v880, %v976
      %v1050 = vadd.f32 %v881, %v1045
      %s1051 = scalar_lea.vmem %s1, 40
      %v1052 = vld [vmem:[%s1051] sm:$0xff]
      %v1053 = vld [vmem:[%s219] sm:$0xff]
      %v1054 = vld [vmem:[%s219 + $0x8] sm:$0xf]
      %v1057 = vcombine.high %v1053, %v1053
      %1058 = vrot.lane.b32.xlu0 %v1053, 108
      %v1059 = vpop.permute.xlu0 %1058
      %1060 = vrot.lane.b32.xlu0 %v1057, 108
      %v1061 = vpop.permute.xlu0 %1060
      %1062 = vrot.lane.b32.xlu0 %v1054, 108
      %v1063 = vpop.permute.xlu0 %1062
      %vm1064 = vcmask 883712
      %v1065 = vsel %vm1064, %v1059, %v1061
      %v1066 = vsel %vm1064, %v1061, %v1063
      %v1068 = vsel %vm242, %v1052, 0
      %v1070 = vsel %vm246, %v1065, 0
      %v1072 = vsel %vm246, %v1066, 0
      %v1074 = vsel %vm246, %v1063, 0
      %1076 = vmatprep.subr.mxu0 %v1072
      %1077 = vmatpush1.msra.mxu0 %v1070
      %1078 = vmatprep.subr.mxu0 0.0
      %1079 = vmatpush1.msra.mxu0 0.0
      %1080 = vmatprep.subr.mxu0 0.0
      %1081 = vmatpush1.msra.mxu0 0.0
      %1082 = vmatprep.subr.mxu0 0.0
      %1083 = vmatpush1.msra.mxu0 0.0
      %1084 = vmatprep.subr.mxu0 0.0
      %1085 = vmatpush1.msra.mxu0 0.0
      %1086 = vmatprep.subr.mxu0 0.0
      %1087 = vmatpush1.msra.mxu0 0.0
      %1088 = vmatprep.subr.mxu0 0.0
      %1089 = vmatpush1.msra.mxu0 0.0
      %1090 = vmatprep.subr.mxu0 0.0
      %1091 = vmatpush1.msra.mxu0 0.0
      %1092 = vmatprep.subr.mxu0 0.0
      %1093 = vmatpush1.msra.mxu0 0.0
      %1094 = vmatprep.subr.mxu0 0.0
      %1095 = vmatpush1.msra.mxu0 0.0
      %1096 = vmatprep.subr.mxu0 0.0
      %1097 = vmatpush1.msra.mxu0 0.0
      %1098 = vmatprep.subr.mxu0 0.0
      %1099 = vmatpush1.msra.mxu0 0.0
      %1100 = vmatprep.subr.mxu0 0.0
      %1101 = vmatpush1.msra.mxu0 0.0
      %1102 = vmatprep.subr.mxu0 0.0
      %1103 = vmatpush1.msra.mxu0 0.0
      %1104 = vmatprep.subr.mxu0 0.0
      %1105 = vmatpush1.msra.mxu0 0.0
      %1106 = vmatprep.subr.mxu0 0.0
      %1107 = vmatpush1.msra.mxu0 0.0
      %1108 = vmatprep.subr.mxu0 0.0
      %1109 = vmatpush1.msra.mxu0 0.0
      %1110 = vmatprep.subr.mxu0 0.0
      %1111 = vmatpush1.msra.mxu0 0.0
      %1112 = vmatprep.subr.mxu0 0.0
      %1113 = vmatpush1.msra.mxu0 0.0
      %1114 = vmatprep.subr.mxu0 0.0
      %1115 = vmatpush1.msra.mxu0 0.0
      %1116 = vmatprep.subr.mxu0 0.0
      %1117 = vmatpush1.msra.mxu0 0.0
      %1118 = vmatprep.subr.mxu0 0.0
      %1119 = vmatpush1.msra.mxu0 0.0
      %1120 = vmatprep.subr.mxu0 0.0
      %1121 = vmatpush1.msra.mxu0 0.0
      %1122 = vmatprep.subr.mxu0 0.0
      %1123 = vmatpush1.msra.mxu0 0.0
      %1124 = vmatprep.subr.mxu0 0.0
      %1125 = vmatpush1.msra.mxu0 0.0
      %1126 = vmatprep.subr.mxu0 0.0
      %1127 = vmatpush1.msra.mxu0 0.0
      %1128 = vmatprep.subr.mxu0 0.0
      %1129 = vmatpush1.msra.mxu0 0.0
      %1130 = vmatprep.subr.mxu0 0.0
      %1131 = vmatpush1.msra.mxu0 0.0
      %1132 = vmatprep.subr.mxu0 0.0
      %1133 = vmatpush1.msra.mxu0 0.0
      %1134 = vmatprep.subr.mxu0 0.0
      %1135 = vmatpush1.msra.mxu0 0.0
      %1136 = vmatprep.subr.mxu0 0.0
      %1137 = vmatpush1.msra.mxu0 0.0
      %1138 = vmatprep.subr.mxu0 0.0
      %1139 = vmatpush1.msra.mxu0 0.0
      %1140 = vmatprep.mubr.f32.mxu0 0.0
      %1141 = vmatmul.mubr.f32.gmra.mrb[0].mxu0 %v1068
      %v1142 = vpop.f32.mrb[0].mxu0
      %v1143 = vadd.f32 0.0, %v1142
      %v1144 = vpop.f32.mrb[0].mxu0
      %v1145 = vadd.f32 0.0, %v1144
      %1146 = vdwg.mxu0
      %1147 = vmatprep.subr.mxu0 0.0
      %1148 = vmatpush1.msra.mxu0 %v1074
      %1149 = vmatprep.subr.mxu0 0.0
      %1150 = vmatpush1.msra.mxu0 0.0
      %1151 = vmatprep.subr.mxu0 0.0
      %1152 = vmatpush1.msra.mxu0 0.0
      %1153 = vmatprep.subr.mxu0 0.0
      %1154 = vmatpush1.msra.mxu0 0.0
      %1155 = vmatprep.subr.mxu0 0.0
      %1156 = vmatpush1.msra.mxu0 0.0
      %1157 = vmatprep.subr.mxu0 0.0
      %1158 = vmatpush1.msra.mxu0 0.0
      %1159 = vmatprep.subr.mxu0 0.0
      %1160 = vmatpush1.msra.mxu0 0.0
      %1161 = vmatprep.subr.mxu0 0.0
      %1162 = vmatpush1.msra.mxu0 0.0
      %1163 = vmatprep.subr.mxu0 0.0
      %1164 = vmatpush1.msra.mxu0 0.0
      %1165 = vmatprep.subr.mxu0 0.0
      %1166 = vmatpush1.msra.mxu0 0.0
      %1167 = vmatprep.subr.mxu0 0.0
      %1168 = vmatpush1.msra.mxu0 0.0
      %1169 = vmatprep.subr.mxu0 0.0
      %1170 = vmatpush1.msra.mxu0 0.0
      %1171 = vmatprep.subr.mxu0 0.0
      %1172 = vmatpush1.msra.mxu0 0.0
      %1173 = vmatprep.subr.mxu0 0.0
      %1174 = vmatpush1.msra.mxu0 0.0
      %1175 = vmatprep.subr.mxu0 0.0
      %1176 = vmatpush1.msra.mxu0 0.0
      %1177 = vmatprep.subr.mxu0 0.0
      %1178 = vmatpush1.msra.mxu0 0.0
      %1179 = vmatprep.subr.mxu0 0.0
      %1180 = vmatpush1.msra.mxu0 0.0
      %1181 = vmatprep.subr.mxu0 0.0
      %1182 = vmatpush1.msra.mxu0 0.0
      %1183 = vmatprep.subr.mxu0 0.0
      %1184 = vmatpush1.msra.mxu0 0.0
      %1185 = vmatprep.subr.mxu0 0.0
      %1186 = vmatpush1.msra.mxu0 0.0
      %1187 = vmatprep.subr.mxu0 0.0
      %1188 = vmatpush1.msra.mxu0 0.0
      %1189 = vmatprep.subr.mxu0 0.0
      %1190 = vmatpush1.msra.mxu0 0.0
      %1191 = vmatprep.subr.mxu0 0.0
      %1192 = vmatpush1.msra.mxu0 0.0
      %1193 = vmatprep.subr.mxu0 0.0
      %1194 = vmatpush1.msra.mxu0 0.0
      %1195 = vmatprep.subr.mxu0 0.0
      %1196 = vmatpush1.msra.mxu0 0.0
      %1197 = vmatprep.subr.mxu0 0.0
      %1198 = vmatpush1.msra.mxu0 0.0
      %1199 = vmatprep.subr.mxu0 0.0
      %1200 = vmatpush1.msra.mxu0 0.0
      %1201 = vmatprep.subr.mxu0 0.0
      %1202 = vmatpush1.msra.mxu0 0.0
      %1203 = vmatprep.subr.mxu0 0.0
      %1204 = vmatpush1.msra.mxu0 0.0
      %1205 = vmatprep.subr.mxu0 0.0
      %1206 = vmatpush1.msra.mxu0 0.0
      %1207 = vmatprep.subr.mxu0 0.0
      %1208 = vmatpush1.msra.mxu0 0.0
      %1209 = vmatprep.subr.mxu0 0.0
      %1210 = vmatpush1.msra.mxu0 0.0
      %1211 = vmatprep.mubr.f32.mxu0 0.0
      %1212 = vmatmul.mubr.f32.gmra.mrb[0].mxu0 %v1068
      %v1213 = vpop.f32.mrb[0].mxu0
      %v1214 = vadd.f32 0.0, %v1213
      %v1215 = vpop.f32.mrb[0].mxu0
      %1216 = vdwg.mxu0
      %v1217 = vadd.f32 %v1048, %v1143
      %v1218 = vadd.f32 %v1049, %v1145
      %v1219 = vadd.f32 %v1050, %v1214
      %s1220 = scalar_lea.vmem %s1, 48
      %v1221 = vld [vmem:[%s1220] sm:$0xff]
      %v1222 = vld [vmem:[%s219] sm:$0xff]
      %v1223 = vld [vmem:[%s219 + $0x8] sm:$0xf]
      %v1226 = vcombine.high %v1222, %v1222
      %1227 = vrot.lane.b32.xlu0 %v1222, 92
      %v1228 = vpop.permute.xlu0 %1227
      %1229 = vrot.lane.b32.xlu0 %v1226, 92
      %v1230 = vpop.permute.xlu0 %1229
      %1231 = vrot.lane.b32.xlu0 %v1223, 92
      %v1232 = vpop.permute.xlu0 %1231
      %vm1233 = vcmask 752640
      %v1234 = vsel %vm1233, %v1228, %v1230
      %v1235 = vsel %vm1233, %v1230, %v1232
      %v1237 = vsel %vm242, %v1221, 0
      %v1239 = vsel %vm246, %v1234, 0
      %v1241 = vsel %vm246, %v1235, 0
      %v1243 = vsel %vm246, %v1232, 0
      %1245 = vmatprep.subr.mxu0 %v1241
      %1246 = vmatpush1.msra.mxu0 %v1239
      %1247 = vmatprep.subr.mxu0 0.0
      %1248 = vmatpush1.msra.mxu0 0.0
      %1249 = vmatprep.subr.mxu0 0.0
      %1250 = vmatpush1.msra.mxu0 0.0
      %1251 = vmatprep.subr.mxu0 0.0
      %1252 = vmatpush1.msra.mxu0 0.0
      %1253 = vmatprep.subr.mxu0 0.0
      %1254 = vmatpush1.msra.mxu0 0.0
      %1255 = vmatprep.subr.mxu0 0.0
      %1256 = vmatpush1.msra.mxu0 0.0
      %1257 = vmatprep.subr.mxu0 0.0
      %1258 = vmatpush1.msra.mxu0 0.0
      %1259 = vmatprep.subr.mxu0 0.0
      %1260 = vmatpush1.msra.mxu0 0.0
      %1261 = vmatprep.subr.mxu0 0.0
      %1262 = vmatpush1.msra.mxu0 0.0
      %1263 = vmatprep.subr.mxu0 0.0
      %1264 = vmatpush1.msra.mxu0 0.0
      %1265 = vmatprep.subr.mxu0 0.0
      %1266 = vmatpush1.msra.mxu0 0.0
      %1267 = vmatprep.subr.mxu0 0.0
      %1268 = vmatpush1.msra.mxu0 0.0
      %1269 = vmatprep.subr.mxu0 0.0
      %1270 = vmatpush1.msra.mxu0 0.0
      %1271 = vmatprep.subr.mxu0 0.0
      %1272 = vmatpush1.msra.mxu0 0.0
      %1273 = vmatprep.subr.mxu0 0.0
      %1274 = vmatpush1.msra.mxu0 0.0
      %1275 = vmatprep.subr.mxu0 0.0
      %1276 = vmatpush1.msra.mxu0 0.0
      %1277 = vmatprep.subr.mxu0 0.0
      %1278 = vmatpush1.msra.mxu0 0.0
      %1279 = vmatprep.subr.mxu0 0.0
      %1280 = vmatpush1.msra.mxu0 0.0
      %1281 = vmatprep.subr.mxu0 0.0
      %1282 = vmatpush1.msra.mxu0 0.0
      %1283 = vmatprep.subr.mxu0 0.0
      %1284 = vmatpush1.msra.mxu0 0.0
      %1285 = vmatprep.subr.mxu0 0.0
      %1286 = vmatpush1.msra.mxu0 0.0
      %1287 = vmatprep.subr.mxu0 0.0
      %1288 = vmatpush1.msra.mxu0 0.0
      %1289 = vmatprep.subr.mxu0 0.0
      %1290 = vmatpush1.msra.mxu0 0.0
      %1291 = vmatprep.subr.mxu0 0.0
      %1292 = vmatpush1.msra.mxu0 0.0
      %1293 = vmatprep.subr.mxu0 0.0
      %1294 = vmatpush1.msra.mxu0 0.0
      %1295 = vmatprep.subr.mxu0 0.0
      %1296 = vmatpush1.msra.mxu0 0.0
      %1297 = vmatprep.subr.mxu0 0.0
      %1298 = vmatpush1.msra.mxu0 0.0
      %1299 = vmatprep.subr.mxu0 0.0
      %1300 = vmatpush1.msra.mxu0 0.0
      %1301 = vmatprep.subr.mxu0 0.0
      %1302 = vmatpush1.msra.mxu0 0.0
      %1303 = vmatprep.subr.mxu0 0.0
      %1304 = vmatpush1.msra.mxu0 0.0
      %1305 = vmatprep.subr.mxu0 0.0
      %1306 = vmatpush1.msra.mxu0 0.0
      %1307 = vmatprep.subr.mxu0 0.0
      %1308 = vmatpush1.msra.mxu0 0.0
      %1309 = vmatprep.mubr.f32.mxu0 0.0
      %1310 = vmatmul.mubr.f32.gmra.mrb[0].mxu0 %v1237
      %v1311 = vpop.f32.mrb[0].mxu0
      %v1312 = vadd.f32 0.0, %v1311
      %v1313 = vpop.f32.mrb[0].mxu0
      %v1314 = vadd.f32 0.0, %v1313
      %1315 = vdwg.mxu0
      %1316 = vmatprep.subr.mxu0 0.0
      %1317 = vmatpush1.msra.mxu0 %v1243
      %1318 = vmatprep.subr.mxu0 0.0
      %1319 = vmatpush1.msra.mxu0 0.0
      %1320 = vmatprep.subr.mxu0 0.0
      %1321 = vmatpush1.msra.mxu0 0.0
      %1322 = vmatprep.subr.mxu0 0.0
      %1323 = vmatpush1.msra.mxu0 0.0
      %1324 = vmatprep.subr.mxu0 0.0
      %1325 = vmatpush1.msra.mxu0 0.0
      %1326 = vmatprep.subr.mxu0 0.0
      %1327 = vmatpush1.msra.mxu0 0.0
      %1328 = vmatprep.subr.mxu0 0.0
      %1329 = vmatpush1.msra.mxu0 0.0
      %1330 = vmatprep.subr.mxu0 0.0
      %1331 = vmatpush1.msra.mxu0 0.0
      %1332 = vmatprep.subr.mxu0 0.0
      %1333 = vmatpush1.msra.mxu0 0.0
      %1334 = vmatprep.subr.mxu0 0.0
      %1335 = vmatpush1.msra.mxu0 0.0
      %1336 = vmatprep.subr.mxu0 0.0
      %1337 = vmatpush1.msra.mxu0 0.0
      %1338 = vmatprep.subr.mxu0 0.0
      %1339 = vmatpush1.msra.mxu0 0.0
      %1340 = vmatprep.subr.mxu0 0.0
      %1341 = vmatpush1.msra.mxu0 0.0
      %1342 = vmatprep.subr.mxu0 0.0
      %1343 = vmatpush1.msra.mxu0 0.0
      %1344 = vmatprep.subr.mxu0 0.0
      %1345 = vmatpush1.msra.mxu0 0.0
      %1346 = vmatprep.subr.mxu0 0.0
      %1347 = vmatpush1.msra.mxu0 0.0
      %1348 = vmatprep.subr.mxu0 0.0
      %1349 = vmatpush1.msra.mxu0 0.0
      %1350 = vmatprep.subr.mxu0 0.0
      %1351 = vmatpush1.msra.mxu0 0.0
      %1352 = vmatprep.subr.mxu0 0.0
      %1353 = vmatpush1.msra.mxu0 0.0
      %1354 = vmatprep.subr.mxu0 0.0
      %1355 = vmatpush1.msra.mxu0 0.0
      %1356 = vmatprep.subr.mxu0 0.0
      %1357 = vmatpush1.msra.mxu0 0.0
      %1358 = vmatprep.subr.mxu0 0.0
      %1359 = vmatpush1.msra.mxu0 0.0
      %1360 = vmatprep.subr.mxu0 0.0
      %1361 = vmatpush1.msra.mxu0 0.0
      %1362 = vmatprep.subr.mxu0 0.0
      %1363 = vmatpush1.msra.mxu0 0.0
      %1364 = vmatprep.subr.mxu0 0.0
      %1365 = vmatpush1.msra.mxu0 0.0
      %1366 = vmatprep.subr.mxu0 0.0
      %1367 = vmatpush1.msra.mxu0 0.0
      %1368 = vmatprep.subr.mxu0 0.0
      %1369 = vmatpush1.msra.mxu0 0.0
      %1370 = vmatprep.subr.mxu0 0.0
      %1371 = vmatpush1.msra.mxu0 0.0
      %1372 = vmatprep.subr.mxu0 0.0
      %1373 = vmatpush1.msra.mxu0 0.0
      %1374 = vmatprep.subr.mxu0 0.0
      %1375 = vmatpush1.msra.mxu0 0.0
      %1376 = vmatprep.subr.mxu0 0.0
      %1377 = vmatpush1.msra.mxu0 0.0
      %1378 = vmatprep.subr.mxu0 0.0
      %1379 = vmatpush1.msra.mxu0 0.0
      %1380 = vmatprep.mubr.f32.mxu0 0.0
      %1381 = vmatmul.mubr.f32.gmra.mrb[0].mxu0 %v1237
      %v1382 = vpop.f32.mrb[0].mxu0
      %v1383 = vadd.f32 0.0, %v1382
      %v1384 = vpop.f32.mrb[0].mxu0
      %1385 = vdwg.mxu0
      %v1386 = vadd.f32 %v1217, %v1312
      %v1387 = vadd.f32 %v1218, %v1314
      %v1388 = vadd.f32 %v1219, %v1383
      %s1389 = scalar_lea.vmem %s1, 56
      %v1390 = vld [vmem:[%s1389] sm:$0xff]
      %v1391 = vld [vmem:[%s219] sm:$0xff]
      %v1392 = vld [vmem:[%s219 + $0x8] sm:$0xf]
      %v1395 = vcombine.high %v1391, %v1391
      %1396 = vrot.lane.b32.xlu0 %v1391, 91
      %v1397 = vpop.permute.xlu0 %1396
      %1398 = vrot.lane.b32.xlu0 %v1395, 91
      %v1399 = vpop.permute.xlu0 %1398
      %1400 = vrot.lane.b32.xlu0 %v1392, 91
      %v1401 = vpop.permute.xlu0 %1400
      %vm1402 = vcmask 744448
      %v1403 = vsel %vm1402, %v1397, %v1399
      %v1404 = vsel %vm1402, %v1399, %v1401
      %v1406 = vsel %vm242, %v1390, 0
      %v1408 = vsel %vm246, %v1403, 0
      %v1410 = vsel %vm246, %v1404, 0
      %v1412 = vsel %vm246, %v1401, 0
      %1414 = vmatprep.subr.mxu0 %v1410
      %1415 = vmatpush1.msra.mxu0 %v1408
      %1416 = vmatprep.subr.mxu0 0.0
      %1417 = vmatpush1.msra.mxu0 0.0
      %1418 = vmatprep.subr.mxu0 0.0
      %1419 = vmatpush1.msra.mxu0 0.0
      %1420 = vmatprep.subr.mxu0 0.0
      %1421 = vmatpush1.msra.mxu0 0.0
      %1422 = vmatprep.subr.mxu0 0.0
      %1423 = vmatpush1.msra.mxu0 0.0
      %1424 = vmatprep.subr.mxu0 0.0
      %1425 = vmatpush1.msra.mxu0 0.0
      %1426 = vmatprep.subr.mxu0 0.0
      %1427 = vmatpush1.msra.mxu0 0.0
      %1428 = vmatprep.subr.mxu0 0.0
      %1429 = vmatpush1.msra.mxu0 0.0
      %1430 = vmatprep.subr.mxu0 0.0
      %1431 = vmatpush1.msra.mxu0 0.0
      %1432 = vmatprep.subr.mxu0 0.0
      %1433 = vmatpush1.msra.mxu0 0.0
      %1434 = vmatprep.subr.mxu0 0.0
      %1435 = vmatpush1.msra.mxu0 0.0
      %1436 = vmatprep.subr.mxu0 0.0
      %1437 = vmatpush1.msra.mxu0 0.0
      %1438 = vmatprep.subr.mxu0 0.0
      %1439 = vmatpush1.msra.mxu0 0.0
      %1440 = vmatprep.subr.mxu0 0.0
      %1441 = vmatpush1.msra.mxu0 0.0
      %1442 = vmatprep.subr.mxu0 0.0
      %1443 = vmatpush1.msra.mxu0 0.0
      %1444 = vmatprep.subr.mxu0 0.0
      %1445 = vmatpush1.msra.mxu0 0.0
      %1446 = vmatprep.subr.mxu0 0.0
      %1447 = vmatpush1.msra.mxu0 0.0
      %1448 = vmatprep.subr.mxu0 0.0
      %1449 = vmatpush1.msra.mxu0 0.0
      %1450 = vmatprep.subr.mxu0 0.0
      %1451 = vmatpush1.msra.mxu0 0.0
      %1452 = vmatprep.subr.mxu0 0.0
      %1453 = vmatpush1.msra.mxu0 0.0
      %1454 = vmatprep.subr.mxu0 0.0
      %1455 = vmatpush1.msra.mxu0 0.0
      %1456 = vmatprep.subr.mxu0 0.0
      %1457 = vmatpush1.msra.mxu0 0.0
      %1458 = vmatprep.subr.mxu0 0.0
      %1459 = vmatpush1.msra.mxu0 0.0
      %1460 = vmatprep.subr.mxu0 0.0
      %1461 = vmatpush1.msra.mxu0 0.0
      %1462 = vmatprep.subr.mxu0 0.0
      %1463 = vmatpush1.msra.mxu0 0.0
      %1464 = vmatprep.subr.mxu0 0.0
      %1465 = vmatpush1.msra.mxu0 0.0
      %1466 = vmatprep.subr.mxu0 0.0
      %1467 = vmatpush1.msra.mxu0 0.0
      %1468 = vmatprep.subr.mxu0 0.0
      %1469 = vmatpush1.msra.mxu0 0.0
      %1470 = vmatprep.subr.mxu0 0.0
      %1471 = vmatpush1.msra.mxu0 0.0
      %1472 = vmatprep.subr.mxu0 0.0
      %1473 = vmatpush1.msra.mxu0 0.0
      %1474 = vmatprep.subr.mxu0 0.0
      %1475 = vmatpush1.msra.mxu0 0.0
      %1476 = vmatprep.subr.mxu0 0.0
      %1477 = vmatpush1.msra.mxu0 0.0
      %1478 = vmatprep.mubr.f32.mxu0 0.0
      %1479 = vmatmul.mubr.f32.gmra.mrb[0].mxu0 %v1406
      %v1480 = vpop.f32.mrb[0].mxu0
      %v1481 = vadd.f32 0.0, %v1480
      %v1482 = vpop.f32.mrb[0].mxu0
      %v1483 = vadd.f32 0.0, %v1482
      %1484 = vdwg.mxu0
      %1485 = vmatprep.subr.mxu0 0.0
      %1486 = vmatpush1.msra.mxu0 %v1412
      %1487 = vmatprep.subr.mxu0 0.0
      %1488 = vmatpush1.msra.mxu0 0.0
      %1489 = vmatprep.subr.mxu0 0.0
      %1490 = vmatpush1.msra.mxu0 0.0
      %1491 = vmatprep.subr.mxu0 0.0
      %1492 = vmatpush1.msra.mxu0 0.0
      %1493 = vmatprep.subr.mxu0 0.0
      %1494 = vmatpush1.msra.mxu0 0.0
      %1495 = vmatprep.subr.mxu0 0.0
      %1496 = vmatpush1.msra.mxu0 0.0
      %1497 = vmatprep.subr.mxu0 0.0
      %1498 = vmatpush1.msra.mxu0 0.0
      %1499 = vmatprep.subr.mxu0 0.0
      %1500 = vmatpush1.msra.mxu0 0.0
      %1501 = vmatprep.subr.mxu0 0.0
      %1502 = vmatpush1.msra.mxu0 0.0
      %1503 = vmatprep.subr.mxu0 0.0
      %1504 = vmatpush1.msra.mxu0 0.0
      %1505 = vmatprep.subr.mxu0 0.0
      %1506 = vmatpush1.msra.mxu0 0.0
      %1507 = vmatprep.subr.mxu0 0.0
      %1508 = vmatpush1.msra.mxu0 0.0
      %1509 = vmatprep.subr.mxu0 0.0
      %1510 = vmatpush1.msra.mxu0 0.0
      %1511 = vmatprep.subr.mxu0 0.0
      %1512 = vmatpush1.msra.mxu0 0.0
      %1513 = vmatprep.subr.mxu0 0.0
      %1514 = vmatpush1.msra.mxu0 0.0
      %1515 = vmatprep.subr.mxu0 0.0
      %1516 = vmatpush1.msra.mxu0 0.0
      %1517 = vmatprep.subr.mxu0 0.0
      %1518 = vmatpush1.msra.mxu0 0.0
      %1519 = vmatprep.subr.mxu0 0.0
      %1520 = vmatpush1.msra.mxu0 0.0
      %1521 = vmatprep.subr.mxu0 0.0
      %1522 = vmatpush1.msra.mxu0 0.0
      %1523 = vmatprep.subr.mxu0 0.0
      %1524 = vmatpush1.msra.mxu0 0.0
      %1525 = vmatprep.subr.mxu0 0.0
      %1526 = vmatpush1.msra.mxu0 0.0
      %1527 = vmatprep.subr.mxu0 0.0
      %1528 = vmatpush1.msra.mxu0 0.0
      %1529 = vmatprep.subr.mxu0 0.0
      %1530 = vmatpush1.msra.mxu0 0.0
      %1531 = vmatprep.subr.mxu0 0.0
      %1532 = vmatpush1.msra.mxu0 0.0
      %1533 = vmatprep.subr.mxu0 0.0
      %1534 = vmatpush1.msra.mxu0 0.0
      %1535 = vmatprep.subr.mxu0 0.0
      %1536 = vmatpush1.msra.mxu0 0.0
      %1537 = vmatprep.subr.mxu0 0.0
      %1538 = vmatpush1.msra.mxu0 0.0
      %1539 = vmatprep.subr.mxu0 0.0
      %1540 = vmatpush1.msra.mxu0 0.0
      %1541 = vmatprep.subr.mxu0 0.0
      %1542 = vmatpush1.msra.mxu0 0.0
      %1543 = vmatprep.subr.mxu0 0.0
      %1544 = vmatpush1.msra.mxu0 0.0
      %1545 = vmatprep.subr.mxu0 0.0
      %1546 = vmatpush1.msra.mxu0 0.0
      %1547 = vmatprep.subr.mxu0 0.0
      %1548 = vmatpush1.msra.mxu0 0.0
      %1549 = vmatprep.mubr.f32.mxu0 0.0
      %1550 = vmatmul.mubr.f32.gmra.mrb[0].mxu0 %v1406
      %v1551 = vpop.f32.mrb[0].mxu0
      %v1552 = vadd.f32 0.0, %v1551
      %v1553 = vpop.f32.mrb[0].mxu0
      %1554 = vdwg.mxu0
      %v1555 = vadd.f32 %v1386, %v1481
      %v1556 = vadd.f32 %v1387, %v1483
      %v1557 = vadd.f32 %v1388, %v1552
      %s1558 = scalar_lea.vmem %s1, 64
      %v1559 = vld [vmem:[%s1558] sm:$0xff]
      %v1560 = vld [vmem:[%s219] sm:$0xff]
      %v1561 = vld [vmem:[%s219 + $0x8] sm:$0xf]
      %v1564 = vcombine.high %v1560, %v1560
      %1565 = vrot.lane.b32.xlu0 %v1560, 90
      %v1566 = vpop.permute.xlu0 %1565
      %1567 = vrot.lane.b32.xlu0 %v1564, 90
      %v1568 = vpop.permute.xlu0 %1567
      %1569 = vrot.lane.b32.xlu0 %v1561, 90
      %v1570 = vpop.permute.xlu0 %1569
      %vm1571 = vcmask 736256
      %v1572 = vsel %vm1571, %v1566, %v1568
      %v1573 = vsel %vm1571, %v1568, %v1570
      %v1575 = vsel %vm242, %v1559, 0
      %v1577 = vsel %vm246, %v1572, 0
      %v1579 = vsel %vm246, %v1573, 0
      %v1581 = vsel %vm246, %v1570, 0
      %1583 = vmatprep.subr.mxu0 %v1579
      %1584 = vmatpush1.msra.mxu0 %v1577
      %1585 = vmatprep.subr.mxu0 0.0
      %1586 = vmatpush1.msra.mxu0 0.0
      %1587 = vmatprep.subr.mxu0 0.0
      %1588 = vmatpush1.msra.mxu0 0.0
      %1589 = vmatprep.subr.mxu0 0.0
      %1590 = vmatpush1.msra.mxu0 0.0
      %1591 = vmatprep.subr.mxu0 0.0
      %1592 = vmatpush1.msra.mxu0 0.0
      %1593 = vmatprep.subr.mxu0 0.0
      %1594 = vmatpush1.msra.mxu0 0.0
      %1595 = vmatprep.subr.mxu0 0.0
      %1596 = vmatpush1.msra.mxu0 0.0
      %1597 = vmatprep.subr.mxu0 0.0
      %1598 = vmatpush1.msra.mxu0 0.0
      %1599 = vmatprep.subr.mxu0 0.0
      %1600 = vmatpush1.msra.mxu0 0.0
      %1601 = vmatprep.subr.mxu0 0.0
      %1602 = vmatpush1.msra.mxu0 0.0
      %1603 = vmatprep.subr.mxu0 0.0
      %1604 = vmatpush1.msra.mxu0 0.0
      %1605 = vmatprep.subr.mxu0 0.0
      %1606 = vmatpush1.msra.mxu0 0.0
      %1607 = vmatprep.subr.mxu0 0.0
      %1608 = vmatpush1.msra.mxu0 0.0
      %1609 = vmatprep.subr.mxu0 0.0
      %1610 = vmatpush1.msra.mxu0 0.0
      %1611 = vmatprep.subr.mxu0 0.0
      %1612 = vmatpush1.msra.mxu0 0.0
      %1613 = vmatprep.subr.mxu0 0.0
      %1614 = vmatpush1.msra.mxu0 0.0
      %1615 = vmatprep.subr.mxu0 0.0
      %1616 = vmatpush1.msra.mxu0 0.0
      %1617 = vmatprep.subr.mxu0 0.0
      %1618 = vmatpush1.msra.mxu0 0.0
      %1619 = vmatprep.subr.mxu0 0.0
      %1620 = vmatpush1.msra.mxu0 0.0
      %1621 = vmatprep.subr.mxu0 0.0
      %1622 = vmatpush1.msra.mxu0 0.0
      %1623 = vmatprep.subr.mxu0 0.0
      %1624 = vmatpush1.msra.mxu0 0.0
      %1625 = vmatprep.subr.mxu0 0.0
      %1626 = vmatpush1.msra.mxu0 0.0
      %1627 = vmatprep.subr.mxu0 0.0
      %1628 = vmatpush1.msra.mxu0 0.0
      %1629 = vmatprep.subr.mxu0 0.0
      %1630 = vmatpush1.msra.mxu0 0.0
      %1631 = vmatprep.subr.mxu0 0.0
      %1632 = vmatpush1.msra.mxu0 0.0
      %1633 = vmatprep.subr.mxu0 0.0
      %1634 = vmatpush1.msra.mxu0 0.0
      %1635 = vmatprep.subr.mxu0 0.0
      %1636 = vmatpush1.msra.mxu0 0.0
      %1637 = vmatprep.subr.mxu0 0.0
      %1638 = vmatpush1.msra.mxu0 0.0
      %1639 = vmatprep.subr.mxu0 0.0
      %1640 = vmatpush1.msra.mxu0 0.0
      %1641 = vmatprep.subr.mxu0 0.0
      %1642 = vmatpush1.msra.mxu0 0.0
      %1643 = vmatprep.subr.mxu0 0.0
      %1644 = vmatpush1.msra.mxu0 0.0
      %1645 = vmatprep.subr.mxu0 0.0
      %1646 = vmatpush1.msra.mxu0 0.0
      %1647 = vmatprep.mubr.f32.mxu0 0.0
      %1648 = vmatmul.mubr.f32.gmra.mrb[0].mxu0 %v1575
      %v1649 = vpop.f32.mrb[0].mxu0
      %v1650 = vadd.f32 0.0, %v1649
      %v1651 = vpop.f32.mrb[0].mxu0
      %v1652 = vadd.f32 0.0, %v1651
      %1653 = vdwg.mxu0
      %1654 = vmatprep.subr.mxu0 0.0
      %1655 = vmatpush1.msra.mxu0 %v1581
      %1656 = vmatprep.subr.mxu0 0.0
      %1657 = vmatpush1.msra.mxu0 0.0
      %1658 = vmatprep.subr.mxu0 0.0
      %1659 = vmatpush1.msra.mxu0 0.0
      %1660 = vmatprep.subr.mxu0 0.0
      %1661 = vmatpush1.msra.mxu0 0.0
      %1662 = vmatprep.subr.mxu0 0.0
      %1663 = vmatpush1.msra.mxu0 0.0
      %1664 = vmatprep.subr.mxu0 0.0
      %1665 = vmatpush1.msra.mxu0 0.0
      %1666 = vmatprep.subr.mxu0 0.0
      %1667 = vmatpush1.msra.mxu0 0.0
      %1668 = vmatprep.subr.mxu0 0.0
      %1669 = vmatpush1.msra.mxu0 0.0
      %1670 = vmatprep.subr.mxu0 0.0
      %1671 = vmatpush1.msra.mxu0 0.0
      %1672 = vmatprep.subr.mxu0 0.0
      %1673 = vmatpush1.msra.mxu0 0.0
      %1674 = vmatprep.subr.mxu0 0.0
      %1675 = vmatpush1.msra.mxu0 0.0
      %1676 = vmatprep.subr.mxu0 0.0
      %1677 = vmatpush1.msra.mxu0 0.0
      %1678 = vmatprep.subr.mxu0 0.0
      %1679 = vmatpush1.msra.mxu0 0.0
      %1680 = vmatprep.subr.mxu0 0.0
      %1681 = vmatpush1.msra.mxu0 0.0
      %1682 = vmatprep.subr.mxu0 0.0
      %1683 = vmatpush1.msra.mxu0 0.0
      %1684 = vmatprep.subr.mxu0 0.0
      %1685 = vmatpush1.msra.mxu0 0.0
      %1686 = vmatprep.subr.mxu0 0.0
      %1687 = vmatpush1.msra.mxu0 0.0
      %1688 = vmatprep.subr.mxu0 0.0
      %1689 = vmatpush1.msra.mxu0 0.0
      %1690 = vmatprep.subr.mxu0 0.0
      %1691 = vmatpush1.msra.mxu0 0.0
      %1692 = vmatprep.subr.mxu0 0.0
      %1693 = vmatpush1.msra.mxu0 0.0
      %1694 = vmatprep.subr.mxu0 0.0
      %1695 = vmatpush1.msra.mxu0 0.0
      %1696 = vmatprep.subr.mxu0 0.0
      %1697 = vmatpush1.msra.mxu0 0.0
      %1698 = vmatprep.subr.mxu0 0.0
      %1699 = vmatpush1.msra.mxu0 0.0
      %1700 = vmatprep.subr.mxu0 0.0
      %1701 = vmatpush1.msra.mxu0 0.0
      %1702 = vmatprep.subr.mxu0 0.0
      %1703 = vmatpush1.msra.mxu0 0.0
      %1704 = vmatprep.subr.mxu0 0.0
      %1705 = vmatpush1.msra.mxu0 0.0
      %1706 = vmatprep.subr.mxu0 0.0
      %1707 = vmatpush1.msra.mxu0 0.0
      %1708 = vmatprep.subr.mxu0 0.0
      %1709 = vmatpush1.msra.mxu0 0.0
      %1710 = vmatprep.subr.mxu0 0.0
      %1711 = vmatpush1.msra.mxu0 0.0
      %1712 = vmatprep.subr.mxu0 0.0
      %1713 = vmatpush1.msra.mxu0 0.0
      %1714 = vmatprep.subr.mxu0 0.0
      %1715 = vmatpush1.msra.mxu0 0.0
      %1716 = vmatprep.subr.mxu0 0.0
      %1717 = vmatpush1.msra.mxu0 0.0
      %1718 = vmatprep.mubr.f32.mxu0 0.0
      %1719 = vmatmul.mubr.f32.gmra.mrb[0].mxu0 %v1575
      %v1720 = vpop.f32.mrb[0].mxu0
      %v1721 = vadd.f32 0.0, %v1720
      %v1722 = vpop.f32.mrb[0].mxu0
      %1723 = vdwg.mxu0
      %v1724 = vadd.f32 %v1555, %v1650
      %v1725 = vadd.f32 %v1556, %v1652
      %v1726 = vadd.f32 %v1557, %v1721
      %v1727 = vld [vmem:[%s2] sm:$0xff]
      %1729 = vset.pattern.permute.xlu0 0
      %1730 = vperm.xlu0 %1729, %v1727
      %v1731 = vpop.permute.xlu0 %1730
      %v1733 = vadd.f32 %v1724, %v1731
      %v1734 = vadd.f32 %v1725, %v1731
      %v1735 = vadd.f32 %v1726, %v1731
      %v1736 = vld [vmem:[%s3] sm:$0xff]
      %1738 = vset.pattern.permute.xlu0 0
      %1739 = vperm.xlu0 %1738, %v1736
      %v1740 = vpop.permute.xlu0 %1739
      %v1742 = vmul.f32 %v1733, %v1740
      %v1743 = vmul.f32 %v1734, %v1740
      %v1744 = vmul.f32 %v1735, %v1740
      %v1745 = vld [vmem:[%s4] sm:$0xff]
      %1747 = vset.pattern.permute.xlu0 0
      %1748 = vperm.xlu0 %1747, %v1745
      %v1749 = vpop.permute.xlu0 %1748
      %v1751 = vadd.f32 %v1742, %v1749
      %v1752 = vadd.f32 %v1743, %v1749
      %v1753 = vadd.f32 %v1744, %v1749
      %vm1754 = vcmp.ge.f32.partialorder %v1751, 0.0
      %vm1755 = vcmp.ge.f32.partialorder %v1752, 0.0
      %vm1756 = vcmp.ge.f32.partialorder %v1753, 0.0
      %v1757 = vmul.f32 %v1751, 0.3
      %v1758 = vmul.f32 %v1752, 0.3
      %v1759 = vmul.f32 %v1753, 0.3
      %v1760 = vsel %vm1754, %v1751, %v1757
      %v1761 = vsel %vm1755, %v1752, %v1758
      %v1762 = vsel %vm1756, %v1753, %v1759
      %vm1763 = vcmask 130048
      %1764 = vst.msk [vmem:[%s224] sm:$0xff] %vm1763, %v1760
      %1766 = vrot.lane.b32.xlu0 %v1760, 126
      %v1767 = vpop.permute.xlu0 %1766
      %vm1769 = vcmask 261248
      %1770 = vst.msk [vmem:[%s224] sm:$0xff] %vm1769, %v1767
      %1771 = vrot.lane.b32.xlu0 %v1760, 124
      %v1772 = vpop.permute.xlu0 %1771
      %vm1774 = vcmask 392448
      %1775 = vst.msk [vmem:[%s224] sm:$0xff] %vm1774, %v1772
      %1776 = vrot.lane.b32.xlu0 %v1760, 122
      %v1777 = vpop.permute.xlu0 %1776
      %vm1779 = vcmask 523648
      %1780 = vst.msk [vmem:[%s224] sm:$0xff] %vm1779, %v1777
      %1781 = vrot.lane.b32.xlu0 %v1760, 120
      %v1782 = vpop.permute.xlu0 %1781
      %vm1784 = vcmask 654848
      %1785 = vst.msk [vmem:[%s224] sm:$0xff] %vm1784, %v1782
      %1786 = vrot.lane.b32.xlu0 %v1760, 118
      %v1787 = vpop.permute.xlu0 %1786
      %vm1789 = vcmask 786048
      %1790 = vst.msk [vmem:[%s224] sm:$0xff] %vm1789, %v1787
      %1791 = vrot.lane.b32.xlu0 %v1760, 116
      %v1792 = vpop.permute.xlu0 %1791
      %vm1794 = vcmask 917248
      %1795 = vst.msk [vmem:[%s224] sm:$0xff] %vm1794, %v1792
      %1797 = vrot.lane.b32.xlu0 %v1760, 114
      %v1798 = vpop.permute.xlu0 %1797
      %1799 = vrot.lane.b32.xlu0 %v1761, 114
      %v1800 = vpop.permute.xlu0 %1799
      %vm1801 = vcmask 932864
      %v1802 = vsel %vm1801, %v1798, %v1800
      %vm1804 = vcmask 1048448
      %1805 = vst.msk [vmem:[%s224] sm:$0xff] %vm1804, %v1802
      %1806 = vrot.lane.b32.xlu0 %v1761, 112
      %v1807 = vpop.permute.xlu0 %1806
      %1809 = vst.msk [vmem:[%s224 + $0x8] sm:$0xff] %vm1763, %v1807
      %1810 = vrot.lane.b32.xlu0 %v1761, 110
      %v1811 = vpop.permute.xlu0 %1810
      %1813 = vst.msk [vmem:[%s224 + $0x8] sm:$0xff] %vm1769, %v1811
      %1814 = vrot.lane.b32.xlu0 %v1761, 108
      %v1815 = vpop.permute.xlu0 %1814
      %1817 = vst.msk [vmem:[%s224 + $0x8] sm:$0xff] %vm1774, %v1815
      %1818 = vrot.lane.b32.xlu0 %v1761, 106
      %v1819 = vpop.permute.xlu0 %1818
      %1821 = vst.msk [vmem:[%s224 + $0x8] sm:$0xff] %vm1779, %v1819
      %1822 = vrot.lane.b32.xlu0 %v1761, 104
      %v1823 = vpop.permute.xlu0 %1822
      %1825 = vst.msk [vmem:[%s224 + $0x8] sm:$0xff] %vm1784, %v1823
      %1826 = vrot.lane.b32.xlu0 %v1761, 102
      %v1827 = vpop.permute.xlu0 %1826
      %1829 = vst.msk [vmem:[%s224 + $0x8] sm:$0xff] %vm1789, %v1827
      %1831 = vrot.lane.b32.xlu0 %v1761, 100
      %v1832 = vpop.permute.xlu0 %1831
      %1833 = vrot.lane.b32.xlu0 %v1762, 100
      %v1834 = vpop.permute.xlu0 %1833
      %vm1835 = vcmask 818176
      %v1836 = vsel %vm1835, %v1832, %v1834
      %1838 = vst.msk [vmem:[%s224 + $0x8] sm:$0xff] %vm1794, %v1836
      %1839 = vrot.lane.b32.xlu0 %v1762, 98
      %v1840 = vpop.permute.xlu0 %1839
      %1842 = vst.msk [vmem:[%s224 + $0x8] sm:$0xff] %vm1804, %v1840
      %p1843 = scmp.lt.s32.totalorder %s16, 1
      %s1844 = scalar_select %p1843, %s16, 1
      %s1845 = smul.addr %s1844, 2
      %s1846 = smul.addr %s1845, 8
      %s1847 = scalar_lea.vmem %s5, %s1846
      // Predicated region
      $region41: #{conv_block1_forward.3} parent=39 // pred_check
        %p1848 = pneg %p144
      $region42: #{conv_block1_forward.3} parent=39 // pred_check_branch
        %1850 = sbr.rel (%p1848) target = $region44
      $region43: #{conv_block1_forward.3} parent=39 // pred_region
        _
      $region44: #{conv_block1_forward.3} parent=39 // pred_fallthru
        _
    $region40: #{conv_block1_forward.3} parent=5 // pred_fallthru
      _
    %p1851 = scmp.le.s32.totalorder 2, %s11
    // Predicated region
    $region45: #{conv_block1_forward.3} parent=5 // pred_check
      %p1852 = pneg %p1851
    $region46: #{conv_block1_forward.3} parent=5 // pred_check_branch
      %1854 = sbr.rel (%p1852) target = $region48
    $region47: #{conv_block1_forward.3} parent=5 // pred_region
      %s1855 = ssub.s32 %s11, 2
      // Predicated region
      $region49: #{conv_block1_forward.3} parent=47 // pred_check
        %p1856 = pneg %p150
      $region50: #{conv_block1_forward.3} parent=47 // pred_check_branch
        %1858 = sbr.rel (%p1856) target = $region52
      $region51: #{conv_block1_forward.3} parent=47 // pred_region
        %p1859 = scmp.lt.s32.totalorder %s17, 1
        %s1860 = scalar_select %p1859, %s17, 1
        %s1861 = smul.addr %s1860, 2
        %s1862 = smul.addr %s1861, 8
        %s1863 = scalar_lea.vmem %s5, %s1862
      $region52: #{conv_block1_forward.3} parent=47 // pred_fallthru
        _
    $region48: #{conv_block1_forward.3} parent=5 // pred_fallthru
      _
  $region6: #{conv_block1_forward.3} parent=0 // loop_footer
    %s15 = sadd.s32 1, %s11
  $region7: #{conv_block1_forward.3} parent=0 // loop_footer_branch
    %10 = sbr.rel target = $region3
  $region8: #{conv_block1_forward.3} parent=0 // loop_exit
    _

</llo_original>
